<compile_context>
chip_gen: v5e
topology: v5e:2x2
jax: 0.10.0
libtpu: 0.0.40
codegen_flags: <defaults>
</compile_context>

<pallas_src>
import jax
import jax.numpy as jnp
from jax import lax
from jax.experimental import pallas as pl
from jax.experimental.pallas import tpu as pltpu

LANE = 128                 # vreg lane width
SUBLANES = 8               # f32 sublanes per vreg
MIN_ROWS = 32              # int8/bool sublane tiling is (32,128); also min f32 rows
MAX_BLOCK_ROWS = 4096      # (4096,128) f32 = 2 MiB / input / buffer
SMALL_N = 32 * 1024        # below this, plain XLA beats kernel launch + pad
VMEM_LIMIT_BYTES = 32 * 1024 * 1024   # > v5e default scoped 16 MiB, < v7x 64 MiB


def _num_splits():
    """Leading 'parallel' split: 2 on multi-TensorCore chips, else 1."""
    try:
        kind = jax.devices()[0].device_kind.lower()
    except Exception:
        return 1
    return 2 if any(t in kind for t in ("v4", "v5p", "v7")) else 1


def _make_mse_kernels(block_rows, inner_blocks, n_valid):
    """Build unmasked / masked kernel bodies for static tiling params."""
    groups = block_rows // SUBLANES          # block_rows is a multiple of 32
    n_full_rows = n_valid // LANE            # rows that are fully valid
    n_rem = n_valid % LANE                   # valid lanes in the last (partial) row

    def fold(x):
        # (block_rows,128) -> (8,128): groups-of-8-rows reshape lines up exactly
        # with the (8,128) vreg tiling, so the axis-0 sum is pure VPU adds.
        return x.reshape(groups, SUBLANES, LANE).sum(axis=0)

    def tail_valid(blk):
        # Element validity for a partial / phantom block, from row & lane indices
        # only (no flat row*128+lane product -> no int32 overflow).
        row = blk * block_rows + lax.broadcasted_iota(
            jnp.int32, (block_rows, LANE), 0)
        lane = lax.broadcasted_iota(jnp.int32, (block_rows, LANE), 1)
        return jnp.logical_or(
            row < n_full_rows,
            jnp.logical_and(row == n_full_rows, lane < n_rem))

    def block_id():
        return pl.program_id(0) * inner_blocks + pl.program_id(1)

    def unmasked_kernel(gt_ref, pr_ref, sq_ref):
        @pl.when(pl.program_id(1) == 0)
        def _init():
            sq_ref[...] = jnp.zeros_like(sq_ref)

        blk = block_id()
        d = gt_ref[...].astype(jnp.float32) - pr_ref[...].astype(jnp.float32)
        sq = d * d
        is_full = (blk + 1) * block_rows <= n_full_rows   # whole block valid?

        @pl.when(is_full)                 # steady state: no iota/cmp/select work
        def _fast():
            sq_ref[...] += fold(sq)

        @pl.when(jnp.logical_not(is_full))     # tail / phantom block only
        def _tail():
            sq_ref[...] += fold(jnp.where(tail_valid(blk), sq, 0.0))

    def masked_kernel(gt_ref, pr_ref, mk_ref, sq_ref, cnt_ref):
        @pl.when(pl.program_id(1) == 0)
        def _init():
            sq_ref[...] = jnp.zeros_like(sq_ref)
            cnt_ref[...] = jnp.zeros_like(cnt_ref)

        blk = block_id()
        m = mk_ref[...]
        sel = m if m.dtype == jnp.bool_ else (m != 0)     # static dtype dispatch
        d = gt_ref[...].astype(jnp.float32) - pr_ref[...].astype(jnp.float32)
        sq = d * d
        is_full = (blk + 1) * block_rows <= n_full_rows

        def accum(s):
            sq_ref[...] += fold(jnp.where(s, sq, 0.0))
            cnt_ref[...] += fold(s.astype(jnp.int32))     # exact int32 count

        @pl.when(is_full)
        def _fast():
            accum(sel)

        @pl.when(jnp.logical_not(is_full))
        def _tail():
            accum(jnp.logical_and(tail_valid(blk), sel))

    return unmasked_kernel, masked_kernel


def l2_loss(gt, predict, mask=None):
    """Pallas equivalent of L2LossFunction.forward(gt, predict, mask)."""
    assert gt.shape == predict.shape
    n = int(gt.size)
    if mask is not None:
        assert mask.shape == gt.shape

    # --- Small-tensor fast path: pad + launch overhead dominates. ------------
    if n < SMALL_N:
        d = gt.astype(jnp.float32) - predict.astype(jnp.float32)
        sq = d * d
        if mask is None:
            return jnp.mean(sq)
        sel = mask if mask.dtype == jnp.bool_ else (mask != 0)
        return jnp.sum(jnp.where(sel, sq, 0.0)) / jnp.sum(sel).astype(jnp.float32)

    # --- Lane-dense (rows, 128) slab.  Pad only when n isn't a multiple of 128.
    flat_gt = gt.reshape(-1)
    flat_pr = predict.reshape(-1)
    flat_mk = None if mask is None else mask.reshape(-1)   # original dtype, no copy

    n_lane = max(MIN_ROWS * LANE, pl.cdiv(n, LANE) * LANE)
    if n_lane != n:
        pad = n_lane - n
        flat_gt = jnp.pad(flat_gt, (0, pad))
        flat_pr = jnp.pad(flat_pr, (0, pad))
        if flat_mk is not None:
            flat_mk = jnp.pad(flat_mk, (0, pad))
    rows = n_lane // LANE

    gt2 = flat_gt.reshape(rows, LANE)
    pr2 = flat_pr.reshape(rows, LANE)

    # block_rows: multiple of 32 (satisfies f32 + int8/bool tiling), VMEM-capped.
    block_rows = min(MAX_BLOCK_ROWS, (rows // MIN_ROWS) * MIN_ROWS)
    num_blocks = pl.cdiv(rows, block_rows)
    num_splits = min(_num_splits(), num_blocks)
    inner_blocks = pl.cdiv(num_blocks, num_splits)

    if num_splits == 1:
        # Single TensorCore: no phantom blocks, no index clamp.
        def in_idx(s, i):
            return (i, 0)
        sems = ("arbitrary", "arbitrary")
    else:
        # Clamp so phantom blocks (split rounding) never DMA out of bounds;
        # their contribution is zeroed by the in-kernel tail mask.
        def in_idx(s, i):
            return (jnp.minimum(s * inner_blocks + i, num_blocks - 1), 0)
        sems = ("parallel", "arbitrary")

    data_spec = pl.BlockSpec((block_rows, LANE), in_idx)
    part_spec = pl.BlockSpec((None, SUBLANES, LANE), lambda s, i: (s, 0, 0))
    part_shape = (num_splits, SUBLANES, LANE)
    cparams = pltpu.CompilerParams(dimension_semantics=sems,
                                   vmem_limit_bytes=VMEM_LIMIT_BYTES)

    unmasked_kernel, masked_kernel = _make_mse_kernels(block_rows, inner_blocks, n)

    if mask is None:
        sq_parts = pl.pallas_call(
            unmasked_kernel,
            out_shape=jax.ShapeDtypeStruct(part_shape, jnp.float32),
            grid_spec=pltpu.PrefetchScalarGridSpec(
                num_scalar_prefetch=0,
                grid=(num_splits, inner_blocks),
                in_specs=[data_spec, data_spec],
                out_specs=part_spec),
            compiler_params=cparams,
        )(gt2, pr2)
        # Tiny final cross-lane reduce + divide (count is the exact static n).
        return jnp.sum(sq_parts) / jnp.float32(n)

    def run_masked(mk2):
        return pl.pallas_call(
            masked_kernel,
            out_shape=(jax.ShapeDtypeStruct(part_shape, jnp.float32),
                       jax.ShapeDtypeStruct(part_shape, jnp.int32)),
            grid_spec=pltpu.PrefetchScalarGridSpec(
                num_scalar_prefetch=0,
                grid=(num_splits, inner_blocks),
                in_specs=[data_spec, data_spec, data_spec],
                out_specs=(part_spec, part_spec)),
            compiler_params=cparams,
        )(gt2, pr2, mk2)

    mk2 = flat_mk.reshape(rows, LANE)
    try:
        # Preferred: stream the mask in its original dtype (bool = 1 B/elem,
        # no wrapper-side materialized conversion).
        sq_parts, cnt_parts = run_masked(mk2)
    except Exception:
        if mk2.dtype != jnp.bool_:
            raise
        # Fallback for JAX builds without bool-ref support in Pallas TPU:
        # stream as int8 (costs one extra full-array convert).
        sq_parts, cnt_parts = run_masked(mk2.astype(jnp.int8))

    # All-False mask -> 0/0 -> NaN, matching torch's mean over an empty selection.
    return jnp.sum(sq_parts) / jnp.sum(cnt_parts).astype(jnp.float32)


if __name__ == "__main__":
    # Module has no learnable parameters (torch.nn.MSELoss is stateless).
    key = jax.random.PRNGKey(0)
    ks = jax.random.split(key, 12)

    # --- Case A: small NCHW tensors (fast XLA path), unmasked + masked -------
    gt = jax.random.normal(ks[0], (2, 4, 16, 16), dtype=jnp.float32)
    pr = jax.random.normal(ks[1], (2, 4, 16, 16), dtype=jnp.float32)
    loss = l2_loss(gt, pr)
    jax.block_until_ready(loss)
    ref = jnp.mean((gt - pr) ** 2)
    assert jnp.allclose(loss, ref, rtol=1e-4, atol=1e-6), (loss, ref)

    msk = jax.random.uniform(ks[2], (2, 4, 16, 16)) > 0.5
    loss_m = l2_loss(gt, pr, msk)
    jax.block_until_ready(loss_m)
    ref_m = jnp.sum(((gt - pr) ** 2) * msk) / jnp.sum(msk)
    assert jnp.allclose(loss_m, ref_m, rtol=1e-4, atol=1e-6), (loss_m, ref_m)

    # --- Case B: awkward small size --------------------------------------------
    gtb = jax.random.normal(ks[3], (2, 3, 5, 7), dtype=jnp.float32)
    prb = jax.random.normal(ks[4], (2, 3, 5, 7), dtype=jnp.float32)
    lossb = l2_loss(gtb, prb)
    jax.block_until_ready(lossb)
    refb = jnp.mean((gtb - prb) ** 2)
    assert jnp.allclose(lossb, refb, rtol=1e-4, atol=1e-6), (lossb, refb)

    # --- Case C: Pallas path, n multiple of 128 (full-block fast path) ---------
    gtc = jax.random.normal(ks[5], (2, 8, 130, 128), dtype=jnp.float32)
    prc = jax.random.normal(ks[6], (2, 8, 130, 128), dtype=jnp.float32)
    mskc = jax.random.uniform(ks[7], (2, 8, 130, 128)) > 0.3
    lossc = l2_loss(gtc, prc)
    jax.block_until_ready(lossc)
    refc = jnp.mean((gtc - prc) ** 2)
    assert jnp.allclose(lossc, refc, rtol=5e-4, atol=1e-6), (lossc, refc)

    lossc_m = l2_loss(gtc, prc, mskc)
    jax.block_until_ready(lossc_m)
    refc_m = jnp.sum(((gtc - prc) ** 2) * mskc) / jnp.sum(mskc)
    assert jnp.allclose(lossc_m, refc_m, rtol=5e-4, atol=1e-6), (lossc_m, refc_m)

    # --- Case D: Pallas path, multi-block + lane padding + partial tail --------
    gtd = jax.random.normal(ks[8], (3, 8, 130, 129), dtype=jnp.float32)
    prd = jax.random.normal(ks[9], (3, 8, 130, 129), dtype=jnp.float32)
    mskd = jax.random.uniform(ks[10], (3, 8, 130, 129)) > 0.4
    lossd = l2_loss(gtd, prd)
    jax.block_until_ready(lossd)
    refd = jnp.mean((gtd - prd) ** 2)
    assert jnp.allclose(lossd, refd, rtol=5e-4, atol=1e-6), (lossd, refd)

    lossd_m = l2_loss(gtd, prd, mskd)
    jax.block_until_ready(lossd_m)
    refd_m = jnp.sum(((gtd - prd) ** 2) * mskd) / jnp.sum(mskd)
    assert jnp.allclose(lossd_m, refd_m, rtol=5e-4, atol=1e-6), (lossd_m, refd_m)

    print("KERNEL_OK")
</pallas_src>

<mosaic_0001>
module attributes {stable_mosaic.version = 11 : i64} {
  func.func @unmasked_kernel(%arg0: i32, %arg1: i32, %arg2: memref<2080x128xf32, #tpu.memory_space<vmem>>, %arg3: memref<2080x128xf32, #tpu.memory_space<vmem>>, %arg4: memref<1x8x128xf32, #tpu.memory_space<vmem>>) attributes {dimension_semantics = [#tpu.dimension_semantics<arbitrary>, #tpu.dimension_semantics<arbitrary>], iteration_bounds = array<i64: 1, 1>, scalar_prefetch = 0 : i64, scratch_operands = 0 : i64, tpu.core_type = #tpu.core_type<tc>, window_params = [{transform_indices = @transform_0, window_bounds = array<i64: 2080, 128>}, {transform_indices = @transform_1, window_bounds = array<i64: 2080, 128>}, {transform_indices = @transform_2, window_bounds = array<i64: 1, 8, 128>}]} {
    %c0_i32 = arith.constant 0 : i32
    %0 = arith.cmpi eq, %arg1, %c0_i32 : i32
    %1 = arith.extui %0 : i1 to i32
    %c0_i32_0 = arith.constant 0 : i32
    %2 = arith.cmpi ne, %1, %c0_i32_0 : i32
    scf.if %2 {
      %cst = arith.constant 0.000000e+00 : f32
      %17 = vector.broadcast %cst : f32 to vector<8x128xf32>
      %c0_8 = arith.constant 0 : index
      %c0_9 = arith.constant 0 : index
      %c0_10 = arith.constant 0 : index
      %18 = vector.load %arg4[%c0_8, %c0_9, %c0_10] : memref<1x8x128xf32, #tpu.memory_space<vmem>>, vector<1x8x128xf32>
      %19 = vector.shape_cast %18 : vector<1x8x128xf32> to vector<8x128xf32>
      %20 = vector.shape_cast %17 : vector<8x128xf32> to vector<1x8x128xf32>
      tpu.vector_store %arg4[%c0_8, %c0_9, %c0_10], %20 {strides = array<i32>} : memref<1x8x128xf32, #tpu.memory_space<vmem>>, vector<1x8x128xf32>,
    } else {
    }
    %c1_i32 = arith.constant 1 : i32
    %3 = arith.muli %arg0, %c1_i32 : i32
    %4 = arith.addi %3, %arg1 : i32
    %c0 = arith.constant 0 : index
    %c0_1 = arith.constant 0 : index
    %5 = vector.load %arg2[%c0, %c0_1] : memref<2080x128xf32, #tpu.memory_space<vmem>>, vector<2080x128xf32>
    %c0_2 = arith.constant 0 : index
    %c0_3 = arith.constant 0 : index
    %6 = vector.load %arg3[%c0_2, %c0_3] : memref<2080x128xf32, #tpu.memory_space<vmem>>, vector<2080x128xf32>
    %7 = arith.subf %5, %6 : vector<2080x128xf32>
    %8 = arith.mulf %7, %7 : vector<2080x128xf32>
    %c1_i32_4 = arith.constant 1 : i32
    %9 = arith.addi %4, %c1_i32_4 : i32
    %c2080_i32 = arith.constant 2080 : i32
    %10 = arith.muli %9, %c2080_i32 : i32
    %c2080_i32_5 = arith.constant 2080 : i32
    %11 = arith.cmpi sle, %10, %c2080_i32_5 : i32
    %12 = arith.extui %11 : i1 to i32
    %c0_i32_6 = arith.constant 0 : i32
    %13 = arith.cmpi ne, %12, %c0_i32_6 : i32
    scf.if %13 {
      %c0_8 = arith.constant 0 : index
      %c0_9 = arith.constant 0 : index
      %c0_10 = arith.constant 0 : index
      %17 = vector.load %arg4[%c0_8, %c0_9, %c0_10] : memref<1x8x128xf32, #tpu.memory_space<vmem>>, vector<1x8x128xf32>
      %18 = vector.shape_cast %17 : vector<1x8x128xf32> to vector<8x128xf32>
      %19 = vector.shape_cast %8 : vector<2080x128xf32> to vector<260x8x128xf32>
      %cst = arith.constant dense<0.000000e+00> : vector<8x128xf32>
      %20 = vector.multi_reduction <add>, %19, %cst [0] : vector<260x8x128xf32> to vector<8x128xf32>
      %21 = arith.addf %18, %20 : vector<8x128xf32>
      %c0_11 = arith.constant 0 : index
      %c0_12 = arith.constant 0 : index
      %c0_13 = arith.constant 0 : index
      %22 = vector.load %arg4[%c0_11, %c0_12, %c0_13] : memref<1x8x128xf32, #tpu.memory_space<vmem>>, vector<1x8x128xf32>
      %23 = vector.shape_cast %22 : vector<1x8x128xf32> to vector<8x128xf32>
      %24 = vector.shape_cast %21 : vector<8x128xf32> to vector<1x8x128xf32>
      tpu.vector_store %arg4[%c0_11, %c0_12, %c0_13], %24 {strides = array<i32>} : memref<1x8x128xf32, #tpu.memory_space<vmem>>, vector<1x8x128xf32>,
    } else {
    }
    %true = arith.constant true
    %14 = arith.xori %11, %true : i1
    %15 = arith.extui %14 : i1 to i32
    %c0_i32_7 = arith.constant 0 : i32
    %16 = arith.cmpi ne, %15, %c0_i32_7 : i32
    scf.if %16 {
      %c0_8 = arith.constant 0 : index
      %c0_9 = arith.constant 0 : index
      %c0_10 = arith.constant 0 : index
      %17 = vector.load %arg4[%c0_8, %c0_9, %c0_10] : memref<1x8x128xf32, #tpu.memory_space<vmem>>, vector<1x8x128xf32>
      %18 = vector.shape_cast %17 : vector<1x8x128xf32> to vector<8x128xf32>
      %c2080_i32_11 = arith.constant 2080 : i32
      %19 = arith.muli %4, %c2080_i32_11 : i32
      %20 = tpu.iota {dimensions = array<i32: 0>} : vector<2080x128xi32>
      %21 = vector.broadcast %19 : i32 to vector<2080x128xi32>
      %22 = arith.addi %21, %20 : vector<2080x128xi32>
      %23 = tpu.iota {dimensions = array<i32: 1>} : vector<2080x128xi32>
      %c2080_i32_12 = arith.constant 2080 : i32
      %24 = vector.broadcast %c2080_i32_12 : i32 to vector<2080x128xi32>
      %25 = arith.cmpi slt, %22, %24 : vector<2080x128xi32>
      %c2080_i32_13 = arith.constant 2080 : i32
      %26 = vector.broadcast %c2080_i32_13 : i32 to vector<2080x128xi32>
      %27 = arith.cmpi eq, %22, %26 : vector<2080x128xi32>
      %c0_i32_14 = arith.constant 0 : i32
      %28 = vector.broadcast %c0_i32_14 : i32 to vector<2080x128xi32>
      %29 = arith.cmpi slt, %23, %28 : vector<2080x128xi32>
      %30 = arith.andi %27, %29 : vector<2080x128xi1>
      %31 = arith.ori %25, %30 : vector<2080x128xi1>
      %cst = arith.constant 0.000000e+00 : f32
      %32 = vector.broadcast %cst : f32 to vector<2080x128xf32>
      %33 = arith.select %31, %8, %32 : vector<2080x128xi1>, vector<2080x128xf32>
      %34 = vector.shape_cast %33 : vector<2080x128xf32> to vector<260x8x128xf32>
      %cst_15 = arith.constant dense<0.000000e+00> : vector<8x128xf32>
      %35 = vector.multi_reduction <add>, %34, %cst_15 [0] : vector<260x8x128xf32> to vector<8x128xf32>
      %36 = arith.addf %18, %35 : vector<8x128xf32>
      %c0_16 = arith.constant 0 : index
      %c0_17 = arith.constant 0 : index
      %c0_18 = arith.constant 0 : index
      %37 = vector.load %arg4[%c0_16, %c0_17, %c0_18] : memref<1x8x128xf32, #tpu.memory_space<vmem>>, vector<1x8x128xf32>
      %38 = vector.shape_cast %37 : vector<1x8x128xf32> to vector<8x128xf32>
      %39 = vector.shape_cast %36 : vector<8x128xf32> to vector<1x8x128xf32>
      tpu.vector_store %arg4[%c0_16, %c0_17, %c0_18], %39 {strides = array<i32>} : memref<1x8x128xf32, #tpu.memory_space<vmem>>, vector<1x8x128xf32>,
    } else {
    }
    return
  }
  func.func @transform_0(%arg0: i32, %arg1: i32) -> (i32, i32) {
    %c0_i32 = arith.constant 0 : i32
    %c0_i32_0 = arith.constant 0 : i32
    return %arg1, %c0_i32 : i32, i32
  }
  func.func @transform_1(%arg0: i32, %arg1: i32) -> (i32, i32) {
    %c0_i32 = arith.constant 0 : i32
    %c0_i32_0 = arith.constant 0 : i32
    return %arg1, %c0_i32 : i32, i32
  }
  func.func @transform_2(%arg0: i32, %arg1: i32) -> (i32, i32, i32) {
    %c0_i32 = arith.constant 0 : i32
    %c0_i32_0 = arith.constant 0 : i32
    %c0_i32_1 = arith.constant 0 : i32
    return %arg0, %c0_i32, %c0_i32_0 : i32, i32, i32
  }
}

</mosaic_0001>

<llo_original>
// kernel: tpu_custom_call.1
$region0: #{tpu_custom_call.1}
  #allocation0 [shape = 'u32[]', space=smem, size = 0x4, offset = 0x4, fixed_abs, tag = 'smem constant byte address 0x4 - core index']
  #allocation1 [shape = 'u32[72,128]{1,0:T(1,128)}', space=vmem, size = 0x9000, scoped, tag = 'internal scratch']
  %s0 = inlined_call_operand.hbm [shape: f32[2080,128], index: 0, kind: input, shape index: {}]
  %s1 = inlined_call_operand.hbm [shape: f32[2080,128], index: 1, kind: input, shape index: {}]
  %s2 = inlined_call_operand.hbm [shape: f32[1,8,128], index: 2, kind: output, shape index: {}]
  %s3 = sld [smem:[#allocation0]]
  $region38: #{tpu_custom_call.1} parent=0
    _
  %s5 = ssub.s32 1, %s3
  %s6 = scalar_select 0, %s5, %s3
  $region1: #{tpu_custom_call.1} parent=0
    #allocation2 [shape = 'u8[1064960]{0}', space=vmem, size = 0x104000, scoped, tag = 'input window, operand 0, single buffered']
    #allocation3 [shape = 's32[1]{0}', space=sflag, size = 0x4, scoped, tag = 'scoped memory for tpu_custom_call.1']
    #allocation4 [shape = 's32[1]{0}', space=sflag, size = 0x4, scoped, tag = 'scoped memory for tpu_custom_call.1']
    #allocation5 [shape = 'u8[1064960]{0}', space=vmem, size = 0x104000, scoped, tag = 'input window, operand 1, single buffered']
    #allocation6 [shape = 's32[1]{0}', space=sflag, size = 0x4, scoped, tag = 'scoped memory for tpu_custom_call.1']
    #allocation7 [shape = 'u8[4096]{0}', space=vmem, size = 0x1000, scoped, tag = 'output window, operand 0, single buffered']
    %7 = vsyncpa [#allocation3], 0
    %8 = vsyncpa [#allocation6], 0
    %9 = vsyncpa [#allocation4], 0
    // Predicated region
    $region2: #{tpu_custom_call.1} parent=1 // pred_check
      _
    $region3: #{tpu_custom_call.1} parent=1 // pred_check_branch
      %11 = sbr.rel (0) target = $region5
    $region4: #{tpu_custom_call.1} parent=1 // pred_region
      %13 = vsyncadd [#allocation3], 0
      %s14 = sshll.u32 %s0, 4
      %s15 = int_to_ptr.hbm [resolvable:$true] %s14
      %s16 = sshll.u32 [#allocation2], 4
      %s17 = int_to_ptr.vmem [resolvable:$true] %s16
      %22 = dma.hbm_to_vmem [thread:$0]  %s15, 33280, %s17, [#allocation3], 128, 128, 8
    $region5: #{tpu_custom_call.1} parent=1 // pred_fallthru
      _
    // Predicated region
    $region6: #{tpu_custom_call.1} parent=1 // pred_check
      _
    $region7: #{tpu_custom_call.1} parent=1 // pred_check_branch
      %24 = sbr.rel (0) target = $region9
    $region8: #{tpu_custom_call.1} parent=1 // pred_region
      %26 = vsyncadd [#allocation6], 0
      %s27 = sshll.u32 %s1, 4
      %s28 = int_to_ptr.hbm [resolvable:$true] %s27
      %s29 = sshll.u32 [#allocation5], 4
      %s30 = int_to_ptr.vmem [resolvable:$true] %s29
      %35 = dma.hbm_to_vmem [thread:$0]  %s28, 33280, %s30, [#allocation6], 128, 128, 8
    $region9: #{tpu_custom_call.1} parent=1 // pred_fallthru
      _
    // Predicated region
    $region10: #{tpu_custom_call.1} parent=1 // pred_check
      _
    $region11: #{tpu_custom_call.1} parent=1 // pred_check_branch
      %37 = sbr.rel (0) target = $region13
    $region12: #{tpu_custom_call.1} parent=1 // pred_region
      %39 = dma.done [#allocation3], 33280
    $region13: #{tpu_custom_call.1} parent=1 // pred_fallthru
      _
    // Predicated region
    $region14: #{tpu_custom_call.1} parent=1 // pred_check
      _
    $region15: #{tpu_custom_call.1} parent=1 // pred_check_branch
      %41 = sbr.rel (0) target = $region17
    $region16: #{tpu_custom_call.1} parent=1 // pred_region
      %43 = dma.done [#allocation6], 33280
    $region17: #{tpu_custom_call.1} parent=1 // pred_fallthru
      _
    %p44 = scmp.eq.s32.totalorder 0, 0
    // Predicated region
    $region18: #{tpu_custom_call.1} parent=1 // pred_check
      %p45 = pneg %p44
    $region19: #{tpu_custom_call.1} parent=1 // pred_check_branch
      %47 = sbr.rel (%p45) target = $region21
    $region20: #{tpu_custom_call.1} parent=1 // pred_region
      %48 = vst [vmem:[#allocation7] sm:$0xff] 0.0
    $region21: #{tpu_custom_call.1} parent=1 // pred_fallthru
      _
    %s49 = sadd.s32 0, 0
    %v50 = vld [vmem:[#allocation2] sm:$0xff]
    %v51 = vld [vmem:[#allocation2 + $0x8] sm:$0xff]
    %v52 = vld [vmem:[#allocation2 + $0x10] sm:$0xff]
    %v53 = vld [vmem:[#allocation2 + $0x18] sm:$0xff]
    %v54 = vld [vmem:[#allocation2 + $0x20] sm:$0xff]
    %v55 = vld [vmem:[#allocation2 + $0x28] sm:$0xff]
    %v56 = vld [vmem:[#allocation2 + $0x30] sm:$0xff]
    %v57 = vld [vmem:[#allocation2 + $0x38] sm:$0xff]
    %v58 = vld [vmem:[#allocation2 + $0x40] sm:$0xff]
    %v59 = vld [vmem:[#allocation2 + $0x48] sm:$0xff]
    %v60 = vld [vmem:[#allocation2 + $0x50] sm:$0xff]
    %v61 = vld [vmem:[#allocation2 + $0x58] sm:$0xff]
    %v62 = vld [vmem:[#allocation2 + $0x60] sm:$0xff]
    %v63 = vld [vmem:[#allocation2 + $0x68] sm:$0xff]
    %v64 = vld [vmem:[#allocation2 + $0x70] sm:$0xff]
    %v65 = vld [vmem:[#allocation2 + $0x78] sm:$0xff]
    %v66 = vld [vmem:[#allocation2 + $0x80] sm:$0xff]
    %v67 = vld [vmem:[#allocation2 + $0x88] sm:$0xff]
    %v68 = vld [vmem:[#allocation2 + $0x90] sm:$0xff]
    %v69 = vld [vmem:[#allocation2 + $0x98] sm:$0xff]
    %v70 = vld [vmem:[#allocation2 + $0xa0] sm:$0xff]
    %v71 = vld [vmem:[#allocation2 + $0xa8] sm:$0xff]
    %v72 = vld [vmem:[#allocation2 + $0xb0] sm:$0xff]
    %v73 = vld [vmem:[#allocation2 + $0xb8] sm:$0xff]
    %v74 = vld [vmem:[#allocation2 + $0xc0] sm:$0xff]
    %v75 = vld [vmem:[#allocation2 + $0xc8] sm:$0xff]
    %v76 = vld [vmem:[#allocation2 + $0xd0] sm:$0xff]
    %v77 = vld [vmem:[#allocation2 + $0xd8] sm:$0xff]
    %v78 = vld [vmem:[#allocation2 + $0xe0] sm:$0xff]
    %v79 = vld [vmem:[#allocation2 + $0xe8] sm:$0xff]
    %v80 = vld [vmem:[#allocation2 + $0xf0] sm:$0xff]
    %v81 = vld [vmem:[#allocation2 + $0xf8] sm:$0xff]
    %v82 = vld [vmem:[#allocation2 + $0x100] sm:$0xff]
    %v83 = vld [vmem:[#allocation2 + $0x108] sm:$0xff]
    %v84 = vld [vmem:[#allocation2 + $0x110] sm:$0xff]
    %v85 = vld [vmem:[#allocation2 + $0x118] sm:$0xff]
    %v86 = vld [vmem:[#allocation2 + $0x120] sm:$0xff]
    %v87 = vld [vmem:[#allocation2 + $0x128] sm:$0xff]
    %v88 = vld [vmem:[#allocation2 + $0x130] sm:$0xff]
    %v89 = vld [vmem:[#allocation2 + $0x138] sm:$0xff]
    %v90 = vld [vmem:[#allocation2 + $0x140] sm:$0xff]
    %v91 = vld [vmem:[#allocation2 + $0x148] sm:$0xff]
    %v92 = vld [vmem:[#allocation2 + $0x150] sm:$0xff]
    %v93 = vld [vmem:[#allocation2 + $0x158] sm:$0xff]
    %v94 = vld [vmem:[#allocation2 + $0x160] sm:$0xff]
    %v95 = vld [vmem:[#allocation2 + $0x168] sm:$0xff]
    %v96 = vld [vmem:[#allocation2 + $0x170] sm:$0xff]
    %v97 = vld [vmem:[#allocation2 + $0x178] sm:$0xff]
    %v98 = vld [vmem:[#allocation2 + $0x180] sm:$0xff]
    %v99 = vld [vmem:[#allocation2 + $0x188] sm:$0xff]
    %v100 = vld [vmem:[#allocation2 + $0x190] sm:$0xff]
    %v101 = vld [vmem:[#allocation2 + $0x198] sm:$0xff]
    %v102 = vld [vmem:[#allocation2 + $0x1a0] sm:$0xff]
    %v103 = vld [vmem:[#allocation2 + $0x1a8] sm:$0xff]
    %v104 = vld [vmem:[#allocation2 + $0x1b0] sm:$0xff]
    %v105 = vld [vmem:[#allocation2 + $0x1b8] sm:$0xff]
    %v106 = vld [vmem:[#allocation2 + $0x1c0] sm:$0xff]
    %v107 = vld [vmem:[#allocation2 + $0x1c8] sm:$0xff]
    %v108 = vld [vmem:[#allocation2 + $0x1d0] sm:$0xff]
    %v109 = vld [vmem:[#allocation2 + $0x1d8] sm:$0xff]
    %v110 = vld [vmem:[#allocation2 + $0x1e0] sm:$0xff]
    %v111 = vld [vmem:[#allocation2 + $0x1e8] sm:$0xff]
    %v112 = vld [vmem:[#allocation2 + $0x1f0] sm:$0xff]
    %v113 = vld [vmem:[#allocation2 + $0x1f8] sm:$0xff]
    %v114 = vld [vmem:[#allocation2 + $0x200] sm:$0xff]
    %v115 = vld [vmem:[#allocation2 + $0x208] sm:$0xff]
    %v116 = vld [vmem:[#allocation2 + $0x210] sm:$0xff]
    %v117 = vld [vmem:[#allocation2 + $0x218] sm:$0xff]
    %v118 = vld [vmem:[#allocation2 + $0x220] sm:$0xff]
    %v119 = vld [vmem:[#allocation2 + $0x228] sm:$0xff]
    %v120 = vld [vmem:[#allocation2 + $0x230] sm:$0xff]
    %v121 = vld [vmem:[#allocation2 + $0x238] sm:$0xff]
    %v122 = vld [vmem:[#allocation2 + $0x240] sm:$0xff]
    %v123 = vld [vmem:[#allocation2 + $0x248] sm:$0xff]
    %v124 = vld [vmem:[#allocation2 + $0x250] sm:$0xff]
    %v125 = vld [vmem:[#allocation2 + $0x258] sm:$0xff]
    %v126 = vld [vmem:[#allocation2 + $0x260] sm:$0xff]
    %v127 = vld [vmem:[#allocation2 + $0x268] sm:$0xff]
    %v128 = vld [vmem:[#allocation2 + $0x270] sm:$0xff]
    %v129 = vld [vmem:[#allocation2 + $0x278] sm:$0xff]
    %v130 = vld [vmem:[#allocation2 + $0x280] sm:$0xff]
    %v131 = vld [vmem:[#allocation2 + $0x288] sm:$0xff]
    %v132 = vld [vmem:[#allocation2 + $0x290] sm:$0xff]
    %v133 = vld [vmem:[#allocation2 + $0x298] sm:$0xff]
    %v134 = vld [vmem:[#allocation2 + $0x2a0] sm:$0xff]
    %v135 = vld [vmem:[#allocation2 + $0x2a8] sm:$0xff]
    %v136 = vld [vmem:[#allocation2 + $0x2b0] sm:$0xff]
    %v137 = vld [vmem:[#allocation2 + $0x2b8] sm:$0xff]
    %v138 = vld [vmem:[#allocation2 + $0x2c0] sm:$0xff]
    %v139 = vld [vmem:[#allocation2 + $0x2c8] sm:$0xff]
    %v140 = vld [vmem:[#allocation2 + $0x2d0] sm:$0xff]
    %v141 = vld [vmem:[#allocation2 + $0x2d8] sm:$0xff]
    %v142 = vld [vmem:[#allocation2 + $0x2e0] sm:$0xff]
    %v143 = vld [vmem:[#allocation2 + $0x2e8] sm:$0xff]
    %v144 = vld [vmem:[#allocation2 + $0x2f0] sm:$0xff]
    %v145 = vld [vmem:[#allocation2 + $0x2f8] sm:$0xff]
    %v146 = vld [vmem:[#allocation2 + $0x300] sm:$0xff]
    %v147 = vld [vmem:[#allocation2 + $0x308] sm:$0xff]
    %v148 = vld [vmem:[#allocation2 + $0x310] sm:$0xff]
    %v149 = vld [vmem:[#allocation2 + $0x318] sm:$0xff]
    %v150 = vld [vmem:[#allocation2 + $0x320] sm:$0xff]
    %v151 = vld [vmem:[#allocation2 + $0x328] sm:$0xff]
    %v152 = vld [vmem:[#allocation2 + $0x330] sm:$0xff]
    %v153 = vld [vmem:[#allocation2 + $0x338] sm:$0xff]
    %v154 = vld [vmem:[#allocation2 + $0x340] sm:$0xff]
    %v155 = vld [vmem:[#allocation2 + $0x348] sm:$0xff]
    %v156 = vld [vmem:[#allocation2 + $0x350] sm:$0xff]
    %v157 = vld [vmem:[#allocation2 + $0x358] sm:$0xff]
    %v158 = vld [vmem:[#allocation2 + $0x360] sm:$0xff]
    %v159 = vld [vmem:[#allocation2 + $0x368] sm:$0xff]
    %v160 = vld [vmem:[#allocation2 + $0x370] sm:$0xff]
    %v161 = vld [vmem:[#allocation2 + $0x378] sm:$0xff]
    %v162 = vld [vmem:[#allocation2 + $0x380] sm:$0xff]
    %v163 = vld [vmem:[#allocation2 + $0x388] sm:$0xff]
    %v164 = vld [vmem:[#allocation2 + $0x390] sm:$0xff]
    %v165 = vld [vmem:[#allocation2 + $0x398] sm:$0xff]
    %v166 = vld [vmem:[#allocation2 + $0x3a0] sm:$0xff]
    %v167 = vld [vmem:[#allocation2 + $0x3a8] sm:$0xff]
    %v168 = vld [vmem:[#allocation2 + $0x3b0] sm:$0xff]
    %v169 = vld [vmem:[#allocation2 + $0x3b8] sm:$0xff]
    %v170 = vld [vmem:[#allocation2 + $0x3c0] sm:$0xff]
    %v171 = vld [vmem:[#allocation2 + $0x3c8] sm:$0xff]
    %v172 = vld [vmem:[#allocation2 + $0x3d0] sm:$0xff]
    %v173 = vld [vmem:[#allocation2 + $0x3d8] sm:$0xff]
    %v174 = vld [vmem:[#allocation2 + $0x3e0] sm:$0xff]
    %v175 = vld [vmem:[#allocation2 + $0x3e8] sm:$0xff]
    %v176 = vld [vmem:[#allocation2 + $0x3f0] sm:$0xff]
    %v177 = vld [vmem:[#allocation2 + $0x3f8] sm:$0xff]
    %v178 = vld [vmem:[#allocation2 + $0x400] sm:$0xff]
    %v179 = vld [vmem:[#allocation2 + $0x408] sm:$0xff]
    %v180 = vld [vmem:[#allocation2 + $0x410] sm:$0xff]
    %v181 = vld [vmem:[#allocation2 + $0x418] sm:$0xff]
    %v182 = vld [vmem:[#allocation2 + $0x420] sm:$0xff]
    %v183 = vld [vmem:[#allocation2 + $0x428] sm:$0xff]
    %v184 = vld [vmem:[#allocation2 + $0x430] sm:$0xff]
    %v185 = vld [vmem:[#allocation2 + $0x438] sm:$0xff]
    %v186 = vld [vmem:[#allocation2 + $0x440] sm:$0xff]
    %v187 = vld [vmem:[#allocation2 + $0x448] sm:$0xff]
    %v188 = vld [vmem:[#allocation2 + $0x450] sm:$0xff]
    %v189 = vld [vmem:[#allocation2 + $0x458] sm:$0xff]
    %v190 = vld [vmem:[#allocation2 + $0x460] sm:$0xff]
    %v191 = vld [vmem:[#allocation2 + $0x468] sm:$0xff]
    %v192 = vld [vmem:[#allocation2 + $0x470] sm:$0xff]
    %v193 = vld [vmem:[#allocation2 + $0x478] sm:$0xff]
    %v194 = vld [vmem:[#allocation2 + $0x480] sm:$0xff]
    %v195 = vld [vmem:[#allocation2 + $0x488] sm:$0xff]
    %v196 = vld [vmem:[#allocation2 + $0x490] sm:$0xff]
    %v197 = vld [vmem:[#allocation2 + $0x498] sm:$0xff]
    %v198 = vld [vmem:[#allocation2 + $0x4a0] sm:$0xff]
    %v199 = vld [vmem:[#allocation2 + $0x4a8] sm:$0xff]
    %v200 = vld [vmem:[#allocation2 + $0x4b0] sm:$0xff]
    %v201 = vld [vmem:[#allocation2 + $0x4b8] sm:$0xff]
    %v202 = vld [vmem:[#allocation2 + $0x4c0] sm:$0xff]
    %v203 = vld [vmem:[#allocation2 + $0x4c8] sm:$0xff]
    %v204 = vld [vmem:[#allocation2 + $0x4d0] sm:$0xff]
    %v205 = vld [vmem:[#allocation2 + $0x4d8] sm:$0xff]
    %v206 = vld [vmem:[#allocation2 + $0x4e0] sm:$0xff]
    %v207 = vld [vmem:[#allocation2 + $0x4e8] sm:$0xff]
    %v208 = vld [vmem:[#allocation2 + $0x4f0] sm:$0xff]
    %v209 = vld [vmem:[#allocation2 + $0x4f8] sm:$0xff]
    %v210 = vld [vmem:[#allocation2 + $0x500] sm:$0xff]
    %v211 = vld [vmem:[#allocation2 + $0x508] sm:$0xff]
    %v212 = vld [vmem:[#allocation2 + $0x510] sm:$0xff]
    %v213 = vld [vmem:[#allocation2 + $0x518] sm:$0xff]
    %v214 = vld [vmem:[#allocation2 + $0x520] sm:$0xff]
    %v215 = vld [vmem:[#allocation2 + $0x528] sm:$0xff]
    %v216 = vld [vmem:[#allocation2 + $0x530] sm:$0xff]
    %v217 = vld [vmem:[#allocation2 + $0x538] sm:$0xff]
    %v218 = vld [vmem:[#allocation2 + $0x540] sm:$0xff]
    %v219 = vld [vmem:[#allocation2 + $0x548] sm:$0xff]
    %v220 = vld [vmem:[#allocation2 + $0x550] sm:$0xff]
    %v221 = vld [vmem:[#allocation2 + $0x558] sm:$0xff]
    %v222 = vld [vmem:[#allocation2 + $0x560] sm:$0xff]
    %v223 = vld [vmem:[#allocation2 + $0x568] sm:$0xff]
    %v224 = vld [vmem:[#allocation2 + $0x570] sm:$0xff]
    %v225 = vld [vmem:[#allocation2 + $0x578] sm:$0xff]
    %v226 = vld [vmem:[#allocation2 + $0x580] sm:$0xff]
    %v227 = vld [vmem:[#allocation2 + $0x588] sm:$0xff]
    %v228 = vld [vmem:[#allocation2 + $0x590] sm:$0xff]
    %v229 = vld [vmem:[#allocation2 + $0x598] sm:$0xff]
    %v230 = vld [vmem:[#allocation2 + $0x5a0] sm:$0xff]
    %v231 = vld [vmem:[#allocation2 + $0x5a8] sm:$0xff]
    %v232 = vld [vmem:[#allocation2 + $0x5b0] sm:$0xff]
    %v233 = vld [vmem:[#allocation2 + $0x5b8] sm:$0xff]
    %v234 = vld [vmem:[#allocation2 + $0x5c0] sm:$0xff]
    %v235 = vld [vmem:[#allocation2 + $0x5c8] sm:$0xff]
    %v236 = vld [vmem:[#allocation2 + $0x5d0] sm:$0xff]
    %v237 = vld [vmem:[#allocation2 + $0x5d8] sm:$0xff]
    %v238 = vld [vmem:[#allocation2 + $0x5e0] sm:$0xff]
    %v239 = vld [vmem:[#allocation2 + $0x5e8] sm:$0xff]
    %v240 = vld [vmem:[#allocation2 + $0x5f0] sm:$0xff]
    %v241 = vld [vmem:[#allocation2 + $0x5f8] sm:$0xff]
    %v242 = vld [vmem:[#allocation2 + $0x600] sm:$0xff]
    %v243 = vld [vmem:[#allocation2 + $0x608] sm:$0xff]
    %v244 = vld [vmem:[#allocation2 + $0x610] sm:$0xff]
    %v245 = vld [vmem:[#allocation2 + $0x618] sm:$0xff]
    %v246 = vld [vmem:[#allocation2 + $0x620] sm:$0xff]
    %v247 = vld [vmem:[#allocation2 + $0x628] sm:$0xff]
    %v248 = vld [vmem:[#allocation2 + $0x630] sm:$0xff]
    %v249 = vld [vmem:[#allocation2 + $0x638] sm:$0xff]
    %v250 = vld [vmem:[#allocation2 + $0x640] sm:$0xff]
    %v251 = vld [vmem:[#allocation2 + $0x648] sm:$0xff]
    %v252 = vld [vmem:[#allocation2 + $0x650] sm:$0xff]
    %v253 = vld [vmem:[#allocation2 + $0x658] sm:$0xff]
    %v254 = vld [vmem:[#allocation2 + $0x660] sm:$0xff]
    %v255 = vld [vmem:[#allocation2 + $0x668] sm:$0xff]
    %v256 = vld [vmem:[#allocation2 + $0x670] sm:$0xff]
    %v257 = vld [vmem:[#allocation2 + $0x678] sm:$0xff]
    %v258 = vld [vmem:[#allocation2 + $0x680] sm:$0xff]
    %v259 = vld [vmem:[#allocation2 + $0x688] sm:$0xff]
    %v260 = vld [vmem:[#allocation2 + $0x690] sm:$0xff]
    %v261 = vld [vmem:[#allocation2 + $0x698] sm:$0xff]
    %v262 = vld [vmem:[#allocation2 + $0x6a0] sm:$0xff]
    %v263 = vld [vmem:[#allocation2 + $0x6a8] sm:$0xff]
    %v264 = vld [vmem:[#allocation2 + $0x6b0] sm:$0xff]
    %v265 = vld [vmem:[#allocation2 + $0x6b8] sm:$0xff]
    %v266 = vld [vmem:[#allocation2 + $0x6c0] sm:$0xff]
    %v267 = vld [vmem:[#allocation2 + $0x6c8] sm:$0xff]
    %v268 = vld [vmem:[#allocation2 + $0x6d0] sm:$0xff]
    %v269 = vld [vmem:[#allocation2 + $0x6d8] sm:$0xff]
    %v270 = vld [vmem:[#allocation2 + $0x6e0] sm:$0xff]
    %v271 = vld [vmem:[#allocation2 + $0x6e8] sm:$0xff]
    %v272 = vld [vmem:[#allocation2 + $0x6f0] sm:$0xff]
    %v273 = vld [vmem:[#allocation2 + $0x6f8] sm:$0xff]
    %v274 = vld [vmem:[#allocation2 + $0x700] sm:$0xff]
    %v275 = vld [vmem:[#allocation2 + $0x708] sm:$0xff]
    %v276 = vld [vmem:[#allocation2 + $0x710] sm:$0xff]
    %v277 = vld [vmem:[#allocation2 + $0x718] sm:$0xff]
    %v278 = vld [vmem:[#allocation2 + $0x720] sm:$0xff]
    %v279 = vld [vmem:[#allocation2 + $0x728] sm:$0xff]
    %v280 = vld [vmem:[#allocation2 + $0x730] sm:$0xff]
    %v281 = vld [vmem:[#allocation2 + $0x738] sm:$0xff]
    %v282 = vld [vmem:[#allocation2 + $0x740] sm:$0xff]
    %v283 = vld [vmem:[#allocation2 + $0x748] sm:$0xff]
    %v284 = vld [vmem:[#allocation2 + $0x750] sm:$0xff]
    %v285 = vld [vmem:[#allocation2 + $0x758] sm:$0xff]
    %v286 = vld [vmem:[#allocation2 + $0x760] sm:$0xff]
    %v287 = vld [vmem:[#allocation2 + $0x768] sm:$0xff]
    %v288 = vld [vmem:[#allocation2 + $0x770] sm:$0xff]
    %v289 = vld [vmem:[#allocation2 + $0x778] sm:$0xff]
    %v290 = vld [vmem:[#allocation2 + $0x780] sm:$0xff]
    %v291 = vld [vmem:[#allocation2 + $0x788] sm:$0xff]
    %v292 = vld [vmem:[#allocation2 + $0x790] sm:$0xff]
    %v293 = vld [vmem:[#allocation2 + $0x798] sm:$0xff]
    %v294 = vld [vmem:[#allocation2 + $0x7a0] sm:$0xff]
    %v295 = vld [vmem:[#allocation2 + $0x7a8] sm:$0xff]
    %v296 = vld [vmem:[#allocation2 + $0x7b0] sm:$0xff]
    %v297 = vld [vmem:[#allocation2 + $0x7b8] sm:$0xff]
    %v298 = vld [vmem:[#allocation2 + $0x7c0] sm:$0xff]
    %v299 = vld [vmem:[#allocation2 + $0x7c8] sm:$0xff]
    %v300 = vld [vmem:[#allocation2 + $0x7d0] sm:$0xff]
    %v301 = vld [vmem:[#allocation2 + $0x7d8] sm:$0xff]
    %v302 = vld [vmem:[#allocation2 + $0x7e0] sm:$0xff]
    %v303 = vld [vmem:[#allocation2 + $0x7e8] sm:$0xff]
    %v304 = vld [vmem:[#allocation2 + $0x7f0] sm:$0xff]
    %v305 = vld [vmem:[#allocation2 + $0x7f8] sm:$0xff]
    %v306 = vld [vmem:[#allocation2 + $0x800] sm:$0xff]
    %v307 = vld [vmem:[#allocation2 + $0x808] sm:$0xff]
    %v308 = vld [vmem:[#allocation2 + $0x810] sm:$0xff]
    %v309 = vld [vmem:[#allocation2 + $0x818] sm:$0xff]
    %v310 = vld [vmem:[#allocation5] sm:$0xff]
    %v311 = vld [vmem:[#allocation5 + $0x8] sm:$0xff]
    %v312 = vld [vmem:[#allocation5 + $0x10] sm:$0xff]
    %v313 = vld [vmem:[#allocation5 + $0x18] sm:$0xff]
    %v314 = vld [vmem:[#allocation5 + $0x20] sm:$0xff]
    %v315 = vld [vmem:[#allocation5 + $0x28] sm:$0xff]
    %v316 = vld [vmem:[#allocation5 + $0x30] sm:$0xff]
    %v317 = vld [vmem:[#allocation5 + $0x38] sm:$0xff]
    %v318 = vld [vmem:[#allocation5 + $0x40] sm:$0xff]
    %v319 = vld [vmem:[#allocation5 + $0x48] sm:$0xff]
    %v320 = vld [vmem:[#allocation5 + $0x50] sm:$0xff]
    %v321 = vld [vmem:[#allocation5 + $0x58] sm:$0xff]
    %v322 = vld [vmem:[#allocation5 + $0x60] sm:$0xff]
    %v323 = vld [vmem:[#allocation5 + $0x68] sm:$0xff]
    %v324 = vld [vmem:[#allocation5 + $0x70] sm:$0xff]
    %v325 = vld [vmem:[#allocation5 + $0x78] sm:$0xff]
    %v326 = vld [vmem:[#allocation5 + $0x80] sm:$0xff]
    %v327 = vld [vmem:[#allocation5 + $0x88] sm:$0xff]
    %v328 = vld [vmem:[#allocation5 + $0x90] sm:$0xff]
    %v329 = vld [vmem:[#allocation5 + $0x98] sm:$0xff]
    %v330 = vld [vmem:[#allocation5 + $0xa0] sm:$0xff]
    %v331 = vld [vmem:[#allocation5 + $0xa8] sm:$0xff]
    %v332 = vld [vmem:[#allocation5 + $0xb0] sm:$0xff]
    %v333 = vld [vmem:[#allocation5 + $0xb8] sm:$0xff]
    %v334 = vld [vmem:[#allocation5 + $0xc0] sm:$0xff]
    %v335 = vld [vmem:[#allocation5 + $0xc8] sm:$0xff]
    %v336 = vld [vmem:[#allocation5 + $0xd0] sm:$0xff]
    %v337 = vld [vmem:[#allocation5 + $0xd8] sm:$0xff]
    %v338 = vld [vmem:[#allocation5 + $0xe0] sm:$0xff]
    %v339 = vld [vmem:[#allocation5 + $0xe8] sm:$0xff]
    %v340 = vld [vmem:[#allocation5 + $0xf0] sm:$0xff]
    %v341 = vld [vmem:[#allocation5 + $0xf8] sm:$0xff]
    %v342 = vld [vmem:[#allocation5 + $0x100] sm:$0xff]
    %v343 = vld [vmem:[#allocation5 + $0x108] sm:$0xff]
    %v344 = vld [vmem:[#allocation5 + $0x110] sm:$0xff]
    %v345 = vld [vmem:[#allocation5 + $0x118] sm:$0xff]
    %v346 = vld [vmem:[#allocation5 + $0x120] sm:$0xff]
    %v347 = vld [vmem:[#allocation5 + $0x128] sm:$0xff]
    %v348 = vld [vmem:[#allocation5 + $0x130] sm:$0xff]
    %v349 = vld [vmem:[#allocation5 + $0x138] sm:$0xff]
    %v350 = vld [vmem:[#allocation5 + $0x140] sm:$0xff]
    %v351 = vld [vmem:[#allocation5 + $0x148] sm:$0xff]
    %v352 = vld [vmem:[#allocation5 + $0x150] sm:$0xff]
    %v353 = vld [vmem:[#allocation5 + $0x158] sm:$0xff]
    %v354 = vld [vmem:[#allocation5 + $0x160] sm:$0xff]
    %v355 = vld [vmem:[#allocation5 + $0x168] sm:$0xff]
    %v356 = vld [vmem:[#allocation5 + $0x170] sm:$0xff]
    %v357 = vld [vmem:[#allocation5 + $0x178] sm:$0xff]
    %v358 = vld [vmem:[#allocation5 + $0x180] sm:$0xff]
    %v359 = vld [vmem:[#allocation5 + $0x188] sm:$0xff]
    %v360 = vld [vmem:[#allocation5 + $0x190] sm:$0xff]
    %v361 = vld [vmem:[#allocation5 + $0x198] sm:$0xff]
    %v362 = vld [vmem:[#allocation5 + $0x1a0] sm:$0xff]
    %v363 = vld [vmem:[#allocation5 + $0x1a8] sm:$0xff]
    %v364 = vld [vmem:[#allocation5 + $0x1b0] sm:$0xff]
    %v365 = vld [vmem:[#allocation5 + $0x1b8] sm:$0xff]
    %v366 = vld [vmem:[#allocation5 + $0x1c0] sm:$0xff]
    %v367 = vld [vmem:[#allocation5 + $0x1c8] sm:$0xff]
    %v368 = vld [vmem:[#allocation5 + $0x1d0] sm:$0xff]
    %v369 = vld [vmem:[#allocation5 + $0x1d8] sm:$0xff]
    %v370 = vld [vmem:[#allocation5 + $0x1e0] sm:$0xff]
    %v371 = vld [vmem:[#allocation5 + $0x1e8] sm:$0xff]
    %v372 = vld [vmem:[#allocation5 + $0x1f0] sm:$0xff]
    %v373 = vld [vmem:[#allocation5 + $0x1f8] sm:$0xff]
    %v374 = vld [vmem:[#allocation5 + $0x200] sm:$0xff]
    %v375 = vld [vmem:[#allocation5 + $0x208] sm:$0xff]
    %v376 = vld [vmem:[#allocation5 + $0x210] sm:$0xff]
    %v377 = vld [vmem:[#allocation5 + $0x218] sm:$0xff]
    %v378 = vld [vmem:[#allocation5 + $0x220] sm:$0xff]
    %v379 = vld [vmem:[#allocation5 + $0x228] sm:$0xff]
    %v380 = vld [vmem:[#allocation5 + $0x230] sm:$0xff]
    %v381 = vld [vmem:[#allocation5 + $0x238] sm:$0xff]
    %v382 = vld [vmem:[#allocation5 + $0x240] sm:$0xff]
    %v383 = vld [vmem:[#allocation5 + $0x248] sm:$0xff]
    %v384 = vld [vmem:[#allocation5 + $0x250] sm:$0xff]
    %v385 = vld [vmem:[#allocation5 + $0x258] sm:$0xff]
    %v386 = vld [vmem:[#allocation5 + $0x260] sm:$0xff]
    %v387 = vld [vmem:[#allocation5 + $0x268] sm:$0xff]
    %v388 = vld [vmem:[#allocation5 + $0x270] sm:$0xff]
    %v389 = vld [vmem:[#allocation5 + $0x278] sm:$0xff]
    %v390 = vld [vmem:[#allocation5 + $0x280] sm:$0xff]
    %v391 = vld [vmem:[#allocation5 + $0x288] sm:$0xff]
    %v392 = vld [vmem:[#allocation5 + $0x290] sm:$0xff]
    %v393 = vld [vmem:[#allocation5 + $0x298] sm:$0xff]
    %v394 = vld [vmem:[#allocation5 + $0x2a0] sm:$0xff]
    %v395 = vld [vmem:[#allocation5 + $0x2a8] sm:$0xff]
    %v396 = vld [vmem:[#allocation5 + $0x2b0] sm:$0xff]
    %v397 = vld [vmem:[#allocation5 + $0x2b8] sm:$0xff]
    %v398 = vld [vmem:[#allocation5 + $0x2c0] sm:$0xff]
    %v399 = vld [vmem:[#allocation5 + $0x2c8] sm:$0xff]
    %v400 = vld [vmem:[#allocation5 + $0x2d0] sm:$0xff]
    %v401 = vld [vmem:[#allocation5 + $0x2d8] sm:$0xff]
    %v402 = vld [vmem:[#allocation5 + $0x2e0] sm:$0xff]
    %v403 = vld [vmem:[#allocation5 + $0x2e8] sm:$0xff]
    %v404 = vld [vmem:[#allocation5 + $0x2f0] sm:$0xff]
    %v405 = vld [vmem:[#allocation5 + $0x2f8] sm:$0xff]
    %v406 = vld [vmem:[#allocation5 + $0x300] sm:$0xff]
    %v407 = vld [vmem:[#allocation5 + $0x308] sm:$0xff]
    %v408 = vld [vmem:[#allocation5 + $0x310] sm:$0xff]
    %v409 = vld [vmem:[#allocation5 + $0x318] sm:$0xff]
    %v410 = vld [vmem:[#allocation5 + $0x320] sm:$0xff]
    %v411 = vld [vmem:[#allocation5 + $0x328] sm:$0xff]
    %v412 = vld [vmem:[#allocation5 + $0x330] sm:$0xff]
    %v413 = vld [vmem:[#allocation5 + $0x338] sm:$0xff]
    %v414 = vld [vmem:[#allocation5 + $0x340] sm:$0xff]
    %v415 = vld [vmem:[#allocation5 + $0x348] sm:$0xff]
    %v416 = vld [vmem:[#allocation5 + $0x350] sm:$0xff]
    %v417 = vld [vmem:[#allocation5 + $0x358] sm:$0xff]
    %v418 = vld [vmem:[#allocation5 + $0x360] sm:$0xff]
    %v419 = vld [vmem:[#allocation5 + $0x368] sm:$0xff]
    %v420 = vld [vmem:[#allocation5 + $0x370] sm:$0xff]
    %v421 = vld [vmem:[#allocation5 + $0x378] sm:$0xff]
    %v422 = vld [vmem:[#allocation5 + $0x380] sm:$0xff]
    %v423 = vld [vmem:[#allocation5 + $0x388] sm:$0xff]
    %v424 = vld [vmem:[#allocation5 + $0x390] sm:$0xff]
    %v425 = vld [vmem:[#allocation5 + $0x398] sm:$0xff]
    %v426 = vld [vmem:[#allocation5 + $0x3a0] sm:$0xff]
    %v427 = vld [vmem:[#allocation5 + $0x3a8] sm:$0xff]
    %v428 = vld [vmem:[#allocation5 + $0x3b0] sm:$0xff]
    %v429 = vld [vmem:[#allocation5 + $0x3b8] sm:$0xff]
    %v430 = vld [vmem:[#allocation5 + $0x3c0] sm:$0xff]
    %v431 = vld [vmem:[#allocation5 + $0x3c8] sm:$0xff]
    %v432 = vld [vmem:[#allocation5 + $0x3d0] sm:$0xff]
    %v433 = vld [vmem:[#allocation5 + $0x3d8] sm:$0xff]
    %v434 = vld [vmem:[#allocation5 + $0x3e0] sm:$0xff]
    %v435 = vld [vmem:[#allocation5 + $0x3e8] sm:$0xff]
    %v436 = vld [vmem:[#allocation5 + $0x3f0] sm:$0xff]
    %v437 = vld [vmem:[#allocation5 + $0x3f8] sm:$0xff]
    %v438 = vld [vmem:[#allocation5 + $0x400] sm:$0xff]
    %v439 = vld [vmem:[#allocation5 + $0x408] sm:$0xff]
    %v440 = vld [vmem:[#allocation5 + $0x410] sm:$0xff]
    %v441 = vld [vmem:[#allocation5 + $0x418] sm:$0xff]
    %v442 = vld [vmem:[#allocation5 + $0x420] sm:$0xff]
    %v443 = vld [vmem:[#allocation5 + $0x428] sm:$0xff]
    %v444 = vld [vmem:[#allocation5 + $0x430] sm:$0xff]
    %v445 = vld [vmem:[#allocation5 + $0x438] sm:$0xff]
    %v446 = vld [vmem:[#allocation5 + $0x440] sm:$0xff]
    %v447 = vld [vmem:[#allocation5 + $0x448] sm:$0xff]
    %v448 = vld [vmem:[#allocation5 + $0x450] sm:$0xff]
    %v449 = vld [vmem:[#allocation5 + $0x458] sm:$0xff]
    %v450 = vld [vmem:[#allocation5 + $0x460] sm:$0xff]
    %v451 = vld [vmem:[#allocation5 + $0x468] sm:$0xff]
    %v452 = vld [vmem:[#allocation5 + $0x470] sm:$0xff]
    %v453 = vld [vmem:[#allocation5 + $0x478] sm:$0xff]
    %v454 = vld [vmem:[#allocation5 + $0x480] sm:$0xff]
    %v455 = vld [vmem:[#allocation5 + $0x488] sm:$0xff]
    %v456 = vld [vmem:[#allocation5 + $0x490] sm:$0xff]
    %v457 = vld [vmem:[#allocation5 + $0x498] sm:$0xff]
    %v458 = vld [vmem:[#allocation5 + $0x4a0] sm:$0xff]
    %v459 = vld [vmem:[#allocation5 + $0x4a8] sm:$0xff]
    %v460 = vld [vmem:[#allocation5 + $0x4b0] sm:$0xff]
    %v461 = vld [vmem:[#allocation5 + $0x4b8] sm:$0xff]
    %v462 = vld [vmem:[#allocation5 + $0x4c0] sm:$0xff]
    %v463 = vld [vmem:[#allocation5 + $0x4c8] sm:$0xff]
    %v464 = vld [vmem:[#allocation5 + $0x4d0] sm:$0xff]
    %v465 = vld [vmem:[#allocation5 + $0x4d8] sm:$0xff]
    %v466 = vld [vmem:[#allocation5 + $0x4e0] sm:$0xff]
    %v467 = vld [vmem:[#allocation5 + $0x4e8] sm:$0xff]
    %v468 = vld [vmem:[#allocation5 + $0x4f0] sm:$0xff]
    %v469 = vld [vmem:[#allocation5 + $0x4f8] sm:$0xff]
    %v470 = vld [vmem:[#allocation5 + $0x500] sm:$0xff]
    %v471 = vld [vmem:[#allocation5 + $0x508] sm:$0xff]
    %v472 = vld [vmem:[#allocation5 + $0x510] sm:$0xff]
    %v473 = vld [vmem:[#allocation5 + $0x518] sm:$0xff]
    %v474 = vld [vmem:[#allocation5 + $0x520] sm:$0xff]
    %v475 = vld [vmem:[#allocation5 + $0x528] sm:$0xff]
    %v476 = vld [vmem:[#allocation5 + $0x530] sm:$0xff]
    %v477 = vld [vmem:[#allocation5 + $0x538] sm:$0xff]
    %v478 = vld [vmem:[#allocation5 + $0x540] sm:$0xff]
    %v479 = vld [vmem:[#allocation5 + $0x548] sm:$0xff]
    %v480 = vld [vmem:[#allocation5 + $0x550] sm:$0xff]
    %v481 = vld [vmem:[#allocation5 + $0x558] sm:$0xff]
    %v482 = vld [vmem:[#allocation5 + $0x560] sm:$0xff]
    %v483 = vld [vmem:[#allocation5 + $0x568] sm:$0xff]
    %v484 = vld [vmem:[#allocation5 + $0x570] sm:$0xff]
    %v485 = vld [vmem:[#allocation5 + $0x578] sm:$0xff]
    %v486 = vld [vmem:[#allocation5 + $0x580] sm:$0xff]
    %v487 = vld [vmem:[#allocation5 + $0x588] sm:$0xff]
    %v488 = vld [vmem:[#allocation5 + $0x590] sm:$0xff]
    %v489 = vld [vmem:[#allocation5 + $0x598] sm:$0xff]
    %v490 = vld [vmem:[#allocation5 + $0x5a0] sm:$0xff]
    %v491 = vld [vmem:[#allocation5 + $0x5a8] sm:$0xff]
    %v492 = vld [vmem:[#allocation5 + $0x5b0] sm:$0xff]
    %v493 = vld [vmem:[#allocation5 + $0x5b8] sm:$0xff]
    %v494 = vld [vmem:[#allocation5 + $0x5c0] sm:$0xff]
    %v495 = vld [vmem:[#allocation5 + $0x5c8] sm:$0xff]
    %v496 = vld [vmem:[#allocation5 + $0x5d0] sm:$0xff]
    %v497 = vld [vmem:[#allocation5 + $0x5d8] sm:$0xff]
    %v498 = vld [vmem:[#allocation5 + $0x5e0] sm:$0xff]
    %v499 = vld [vmem:[#allocation5 + $0x5e8] sm:$0xff]
    %v500 = vld [vmem:[#allocation5 + $0x5f0] sm:$0xff]
    %v501 = vld [vmem:[#allocation5 + $0x5f8] sm:$0xff]
    %v502 = vld [vmem:[#allocation5 + $0x600] sm:$0xff]
    %v503 = vld [vmem:[#allocation5 + $0x608] sm:$0xff]
    %v504 = vld [vmem:[#allocation5 + $0x610] sm:$0xff]
    %v505 = vld [vmem:[#allocation5 + $0x618] sm:$0xff]
    %v506 = vld [vmem:[#allocation5 + $0x620] sm:$0xff]
    %v507 = vld [vmem:[#allocation5 + $0x628] sm:$0xff]
    %v508 = vld [vmem:[#allocation5 + $0x630] sm:$0xff]
    %v509 = vld [vmem:[#allocation5 + $0x638] sm:$0xff]
    %v510 = vld [vmem:[#allocation5 + $0x640] sm:$0xff]
    %v511 = vld [vmem:[#allocation5 + $0x648] sm:$0xff]
    %v512 = vld [vmem:[#allocation5 + $0x650] sm:$0xff]
    %v513 = vld [vmem:[#allocation5 + $0x658] sm:$0xff]
    %v514 = vld [vmem:[#allocation5 + $0x660] sm:$0xff]
    %v515 = vld [vmem:[#allocation5 + $0x668] sm:$0xff]
    %v516 = vld [vmem:[#allocation5 + $0x670] sm:$0xff]
    %v517 = vld [vmem:[#allocation5 + $0x678] sm:$0xff]
    %v518 = vld [vmem:[#allocation5 + $0x680] sm:$0xff]
    %v519 = vld [vmem:[#allocation5 + $0x688] sm:$0xff]
    %v520 = vld [vmem:[#allocation5 + $0x690] sm:$0xff]
    %v521 = vld [vmem:[#allocation5 + $0x698] sm:$0xff]
    %v522 = vld [vmem:[#allocation5 + $0x6a0] sm:$0xff]
    %v523 = vld [vmem:[#allocation5 + $0x6a8] sm:$0xff]
    %v524 = vld [vmem:[#allocation5 + $0x6b0] sm:$0xff]
    %v525 = vld [vmem:[#allocation5 + $0x6b8] sm:$0xff]
    %v526 = vld [vmem:[#allocation5 + $0x6c0] sm:$0xff]
    %v527 = vld [vmem:[#allocation5 + $0x6c8] sm:$0xff]
    %v528 = vld [vmem:[#allocation5 + $0x6d0] sm:$0xff]
    %v529 = vld [vmem:[#allocation5 + $0x6d8] sm:$0xff]
    %v530 = vld [vmem:[#allocation5 + $0x6e0] sm:$0xff]
    %v531 = vld [vmem:[#allocation5 + $0x6e8] sm:$0xff]
    %v532 = vld [vmem:[#allocation5 + $0x6f0] sm:$0xff]
    %v533 = vld [vmem:[#allocation5 + $0x6f8] sm:$0xff]
    %v534 = vld [vmem:[#allocation5 + $0x700] sm:$0xff]
    %v535 = vld [vmem:[#allocation5 + $0x708] sm:$0xff]
    %v536 = vld [vmem:[#allocation5 + $0x710] sm:$0xff]
    %v537 = vld [vmem:[#allocation5 + $0x718] sm:$0xff]
    %v538 = vld [vmem:[#allocation5 + $0x720] sm:$0xff]
    %v539 = vld [vmem:[#allocation5 + $0x728] sm:$0xff]
    %v540 = vld [vmem:[#allocation5 + $0x730] sm:$0xff]
    %v541 = vld [vmem:[#allocation5 + $0x738] sm:$0xff]
    %v542 = vld [vmem:[#allocation5 + $0x740] sm:$0xff]
    %v543 = vld [vmem:[#allocation5 + $0x748] sm:$0xff]
    %v544 = vld [vmem:[#allocation5 + $0x750] sm:$0xff]
    %v545 = vld [vmem:[#allocation5 + $0x758] sm:$0xff]
    %v546 = vld [vmem:[#allocation5 + $0x760] sm:$0xff]
    %v547 = vld [vmem:[#allocation5 + $0x768] sm:$0xff]
    %v548 = vld [vmem:[#allocation5 + $0x770] sm:$0xff]
    %v549 = vld [vmem:[#allocation5 + $0x778] sm:$0xff]
    %v550 = vld [vmem:[#allocation5 + $0x780] sm:$0xff]
    %v551 = vld [vmem:[#allocation5 + $0x788] sm:$0xff]
    %v552 = vld [vmem:[#allocation5 + $0x790] sm:$0xff]
    %v553 = vld [vmem:[#allocation5 + $0x798] sm:$0xff]
    %v554 = vld [vmem:[#allocation5 + $0x7a0] sm:$0xff]
    %v555 = vld [vmem:[#allocation5 + $0x7a8] sm:$0xff]
    %v556 = vld [vmem:[#allocation5 + $0x7b0] sm:$0xff]
    %v557 = vld [vmem:[#allocation5 + $0x7b8] sm:$0xff]
    %v558 = vld [vmem:[#allocation5 + $0x7c0] sm:$0xff]
    %v559 = vld [vmem:[#allocation5 + $0x7c8] sm:$0xff]
    %v560 = vld [vmem:[#allocation5 + $0x7d0] sm:$0xff]
    %v561 = vld [vmem:[#allocation5 + $0x7d8] sm:$0xff]
    %v562 = vld [vmem:[#allocation5 + $0x7e0] sm:$0xff]
    %v563 = vld [vmem:[#allocation5 + $0x7e8] sm:$0xff]
    %v564 = vld [vmem:[#allocation5 + $0x7f0] sm:$0xff]
    %v565 = vld [vmem:[#allocation5 + $0x7f8] sm:$0xff]
    %v566 = vld [vmem:[#allocation5 + $0x800] sm:$0xff]
    %v567 = vld [vmem:[#allocation5 + $0x808] sm:$0xff]
    %v568 = vld [vmem:[#allocation5 + $0x810] sm:$0xff]
    %v569 = vld [vmem:[#allocation5 + $0x818] sm:$0xff]
    %v570 = vsub.f32 %v50, %v310
    %v571 = vsub.f32 %v51, %v311
    %v572 = vsub.f32 %v52, %v312
    %v573 = vsub.f32 %v53, %v313
    %v574 = vsub.f32 %v54, %v314
    %v575 = vsub.f32 %v55, %v315
    %v576 = vsub.f32 %v56, %v316
    %v577 = vsub.f32 %v57, %v317
    %v578 = vsub.f32 %v58, %v318
    %v579 = vsub.f32 %v59, %v319
    %v580 = vsub.f32 %v60, %v320
    %v581 = vsub.f32 %v61, %v321
    %v582 = vsub.f32 %v62, %v322
    %v583 = vsub.f32 %v63, %v323
    %v584 = vsub.f32 %v64, %v324
    %v585 = vsub.f32 %v65, %v325
    %v586 = vsub.f32 %v66, %v326
    %v587 = vsub.f32 %v67, %v327
    %v588 = vsub.f32 %v68, %v328
    %v589 = vsub.f32 %v69, %v329
    %v590 = vsub.f32 %v70, %v330
    %v591 = vsub.f32 %v71, %v331
    %v592 = vsub.f32 %v72, %v332
    %v593 = vsub.f32 %v73, %v333
    %v594 = vsub.f32 %v74, %v334
    %v595 = vsub.f32 %v75, %v335
    %v596 = vsub.f32 %v76, %v336
    %v597 = vsub.f32 %v77, %v337
    %v598 = vsub.f32 %v78, %v338
    %v599 = vsub.f32 %v79, %v339
    %v600 = vsub.f32 %v80, %v340
    %v601 = vsub.f32 %v81, %v341
    %v602 = vsub.f32 %v82, %v342
    %v603 = vsub.f32 %v83, %v343
    %v604 = vsub.f32 %v84, %v344
    %v605 = vsub.f32 %v85, %v345
    %v606 = vsub.f32 %v86, %v346
    %v607 = vsub.f32 %v87, %v347
    %v608 = vsub.f32 %v88, %v348
    %v609 = vsub.f32 %v89, %v349
    %v610 = vsub.f32 %v90, %v350
    %v611 = vsub.f32 %v91, %v351
    %v612 = vsub.f32 %v92, %v352
    %v613 = vsub.f32 %v93, %v353
    %v614 = vsub.f32 %v94, %v354
    %v615 = vsub.f32 %v95, %v355
    %v616 = vsub.f32 %v96, %v356
    %v617 = vsub.f32 %v97, %v357
    %v618 = vsub.f32 %v98, %v358
    %v619 = vsub.f32 %v99, %v359
    %v620 = vsub.f32 %v100, %v360
    %v621 = vsub.f32 %v101, %v361
    %v622 = vsub.f32 %v102, %v362
    %v623 = vsub.f32 %v103, %v363
    %v624 = vsub.f32 %v104, %v364
    %v625 = vsub.f32 %v105, %v365
    %v626 = vsub.f32 %v106, %v366
    %v627 = vsub.f32 %v107, %v367
    %v628 = vsub.f32 %v108, %v368
    %v629 = vsub.f32 %v109, %v369
    %v630 = vsub.f32 %v110, %v370
    %v631 = vsub.f32 %v111, %v371
    %v632 = vsub.f32 %v112, %v372
    %v633 = vsub.f32 %v113, %v373
    %v634 = vsub.f32 %v114, %v374
    %v635 = vsub.f32 %v115, %v375
    %v636 = vsub.f32 %v116, %v376
    %v637 = vsub.f32 %v117, %v377
    %v638 = vsub.f32 %v118, %v378
    %v639 = vsub.f32 %v119, %v379
    %v640 = vsub.f32 %v120, %v380
    %v641 = vsub.f32 %v121, %v381
    %v642 = vsub.f32 %v122, %v382
    %v643 = vsub.f32 %v123, %v383
    %v644 = vsub.f32 %v124, %v384
    %v645 = vsub.f32 %v125, %v385
    %v646 = vsub.f32 %v126, %v386
    %v647 = vsub.f32 %v127, %v387
    %v648 = vsub.f32 %v128, %v388
    %v649 = vsub.f32 %v129, %v389
    %v650 = vsub.f32 %v130, %v390
    %v651 = vsub.f32 %v131, %v391
    %v652 = vsub.f32 %v132, %v392
    %v653 = vsub.f32 %v133, %v393
    %v654 = vsub.f32 %v134, %v394
    %v655 = vsub.f32 %v135, %v395
    %v656 = vsub.f32 %v136, %v396
    %v657 = vsub.f32 %v137, %v397
    %v658 = vsub.f32 %v138, %v398
    %v659 = vsub.f32 %v139, %v399
    %v660 = vsub.f32 %v140, %v400
    %v661 = vsub.f32 %v141, %v401
    %v662 = vsub.f32 %v142, %v402
    %v663 = vsub.f32 %v143, %v403
    %v664 = vsub.f32 %v144, %v404
    %v665 = vsub.f32 %v145, %v405
    %v666 = vsub.f32 %v146, %v406
    %v667 = vsub.f32 %v147, %v407
    %v668 = vsub.f32 %v148, %v408
    %v669 = vsub.f32 %v149, %v409
    %v670 = vsub.f32 %v150, %v410
    %v671 = vsub.f32 %v151, %v411
    %v672 = vsub.f32 %v152, %v412
    %v673 = vsub.f32 %v153, %v413
    %v674 = vsub.f32 %v154, %v414
    %v675 = vsub.f32 %v155, %v415
    %v676 = vsub.f32 %v156, %v416
    %v677 = vsub.f32 %v157, %v417
    %v678 = vsub.f32 %v158, %v418
    %v679 = vsub.f32 %v159, %v419
    %v680 = vsub.f32 %v160, %v420
    %v681 = vsub.f32 %v161, %v421
    %v682 = vsub.f32 %v162, %v422
    %v683 = vsub.f32 %v163, %v423
    %v684 = vsub.f32 %v164, %v424
    %v685 = vsub.f32 %v165, %v425
    %v686 = vsub.f32 %v166, %v426
    %v687 = vsub.f32 %v167, %v427
    %v688 = vsub.f32 %v168, %v428
    %v689 = vsub.f32 %v169, %v429
    %v690 = vsub.f32 %v170, %v430
    %v691 = vsub.f32 %v171, %v431
    %v692 = vsub.f32 %v172, %v432
    %v693 = vsub.f32 %v173, %v433
    %v694 = vsub.f32 %v174, %v434
    %v695 = vsub.f32 %v175, %v435
    %v696 = vsub.f32 %v176, %v436
    %v697 = vsub.f32 %v177, %v437
    %v698 = vsub.f32 %v178, %v438
    %v699 = vsub.f32 %v179, %v439
    %v700 = vsub.f32 %v180, %v440
    %v701 = vsub.f32 %v181, %v441
    %v702 = vsub.f32 %v182, %v442
    %v703 = vsub.f32 %v183, %v443
    %v704 = vsub.f32 %v184, %v444
    %v705 = vsub.f32 %v185, %v445
    %v706 = vsub.f32 %v186, %v446
    %v707 = vsub.f32 %v187, %v447
    %v708 = vsub.f32 %v188, %v448
    %v709 = vsub.f32 %v189, %v449
    %v710 = vsub.f32 %v190, %v450
    %v711 = vsub.f32 %v191, %v451
    %v712 = vsub.f32 %v192, %v452
    %v713 = vsub.f32 %v193, %v453
    %v714 = vsub.f32 %v194, %v454
    %v715 = vsub.f32 %v195, %v455
    %v716 = vsub.f32 %v196, %v456
    %v717 = vsub.f32 %v197, %v457
    %v718 = vsub.f32 %v198, %v458
    %v719 = vsub.f32 %v199, %v459
    %v720 = vsub.f32 %v200, %v460
    %v721 = vsub.f32 %v201, %v461
    %v722 = vsub.f32 %v202, %v462
    %v723 = vsub.f32 %v203, %v463
    %v724 = vsub.f32 %v204, %v464
    %v725 = vsub.f32 %v205, %v465
    %v726 = vsub.f32 %v206, %v466
    %v727 = vsub.f32 %v207, %v467
    %v728 = vsub.f32 %v208, %v468
    %v729 = vsub.f32 %v209, %v469
    %v730 = vsub.f32 %v210, %v470
    %v731 = vsub.f32 %v211, %v471
    %v732 = vsub.f32 %v212, %v472
    %v733 = vsub.f32 %v213, %v473
    %v734 = vsub.f32 %v214, %v474
    %v735 = vsub.f32 %v215, %v475
    %v736 = vsub.f32 %v216, %v476
    %v737 = vsub.f32 %v217, %v477
    %v738 = vsub.f32 %v218, %v478
    %v739 = vsub.f32 %v219, %v479
    %v740 = vsub.f32 %v220, %v480
    %v741 = vsub.f32 %v221, %v481
    %v742 = vsub.f32 %v222, %v482
    %v743 = vsub.f32 %v223, %v483
    %v744 = vsub.f32 %v224, %v484
    %v745 = vsub.f32 %v225, %v485
    %v746 = vsub.f32 %v226, %v486
    %v747 = vsub.f32 %v227, %v487
    %v748 = vsub.f32 %v228, %v488
    %v749 = vsub.f32 %v229, %v489
    %v750 = vsub.f32 %v230, %v490
    %v751 = vsub.f32 %v231, %v491
    %v752 = vsub.f32 %v232, %v492
    %v753 = vsub.f32 %v233, %v493
    %v754 = vsub.f32 %v234, %v494
    %v755 = vsub.f32 %v235, %v495
    %v756 = vsub.f32 %v236, %v496
    %v757 = vsub.f32 %v237, %v497
    %v758 = vsub.f32 %v238, %v498
    %v759 = vsub.f32 %v239, %v499
    %v760 = vsub.f32 %v240, %v500
    %v761 = vsub.f32 %v241, %v501
    %v762 = vsub.f32 %v242, %v502
    %v763 = vsub.f32 %v243, %v503
    %v764 = vsub.f32 %v244, %v504
    %v765 = vsub.f32 %v245, %v505
    %v766 = vsub.f32 %v246, %v506
    %v767 = vsub.f32 %v247, %v507
    %v768 = vsub.f32 %v248, %v508
    %v769 = vsub.f32 %v249, %v509
    %v770 = vsub.f32 %v250, %v510
    %v771 = vsub.f32 %v251, %v511
    %v772 = vsub.f32 %v252, %v512
    %v773 = vsub.f32 %v253, %v513
    %v774 = vsub.f32 %v254, %v514
    %v775 = vsub.f32 %v255, %v515
    %v776 = vsub.f32 %v256, %v516
    %v777 = vsub.f32 %v257, %v517
    %v778 = vsub.f32 %v258, %v518
    %v779 = vsub.f32 %v259, %v519
    %v780 = vsub.f32 %v260, %v520
    %v781 = vsub.f32 %v261, %v521
    %v782 = vsub.f32 %v262, %v522
    %v783 = vsub.f32 %v263, %v523
    %v784 = vsub.f32 %v264, %v524
    %v785 = vsub.f32 %v265, %v525
    %v786 = vsub.f32 %v266, %v526
    %v787 = vsub.f32 %v267, %v527
    %v788 = vsub.f32 %v268, %v528
    %v789 = vsub.f32 %v269, %v529
    %v790 = vsub.f32 %v270, %v530
    %v791 = vsub.f32 %v271, %v531
    %v792 = vsub.f32 %v272, %v532
    %v793 = vsub.f32 %v273, %v533
    %v794 = vsub.f32 %v274, %v534
    %v795 = vsub.f32 %v275, %v535
    %v796 = vsub.f32 %v276, %v536
    %v797 = vsub.f32 %v277, %v537
    %v798 = vsub.f32 %v278, %v538
    %v799 = vsub.f32 %v279, %v539
    %v800 = vsub.f32 %v280, %v540
    %v801 = vsub.f32 %v281, %v541
    %v802 = vsub.f32 %v282, %v542
    %v803 = vsub.f32 %v283, %v543
    %v804 = vsub.f32 %v284, %v544
    %v805 = vsub.f32 %v285, %v545
    %v806 = vsub.f32 %v286, %v546
    %v807 = vsub.f32 %v287, %v547
    %v808 = vsub.f32 %v288, %v548
    %v809 = vsub.f32 %v289, %v549
    %v810 = vsub.f32 %v290, %v550
    %v811 = vsub.f32 %v291, %v551
    %v812 = vsub.f32 %v292, %v552
    %v813 = vsub.f32 %v293, %v553
    %v814 = vsub.f32 %v294, %v554
    %v815 = vsub.f32 %v295, %v555
    %v816 = vsub.f32 %v296, %v556
    %v817 = vsub.f32 %v297, %v557
    %v818 = vsub.f32 %v298, %v558
    %v819 = vsub.f32 %v299, %v559
    %v820 = vsub.f32 %v300, %v560
    %v821 = vsub.f32 %v301, %v561
    %v822 = vsub.f32 %v302, %v562
    %v823 = vsub.f32 %v303, %v563
    %v824 = vsub.f32 %v304, %v564
    %v825 = vsub.f32 %v305, %v565
    %v826 = vsub.f32 %v306, %v566
    %v827 = vsub.f32 %v307, %v567
    %v828 = vsub.f32 %v308, %v568
    %v829 = vsub.f32 %v309, %v569
    %v830 = vmul.f32 %v570, %v570
    %v831 = vmul.f32 %v571, %v571
    %v832 = vmul.f32 %v572, %v572
    %v833 = vmul.f32 %v573, %v573
    %v834 = vmul.f32 %v574, %v574
    %v835 = vmul.f32 %v575, %v575
    %v836 = vmul.f32 %v576, %v576
    %v837 = vmul.f32 %v577, %v577
    %v838 = vmul.f32 %v578, %v578
    %v839 = vmul.f32 %v579, %v579
    %v840 = vmul.f32 %v580, %v580
    %v841 = vmul.f32 %v581, %v581
    %v842 = vmul.f32 %v582, %v582
    %v843 = vmul.f32 %v583, %v583
    %v844 = vmul.f32 %v584, %v584
    %v845 = vmul.f32 %v585, %v585
    %v846 = vmul.f32 %v586, %v586
    %v847 = vmul.f32 %v587, %v587
    %v848 = vmul.f32 %v588, %v588
    %v849 = vmul.f32 %v589, %v589
    %v850 = vmul.f32 %v590, %v590
    %v851 = vmul.f32 %v591, %v591
    %v852 = vmul.f32 %v592, %v592
    %v853 = vmul.f32 %v593, %v593
    %v854 = vmul.f32 %v594, %v594
    %v855 = vmul.f32 %v595, %v595
    %v856 = vmul.f32 %v596, %v596
    %v857 = vmul.f32 %v597, %v597
    %v858 = vmul.f32 %v598, %v598
    %v859 = vmul.f32 %v599, %v599
    %v860 = vmul.f32 %v600, %v600
    %v861 = vmul.f32 %v601, %v601
    %v862 = vmul.f32 %v602, %v602
    %v863 = vmul.f32 %v603, %v603
    %v864 = vmul.f32 %v604, %v604
    %v865 = vmul.f32 %v605, %v605
    %v866 = vmul.f32 %v606, %v606
    %v867 = vmul.f32 %v607, %v607
    %v868 = vmul.f32 %v608, %v608
    %v869 = vmul.f32 %v609, %v609
    %v870 = vmul.f32 %v610, %v610
    %v871 = vmul.f32 %v611, %v611
    %v872 = vmul.f32 %v612, %v612
    %v873 = vmul.f32 %v613, %v613
    %v874 = vmul.f32 %v614, %v614
    %v875 = vmul.f32 %v615, %v615
    %v876 = vmul.f32 %v616, %v616
    %v877 = vmul.f32 %v617, %v617
    %v878 = vmul.f32 %v618, %v618
    %v879 = vmul.f32 %v619, %v619
    %v880 = vmul.f32 %v620, %v620
    %v881 = vmul.f32 %v621, %v621
    %v882 = vmul.f32 %v622, %v622
    %v883 = vmul.f32 %v623, %v623
    %v884 = vmul.f32 %v624, %v624
    %v885 = vmul.f32 %v625, %v625
    %v886 = vmul.f32 %v626, %v626
    %v887 = vmul.f32 %v627, %v627
    %v888 = vmul.f32 %v628, %v628
    %v889 = vmul.f32 %v629, %v629
    %v890 = vmul.f32 %v630, %v630
    %v891 = vmul.f32 %v631, %v631
    %v892 = vmul.f32 %v632, %v632
    %v893 = vmul.f32 %v633, %v633
    %v894 = vmul.f32 %v634, %v634
    %v895 = vmul.f32 %v635, %v635
    %v896 = vmul.f32 %v636, %v636
    %v897 = vmul.f32 %v637, %v637
    %v898 = vmul.f32 %v638, %v638
    %v899 = vmul.f32 %v639, %v639
    %v900 = vmul.f32 %v640, %v640
    %v901 = vmul.f32 %v641, %v641
    %v902 = vmul.f32 %v642, %v642
    %v903 = vmul.f32 %v643, %v643
    %v904 = vmul.f32 %v644, %v644
    %v905 = vmul.f32 %v645, %v645
    %v906 = vmul.f32 %v646, %v646
    %v907 = vmul.f32 %v647, %v647
    %v908 = vmul.f32 %v648, %v648
    %v909 = vmul.f32 %v649, %v649
    %v910 = vmul.f32 %v650, %v650
    %v911 = vmul.f32 %v651, %v651
    %v912 = vmul.f32 %v652, %v652
    %v913 = vmul.f32 %v653, %v653
    %v914 = vmul.f32 %v654, %v654
    %v915 = vmul.f32 %v655, %v655
    %v916 = vmul.f32 %v656, %v656
    %v917 = vmul.f32 %v657, %v657
    %v918 = vmul.f32 %v658, %v658
    %v919 = vmul.f32 %v659, %v659
    %v920 = vmul.f32 %v660, %v660
    %v921 = vmul.f32 %v661, %v661
    %v922 = vmul.f32 %v662, %v662
    %v923 = vmul.f32 %v663, %v663
    %v924 = vmul.f32 %v664, %v664
    %v925 = vmul.f32 %v665, %v665
    %v926 = vmul.f32 %v666, %v666
    %v927 = vmul.f32 %v667, %v667
    %v928 = vmul.f32 %v668, %v668
    %v929 = vmul.f32 %v669, %v669
    %v930 = vmul.f32 %v670, %v670
    %v931 = vmul.f32 %v671, %v671
    %v932 = vmul.f32 %v672, %v672
    %v933 = vmul.f32 %v673, %v673
    %v934 = vmul.f32 %v674, %v674
    %v935 = vmul.f32 %v675, %v675
    %v936 = vmul.f32 %v676, %v676
    %v937 = vmul.f32 %v677, %v677
    %v938 = vmul.f32 %v678, %v678
    %v939 = vmul.f32 %v679, %v679
    %v940 = vmul.f32 %v680, %v680
    %v941 = vmul.f32 %v681, %v681
    %v942 = vmul.f32 %v682, %v682
    %v943 = vmul.f32 %v683, %v683
    %v944 = vmul.f32 %v684, %v684
    %v945 = vmul.f32 %v685, %v685
    %v946 = vmul.f32 %v686, %v686
    %v947 = vmul.f32 %v687, %v687
    %v948 = vmul.f32 %v688, %v688
    %v949 = vmul.f32 %v689, %v689
    %v950 = vmul.f32 %v690, %v690
    %v951 = vmul.f32 %v691, %v691
    %v952 = vmul.f32 %v692, %v692
    %v953 = vmul.f32 %v693, %v693
    %v954 = vmul.f32 %v694, %v694
    %v955 = vmul.f32 %v695, %v695
    %v956 = vmul.f32 %v696, %v696
    %v957 = vmul.f32 %v697, %v697
    %v958 = vmul.f32 %v698, %v698
    %v959 = vmul.f32 %v699, %v699
    %v960 = vmul.f32 %v700, %v700
    %v961 = vmul.f32 %v701, %v701
    %v962 = vmul.f32 %v702, %v702
    %v963 = vmul.f32 %v703, %v703
    %v964 = vmul.f32 %v704, %v704
    %v965 = vmul.f32 %v705, %v705
    %v966 = vmul.f32 %v706, %v706
    %v967 = vmul.f32 %v707, %v707
    %v968 = vmul.f32 %v708, %v708
    %v969 = vmul.f32 %v709, %v709
    %v970 = vmul.f32 %v710, %v710
    %v971 = vmul.f32 %v711, %v711
    %v972 = vmul.f32 %v712, %v712
    %v973 = vmul.f32 %v713, %v713
    %v974 = vmul.f32 %v714, %v714
    %v975 = vmul.f32 %v715, %v715
    %v976 = vmul.f32 %v716, %v716
    %v977 = vmul.f32 %v717, %v717
    %v978 = vmul.f32 %v718, %v718
    %v979 = vmul.f32 %v719, %v719
    %v980 = vmul.f32 %v720, %v720
    %v981 = vmul.f32 %v721, %v721
    %v982 = vmul.f32 %v722, %v722
    %v983 = vmul.f32 %v723, %v723
    %v984 = vmul.f32 %v724, %v724
    %v985 = vmul.f32 %v725, %v725
    %v986 = vmul.f32 %v726, %v726
    %v987 = vmul.f32 %v727, %v727
    %v988 = vmul.f32 %v728, %v728
    %v989 = vmul.f32 %v729, %v729
    %v990 = vmul.f32 %v730, %v730
    %v991 = vmul.f32 %v731, %v731
    %v992 = vmul.f32 %v732, %v732
    %v993 = vmul.f32 %v733, %v733
    %v994 = vmul.f32 %v734, %v734
    %v995 = vmul.f32 %v735, %v735
    %v996 = vmul.f32 %v736, %v736
    %v997 = vmul.f32 %v737, %v737
    %v998 = vmul.f32 %v738, %v738
    %v999 = vmul.f32 %v739, %v739
    %v1000 = vmul.f32 %v740, %v740
    %v1001 = vmul.f32 %v741, %v741
    %v1002 = vmul.f32 %v742, %v742
    %v1003 = vmul.f32 %v743, %v743
    %v1004 = vmul.f32 %v744, %v744
    %v1005 = vmul.f32 %v745, %v745
    %v1006 = vmul.f32 %v746, %v746
    %v1007 = vmul.f32 %v747, %v747
    %v1008 = vmul.f32 %v748, %v748
    %v1009 = vmul.f32 %v749, %v749
    %v1010 = vmul.f32 %v750, %v750
    %v1011 = vmul.f32 %v751, %v751
    %v1012 = vmul.f32 %v752, %v752
    %v1013 = vmul.f32 %v753, %v753
    %v1014 = vmul.f32 %v754, %v754
    %v1015 = vmul.f32 %v755, %v755
    %v1016 = vmul.f32 %v756, %v756
    %v1017 = vmul.f32 %v757, %v757
    %v1018 = vmul.f32 %v758, %v758
    %v1019 = vmul.f32 %v759, %v759
    %v1020 = vmul.f32 %v760, %v760
    %v1021 = vmul.f32 %v761, %v761
    %v1022 = vmul.f32 %v762, %v762
    %v1023 = vmul.f32 %v763, %v763
    %v1024 = vmul.f32 %v764, %v764
    %v1025 = vmul.f32 %v765, %v765
    %v1026 = vmul.f32 %v766, %v766
    %v1027 = vmul.f32 %v767, %v767
    %v1028 = vmul.f32 %v768, %v768
    %v1029 = vmul.f32 %v769, %v769
    %v1030 = vmul.f32 %v770, %v770
    %v1031 = vmul.f32 %v771, %v771
    %v1032 = vmul.f32 %v772, %v772
    %v1033 = vmul.f32 %v773, %v773
    %v1034 = vmul.f32 %v774, %v774
    %v1035 = vmul.f32 %v775, %v775
    %v1036 = vmul.f32 %v776, %v776
    %v1037 = vmul.f32 %v777, %v777
    %v1038 = vmul.f32 %v778, %v778
    %v1039 = vmul.f32 %v779, %v779
    %v1040 = vmul.f32 %v780, %v780
    %v1041 = vmul.f32 %v781, %v781
    %v1042 = vmul.f32 %v782, %v782
    %v1043 = vmul.f32 %v783, %v783
    %v1044 = vmul.f32 %v784, %v784
    %v1045 = vmul.f32 %v785, %v785
    %v1046 = vmul.f32 %v786, %v786
    %v1047 = vmul.f32 %v787, %v787
    %v1048 = vmul.f32 %v788, %v788
    %v1049 = vmul.f32 %v789, %v789
    %v1050 = vmul.f32 %v790, %v790
    %v1051 = vmul.f32 %v791, %v791
    %v1052 = vmul.f32 %v792, %v792
    %v1053 = vmul.f32 %v793, %v793
    %v1054 = vmul.f32 %v794, %v794
    %v1055 = vmul.f32 %v795, %v795
    %v1056 = vmul.f32 %v796, %v796
    %v1057 = vmul.f32 %v797, %v797
    %v1058 = vmul.f32 %v798, %v798
    %v1059 = vmul.f32 %v799, %v799
    %v1060 = vmul.f32 %v800, %v800
    %v1061 = vmul.f32 %v801, %v801
    %v1062 = vmul.f32 %v802, %v802
    %v1063 = vmul.f32 %v803, %v803
    %v1064 = vmul.f32 %v804, %v804
    %v1065 = vmul.f32 %v805, %v805
    %v1066 = vmul.f32 %v806, %v806
    %v1067 = vmul.f32 %v807, %v807
    %v1068 = vmul.f32 %v808, %v808
    %v1069 = vmul.f32 %v809, %v809
    %v1070 = vmul.f32 %v810, %v810
    %v1071 = vmul.f32 %v811, %v811
    %v1072 = vmul.f32 %v812, %v812
    %v1073 = vmul.f32 %v813, %v813
    %v1074 = vmul.f32 %v814, %v814
    %v1075 = vmul.f32 %v815, %v815
    %v1076 = vmul.f32 %v816, %v816
    %v1077 = vmul.f32 %v817, %v817
    %v1078 = vmul.f32 %v818, %v818
    %v1079 = vmul.f32 %v819, %v819
    %v1080 = vmul.f32 %v820, %v820
    %v1081 = vmul.f32 %v821, %v821
    %v1082 = vmul.f32 %v822, %v822
    %v1083 = vmul.f32 %v823, %v823
    %v1084 = vmul.f32 %v824, %v824
    %v1085 = vmul.f32 %v825, %v825
    %v1086 = vmul.f32 %v826, %v826
    %v1087 = vmul.f32 %v827, %v827
    %v1088 = vmul.f32 %v828, %v828
    %v1089 = vmul.f32 %v829, %v829
    %s1090 = sadd.s32 %s49, 1
    %s1091 = smul.u32 %s1090, 2080
    %p1092 = scmp.le.s32.totalorder %s1091, 2080
    // Predicated region
    $region22: #{tpu_custom_call.1} parent=1 // pred_check
      %p1093 = pneg %p1092
    $region23: #{tpu_custom_call.1} parent=1 // pred_check_branch
      %1095 = sbr.rel (%p1093) target = $region25
    $region24: #{tpu_custom_call.1} parent=1 // pred_region
      %v1096 = vld [vmem:[#allocation7] sm:$0xff]
      %v1097 = vadd.f32 %v830, %v831
      %v1098 = vadd.f32 %v1097, %v832
      %v1099 = vadd.f32 %v1098, %v833
      %v1100 = vadd.f32 %v1099, %v834
      %v1101 = vadd.f32 %v1100, %v835
      %v1102 = vadd.f32 %v1101, %v836
      %v1103 = vadd.f32 %v1102, %v837
      %v1104 = vadd.f32 %v1103, %v838
      %v1105 = vadd.f32 %v1104, %v839
      %v1106 = vadd.f32 %v1105, %v840
      %v1107 = vadd.f32 %v1106, %v841
      %v1108 = vadd.f32 %v1107, %v842
      %v1109 = vadd.f32 %v1108, %v843
      %v1110 = vadd.f32 %v1109, %v844
      %v1111 = vadd.f32 %v1110, %v845
      %v1112 = vadd.f32 %v1111, %v846
      %v1113 = vadd.f32 %v1112, %v847
      %v1114 = vadd.f32 %v1113, %v848
      %v1115 = vadd.f32 %v1114, %v849
      %v1116 = vadd.f32 %v1115, %v850
      %v1117 = vadd.f32 %v1116, %v851
      %v1118 = vadd.f32 %v1117, %v852
      %v1119 = vadd.f32 %v1118, %v853
      %v1120 = vadd.f32 %v1119, %v854
      %v1121 = vadd.f32 %v1120, %v855
      %v1122 = vadd.f32 %v1121, %v856
      %v1123 = vadd.f32 %v1122, %v857
      %v1124 = vadd.f32 %v1123, %v858
      %v1125 = vadd.f32 %v1124, %v859
      %v1126 = vadd.f32 %v1125, %v860
      %v1127 = vadd.f32 %v1126, %v861
      %v1128 = vadd.f32 %v1127, %v862
      %v1129 = vadd.f32 %v1128, %v863
      %v1130 = vadd.f32 %v1129, %v864
      %v1131 = vadd.f32 %v1130, %v865
      %v1132 = vadd.f32 %v1131, %v866
      %v1133 = vadd.f32 %v1132, %v867
      %v1134 = vadd.f32 %v1133, %v868
      %v1135 = vadd.f32 %v1134, %v869
      %v1136 = vadd.f32 %v1135, %v870
      %v1137 = vadd.f32 %v1136, %v871
      %v1138 = vadd.f32 %v1137, %v872
      %v1139 = vadd.f32 %v1138, %v873
      %v1140 = vadd.f32 %v1139, %v874
      %v1141 = vadd.f32 %v1140, %v875
      %v1142 = vadd.f32 %v1141, %v876
      %v1143 = vadd.f32 %v1142, %v877
      %v1144 = vadd.f32 %v1143, %v878
      %v1145 = vadd.f32 %v1144, %v879
      %v1146 = vadd.f32 %v1145, %v880
      %v1147 = vadd.f32 %v1146, %v881
      %v1148 = vadd.f32 %v1147, %v882
      %v1149 = vadd.f32 %v1148, %v883
      %v1150 = vadd.f32 %v1149, %v884
      %v1151 = vadd.f32 %v1150, %v885
      %v1152 = vadd.f32 %v1151, %v886
      %v1153 = vadd.f32 %v1152, %v887
      %v1154 = vadd.f32 %v1153, %v888
      %v1155 = vadd.f32 %v1154, %v889
      %v1156 = vadd.f32 %v1155, %v890
      %v1157 = vadd.f32 %v1156, %v891
      %v1158 = vadd.f32 %v1157, %v892
      %v1159 = vadd.f32 %v1158, %v893
      %v1160 = vadd.f32 %v1159, %v894
      %v1161 = vadd.f32 %v1160, %v895
      %v1162 = vadd.f32 %v1161, %v896
      %v1163 = vadd.f32 %v1162, %v897
      %v1164 = vadd.f32 %v1163, %v898
      %v1165 = vadd.f32 %v1164, %v899
      %v1166 = vadd.f32 %v1165, %v900
      %v1167 = vadd.f32 %v1166, %v901
      %v1168 = vadd.f32 %v1167, %v902
      %v1169 = vadd.f32 %v1168, %v903
      %v1170 = vadd.f32 %v1169, %v904
      %v1171 = vadd.f32 %v1170, %v905
      %v1172 = vadd.f32 %v1171, %v906
      %v1173 = vadd.f32 %v1172, %v907
      %v1174 = vadd.f32 %v1173, %v908
      %v1175 = vadd.f32 %v1174, %v909
      %v1176 = vadd.f32 %v1175, %v910
      %v1177 = vadd.f32 %v1176, %v911
      %v1178 = vadd.f32 %v1177, %v912
      %v1179 = vadd.f32 %v1178, %v913
      %v1180 = vadd.f32 %v1179, %v914
      %v1181 = vadd.f32 %v1180, %v915
      %v1182 = vadd.f32 %v1181, %v916
      %v1183 = vadd.f32 %v1182, %v917
      %v1184 = vadd.f32 %v1183, %v918
      %v1185 = vadd.f32 %v1184, %v919
      %v1186 = vadd.f32 %v1185, %v920
      %v1187 = vadd.f32 %v1186, %v921
      %v1188 = vadd.f32 %v1187, %v922
      %v1189 = vadd.f32 %v1188, %v923
      %v1190 = vadd.f32 %v1189, %v924
      %v1191 = vadd.f32 %v1190, %v925
      %v1192 = vadd.f32 %v1191, %v926
      %v1193 = vadd.f32 %v1192, %v927
      %v1194 = vadd.f32 %v1193, %v928
      %v1195 = vadd.f32 %v1194, %v929
      %v1196 = vadd.f32 %v1195, %v930
      %v1197 = vadd.f32 %v1196, %v931
      %v1198 = vadd.f32 %v1197, %v932
      %v1199 = vadd.f32 %v1198, %v933
      %v1200 = vadd.f32 %v1199, %v934
      %v1201 = vadd.f32 %v1200, %v935
      %v1202 = vadd.f32 %v1201, %v936
      %v1203 = vadd.f32 %v1202, %v937
      %v1204 = vadd.f32 %v1203, %v938
      %v1205 = vadd.f32 %v1204, %v939
      %v1206 = vadd.f32 %v1205, %v940
      %v1207 = vadd.f32 %v1206, %v941
      %v1208 = vadd.f32 %v1207, %v942
      %v1209 = vadd.f32 %v1208, %v943
      %v1210 = vadd.f32 %v1209, %v944
      %v1211 = vadd.f32 %v1210, %v945
      %v1212 = vadd.f32 %v1211, %v946
      %v1213 = vadd.f32 %v1212, %v947
      %v1214 = vadd.f32 %v1213, %v948
      %v1215 = vadd.f32 %v1214, %v949
      %v1216 = vadd.f32 %v1215, %v950
      %v1217 = vadd.f32 %v1216, %v951
      %v1218 = vadd.f32 %v1217, %v952
      %v1219 = vadd.f32 %v1218, %v953
      %v1220 = vadd.f32 %v1219, %v954
      %v1221 = vadd.f32 %v1220, %v955
      %v1222 = vadd.f32 %v1221, %v956
      %v1223 = vadd.f32 %v1222, %v957
      %v1224 = vadd.f32 %v1223, %v958
      %v1225 = vadd.f32 %v1224, %v959
      %v1226 = vadd.f32 %v1225, %v960
      %v1227 = vadd.f32 %v1226, %v961
      %v1228 = vadd.f32 %v1227, %v962
      %v1229 = vadd.f32 %v1228, %v963
      %v1230 = vadd.f32 %v1229, %v964
      %v1231 = vadd.f32 %v1230, %v965
      %v1232 = vadd.f32 %v1231, %v966
      %v1233 = vadd.f32 %v1232, %v967
      %v1234 = vadd.f32 %v1233, %v968
      %v1235 = vadd.f32 %v1234, %v969
      %v1236 = vadd.f32 %v1235, %v970
      %v1237 = vadd.f32 %v1236, %v971
      %v1238 = vadd.f32 %v1237, %v972
      %v1239 = vadd.f32 %v1238, %v973
      %v1240 = vadd.f32 %v1239, %v974
      %v1241 = vadd.f32 %v1240, %v975
      %v1242 = vadd.f32 %v1241, %v976
      %v1243 = vadd.f32 %v1242, %v977
      %v1244 = vadd.f32 %v1243, %v978
      %v1245 = vadd.f32 %v1244, %v979
      %v1246 = vadd.f32 %v1245, %v980
      %v1247 = vadd.f32 %v1246, %v981
      %v1248 = vadd.f32 %v1247, %v982
      %v1249 = vadd.f32 %v1248, %v983
      %v1250 = vadd.f32 %v1249, %v984
      %v1251 = vadd.f32 %v1250, %v985
      %v1252 = vadd.f32 %v1251, %v986
      %v1253 = vadd.f32 %v1252, %v987
      %v1254 = vadd.f32 %v1253, %v988
      %v1255 = vadd.f32 %v1254, %v989
      %v1256 = vadd.f32 %v1255, %v990
      %v1257 = vadd.f32 %v1256, %v991
      %v1258 = vadd.f32 %v1257, %v992
      %v1259 = vadd.f32 %v1258, %v993
      %v1260 = vadd.f32 %v1259, %v994
      %v1261 = vadd.f32 %v1260, %v995
      %v1262 = vadd.f32 %v1261, %v996
      %v1263 = vadd.f32 %v1262, %v997
      %v1264 = vadd.f32 %v1263, %v998
      %v1265 = vadd.f32 %v1264, %v999
      %v1266 = vadd.f32 %v1265, %v1000
      %v1267 = vadd.f32 %v1266, %v1001
      %v1268 = vadd.f32 %v1267, %v1002
      %v1269 = vadd.f32 %v1268, %v1003
      %v1270 = vadd.f32 %v1269, %v1004
      %v1271 = vadd.f32 %v1270, %v1005
      %v1272 = vadd.f32 %v1271, %v1006
      %v1273 = vadd.f32 %v1272, %v1007
      %v1274 = vadd.f32 %v1273, %v1008
      %v1275 = vadd.f32 %v1274, %v1009
      %v1276 = vadd.f32 %v1275, %v1010
      %v1277 = vadd.f32 %v1276, %v1011
      %v1278 = vadd.f32 %v1277, %v1012
      %v1279 = vadd.f32 %v1278, %v1013
      %v1280 = vadd.f32 %v1279, %v1014
      %v1281 = vadd.f32 %v1280, %v1015
      %v1282 = vadd.f32 %v1281, %v1016
      %v1283 = vadd.f32 %v1282, %v1017
      %v1284 = vadd.f32 %v1283, %v1018
      %v1285 = vadd.f32 %v1284, %v1019
      %v1286 = vadd.f32 %v1285, %v1020
      %v1287 = vadd.f32 %v1286, %v1021
      %v1288 = vadd.f32 %v1287, %v1022
      %v1289 = vadd.f32 %v1288, %v1023
      %v1290 = vadd.f32 %v1289, %v1024
      %v1291 = vadd.f32 %v1290, %v1025
      %v1292 = vadd.f32 %v1291, %v1026
      %v1293 = vadd.f32 %v1292, %v1027
      %v1294 = vadd.f32 %v1293, %v1028
      %v1295 = vadd.f32 %v1294, %v1029
      %v1296 = vadd.f32 %v1295, %v1030
      %v1297 = vadd.f32 %v1296, %v1031
      %v1298 = vadd.f32 %v1297, %v1032
      %v1299 = vadd.f32 %v1298, %v1033
      %v1300 = vadd.f32 %v1299, %v1034
      %v1301 = vadd.f32 %v1300, %v1035
      %v1302 = vadd.f32 %v1301, %v1036
      %v1303 = vadd.f32 %v1302, %v1037
      %v1304 = vadd.f32 %v1303, %v1038
      %v1305 = vadd.f32 %v1304, %v1039
      %v1306 = vadd.f32 %v1305, %v1040
      %v1307 = vadd.f32 %v1306, %v1041
      %v1308 = vadd.f32 %v1307, %v1042
      %v1309 = vadd.f32 %v1308, %v1043
      %v1310 = vadd.f32 %v1309, %v1044
      %v1311 = vadd.f32 %v1310, %v1045
      %v1312 = vadd.f32 %v1311, %v1046
      %v1313 = vadd.f32 %v1312, %v1047
      %v1314 = vadd.f32 %v1313, %v1048
      %v1315 = vadd.f32 %v1314, %v1049
      %v1316 = vadd.f32 %v1315, %v1050
      %v1317 = vadd.f32 %v1316, %v1051
      %v1318 = vadd.f32 %v1317, %v1052
      %v1319 = vadd.f32 %v1318, %v1053
      %v1320 = vadd.f32 %v1319, %v1054
      %v1321 = vadd.f32 %v1320, %v1055
      %v1322 = vadd.f32 %v1321, %v1056
      %v1323 = vadd.f32 %v1322, %v1057
      %v1324 = vadd.f32 %v1323, %v1058
      %v1325 = vadd.f32 %v1324, %v1059
      %v1326 = vadd.f32 %v1325, %v1060
      %v1327 = vadd.f32 %v1326, %v1061
      %v1328 = vadd.f32 %v1327, %v1062
      %v1329 = vadd.f32 %v1328, %v1063
      %v1330 = vadd.f32 %v1329, %v1064
      %v1331 = vadd.f32 %v1330, %v1065
      %v1332 = vadd.f32 %v1331, %v1066
      %v1333 = vadd.f32 %v1332, %v1067
      %v1334 = vadd.f32 %v1333, %v1068
      %v1335 = vadd.f32 %v1334, %v1069
      %v1336 = vadd.f32 %v1335, %v1070
      %v1337 = vadd.f32 %v1336, %v1071
      %v1338 = vadd.f32 %v1337, %v1072
      %v1339 = vadd.f32 %v1338, %v1073
      %v1340 = vadd.f32 %v1339, %v1074
      %v1341 = vadd.f32 %v1340, %v1075
      %v1342 = vadd.f32 %v1341, %v1076
      %v1343 = vadd.f32 %v1342, %v1077
      %v1344 = vadd.f32 %v1343, %v1078
      %v1345 = vadd.f32 %v1344, %v1079
      %v1346 = vadd.f32 %v1345, %v1080
      %v1347 = vadd.f32 %v1346, %v1081
      %v1348 = vadd.f32 %v1347, %v1082
      %v1349 = vadd.f32 %v1348, %v1083
      %v1350 = vadd.f32 %v1349, %v1084
      %v1351 = vadd.f32 %v1350, %v1085
      %v1352 = vadd.f32 %v1351, %v1086
      %v1353 = vadd.f32 %v1352, %v1087
      %v1354 = vadd.f32 %v1353, %v1088
      %v1355 = vadd.f32 %v1354, %v1089
      %v1356 = vadd.f32 %v1096, %v1355
      %1357 = vst [vmem:[#allocation7] sm:$0xff] %v1356
    $region25: #{tpu_custom_call.1} parent=1 // pred_fallthru
      _
    %p1358 = scmp.gt.s32.totalorder %s1091, 2080
    // Predicated region
    $region26: #{tpu_custom_call.1} parent=1 // pred_check
      %p1359 = pneg %p1358
    $region27: #{tpu_custom_call.1} parent=1 // pred_check_branch
      %1361 = sbr.rel (%p1359) target = $region29
    $region28: #{tpu_custom_call.1} parent=1 // pred_region
      %v1362 = vld [vmem:[#allocation7] sm:$0xff]
      %s1363 = smul.u32 %s49, 2080
      %v1364 = vlaneseq
      %v1365 = vshrl.u32 %v1364, 7
      %v1366 = vadd.s32 %v1365, 8
      %v1367 = vadd.s32 %v1365, 16
      %v1368 = vadd.s32 %v1365, 24
      %v1369 = vadd.s32 %v1365, 32
      %v1370 = vadd.s32 %v1365, 40
      %v1371 = vadd.s32 %v1365, 48
      %v1372 = vadd.s32 %v1365, 56
      %v1373 = vadd.s32 %v1365, 64
      %v1374 = vadd.s32 %v1365, 72
      %v1375 = vadd.s32 %v1365, 80
      %v1376 = vadd.s32 %v1365, 88
      %v1377 = vadd.s32 %v1365, 96
      %v1378 = vadd.s32 %v1365, 104
      %v1379 = vadd.s32 %v1365, 112
      %v1380 = vadd.s32 %v1365, 120
      %v1381 = vadd.s32 %v1365, 128
      %v1382 = vadd.s32 %v1365, 136
      %v1383 = vadd.s32 %v1365, 144
      %v1384 = vadd.s32 %v1365, 152
      %v1385 = vadd.s32 %v1365, 160
      %v1386 = vadd.s32 %v1365, 168
      %v1387 = vadd.s32 %v1365, 176
      %v1388 = vadd.s32 %v1365, 184
      %v1389 = vadd.s32 %v1365, 192
      %v1390 = vadd.s32 %v1365, 200
      %v1391 = vadd.s32 %v1365, 208
      %v1392 = vadd.s32 %v1365, 216
      %v1393 = vadd.s32 %v1365, 224
      %v1394 = vadd.s32 %v1365, 232
      %v1395 = vadd.s32 %v1365, 240
      %v1396 = vadd.s32 %v1365, 248
      %v1397 = vadd.s32 %v1365, 256
      %v1398 = vadd.s32 %v1365, 264
      %v1399 = vadd.s32 %v1365, 272
      %v1400 = vadd.s32 %v1365, 280
      %v1401 = vadd.s32 %v1365, 288
      %v1402 = vadd.s32 %v1365, 296
      %v1403 = vadd.s32 %v1365, 304
      %v1404 = vadd.s32 %v1365, 312
      %v1405 = vadd.s32 %v1365, 320
      %v1406 = vadd.s32 %v1365, 328
      %v1407 = vadd.s32 %v1365, 336
      %v1408 = vadd.s32 %v1365, 344
      %v1409 = vadd.s32 %v1365, 352
      %v1410 = vadd.s32 %v1365, 360
      %v1411 = vadd.s32 %v1365, 368
      %v1412 = vadd.s32 %v1365, 376
      %v1413 = vadd.s32 %v1365, 384
      %v1414 = vadd.s32 %v1365, 392
      %v1415 = vadd.s32 %v1365, 400
      %v1416 = vadd.s32 %v1365, 408
      %v1417 = vadd.s32 %v1365, 416
      %v1418 = vadd.s32 %v1365, 424
      %v1419 = vadd.s32 %v1365, 432
      %v1420 = vadd.s32 %v1365, 440
      %v1421 = vadd.s32 %v1365, 448
      %v1422 = vadd.s32 %v1365, 456
      %v1423 = vadd.s32 %v1365, 464
      %v1424 = vadd.s32 %v1365, 472
      %v1425 = vadd.s32 %v1365, 480
      %v1426 = vadd.s32 %v1365, 488
      %v1427 = vadd.s32 %v1365, 496
      %v1428 = vadd.s32 %v1365, 504
      %v1429 = vadd.s32 %v1365, 512
      %v1430 = vadd.s32 %v1365, 520
      %v1431 = vadd.s32 %v1365, 528
      %v1432 = vadd.s32 %v1365, 536
      %v1433 = vadd.s32 %v1365, 544
      %v1434 = vadd.s32 %v1365, 552
      %v1435 = vadd.s32 %v1365, 560
      %v1436 = vadd.s32 %v1365, 568
      %v1437 = vadd.s32 %v1365, 576
      %v1438 = vadd.s32 %v1365, 584
      %v1439 = vadd.s32 %v1365, 592
      %v1440 = vadd.s32 %v1365, 600
      %v1441 = vadd.s32 %v1365, 608
      %v1442 = vadd.s32 %v1365, 616
      %v1443 = vadd.s32 %v1365, 624
      %v1444 = vadd.s32 %v1365, 632
      %v1445 = vadd.s32 %v1365, 640
      %v1446 = vadd.s32 %v1365, 648
      %v1447 = vadd.s32 %v1365, 656
      %v1448 = vadd.s32 %v1365, 664
      %v1449 = vadd.s32 %v1365, 672
      %v1450 = vadd.s32 %v1365, 680
      %v1451 = vadd.s32 %v1365, 688
      %v1452 = vadd.s32 %v1365, 696
      %v1453 = vadd.s32 %v1365, 704
      %v1454 = vadd.s32 %v1365, 712
      %v1455 = vadd.s32 %v1365, 720
      %v1456 = vadd.s32 %v1365, 728
      %v1457 = vadd.s32 %v1365, 736
      %v1458 = vadd.s32 %v1365, 744
      %v1459 = vadd.s32 %v1365, 752
      %v1460 = vadd.s32 %v1365, 760
      %v1461 = vadd.s32 %v1365, 768
      %v1462 = vadd.s32 %v1365, 776
      %v1463 = vadd.s32 %v1365, 784
      %v1464 = vadd.s32 %v1365, 792
      %v1465 = vadd.s32 %v1365, 800
      %v1466 = vadd.s32 %v1365, 808
      %v1467 = vadd.s32 %v1365, 816
      %v1468 = vadd.s32 %v1365, 824
      %v1469 = vadd.s32 %v1365, 832
      %v1470 = vadd.s32 %v1365, 840
      %v1471 = vadd.s32 %v1365, 848
      %v1472 = vadd.s32 %v1365, 856
      %v1473 = vadd.s32 %v1365, 864
      %v1474 = vadd.s32 %v1365, 872
      %v1475 = vadd.s32 %v1365, 880
      %v1476 = vadd.s32 %v1365, 888
      %v1477 = vadd.s32 %v1365, 896
      %v1478 = vadd.s32 %v1365, 904
      %v1479 = vadd.s32 %v1365, 912
      %v1480 = vadd.s32 %v1365, 920
      %v1481 = vadd.s32 %v1365, 928
      %v1482 = vadd.s32 %v1365, 936
      %v1483 = vadd.s32 %v1365, 944
      %v1484 = vadd.s32 %v1365, 952
      %v1485 = vadd.s32 %v1365, 960
      %v1486 = vadd.s32 %v1365, 968
      %v1487 = vadd.s32 %v1365, 976
      %v1488 = vadd.s32 %v1365, 984
      %v1489 = vadd.s32 %v1365, 992
      %v1490 = vadd.s32 %v1365, 1000
      %v1491 = vadd.s32 %v1365, 1008
      %v1492 = vadd.s32 %v1365, 1016
      %v1493 = vadd.s32 %v1365, 1024
      %v1494 = vadd.s32 %v1365, 1032
      %v1495 = vadd.s32 %v1365, 1040
      %v1496 = vadd.s32 %v1365, 1048
      %v1497 = vadd.s32 %v1365, 1056
      %v1498 = vadd.s32 %v1365, 1064
      %v1499 = vadd.s32 %v1365, 1072
      %v1500 = vadd.s32 %v1365, 1080
      %v1501 = vadd.s32 %v1365, 1088
      %v1502 = vadd.s32 %v1365, 1096
      %v1503 = vadd.s32 %v1365, 1104
      %v1504 = vadd.s32 %v1365, 1112
      %v1505 = vadd.s32 %v1365, 1120
      %v1506 = vadd.s32 %v1365, 1128
      %v1507 = vadd.s32 %v1365, 1136
      %v1508 = vadd.s32 %v1365, 1144
      %v1509 = vadd.s32 %v1365, 1152
      %v1510 = vadd.s32 %v1365, 1160
      %v1511 = vadd.s32 %v1365, 1168
      %v1512 = vadd.s32 %v1365, 1176
      %v1513 = vadd.s32 %v1365, 1184
      %v1514 = vadd.s32 %v1365, 1192
      %v1515 = vadd.s32 %v1365, 1200
      %v1516 = vadd.s32 %v1365, 1208
      %v1517 = vadd.s32 %v1365, 1216
      %v1518 = vadd.s32 %v1365, 1224
      %v1519 = vadd.s32 %v1365, 1232
      %v1520 = vadd.s32 %v1365, 1240
      %v1521 = vadd.s32 %v1365, 1248
      %v1522 = vadd.s32 %v1365, 1256
      %v1523 = vadd.s32 %v1365, 1264
      %v1524 = vadd.s32 %v1365, 1272
      %v1525 = vadd.s32 %v1365, 1280
      %v1526 = vadd.s32 %v1365, 1288
      %v1527 = vadd.s32 %v1365, 1296
      %v1528 = vadd.s32 %v1365, 1304
      %v1529 = vadd.s32 %v1365, 1312
      %v1530 = vadd.s32 %v1365, 1320
      %v1531 = vadd.s32 %v1365, 1328
      %v1532 = vadd.s32 %v1365, 1336
      %v1533 = vadd.s32 %v1365, 1344
      %v1534 = vadd.s32 %v1365, 1352
      %v1535 = vadd.s32 %v1365, 1360
      %v1536 = vadd.s32 %v1365, 1368
      %v1537 = vadd.s32 %v1365, 1376
      %v1538 = vadd.s32 %v1365, 1384
      %v1539 = vadd.s32 %v1365, 1392
      %v1540 = vadd.s32 %v1365, 1400
      %v1541 = vadd.s32 %v1365, 1408
      %v1542 = vadd.s32 %v1365, 1416
      %v1543 = vadd.s32 %v1365, 1424
      %v1544 = vadd.s32 %v1365, 1432
      %v1545 = vadd.s32 %v1365, 1440
      %v1546 = vadd.s32 %v1365, 1448
      %v1547 = vadd.s32 %v1365, 1456
      %v1548 = vadd.s32 %v1365, 1464
      %v1549 = vadd.s32 %v1365, 1472
      %v1550 = vadd.s32 %v1365, 1480
      %v1551 = vadd.s32 %v1365, 1488
      %v1552 = vadd.s32 %v1365, 1496
      %v1553 = vadd.s32 %v1365, 1504
      %v1554 = vadd.s32 %v1365, 1512
      %v1555 = vadd.s32 %v1365, 1520
      %v1556 = vadd.s32 %v1365, 1528
      %v1557 = vadd.s32 %v1365, 1536
      %v1558 = vadd.s32 %v1365, 1544
      %v1559 = vadd.s32 %v1365, 1552
      %v1560 = vadd.s32 %v1365, 1560
      %v1561 = vadd.s32 %v1365, 1568
      %v1562 = vadd.s32 %v1365, 1576
      %v1563 = vadd.s32 %v1365, 1584
      %v1564 = vadd.s32 %v1365, 1592
      %v1565 = vadd.s32 %v1365, 1600
      %v1566 = vadd.s32 %v1365, 1608
      %v1567 = vadd.s32 %v1365, 1616
      %v1568 = vadd.s32 %v1365, 1624
      %v1569 = vadd.s32 %v1365, 1632
      %v1570 = vadd.s32 %v1365, 1640
      %v1571 = vadd.s32 %v1365, 1648
      %v1572 = vadd.s32 %v1365, 1656
      %v1573 = vadd.s32 %v1365, 1664
      %v1574 = vadd.s32 %v1365, 1672
      %v1575 = vadd.s32 %v1365, 1680
      %v1576 = vadd.s32 %v1365, 1688
      %v1577 = vadd.s32 %v1365, 1696
      %v1578 = vadd.s32 %v1365, 1704
      %v1579 = vadd.s32 %v1365, 1712
      %v1580 = vadd.s32 %v1365, 1720
      %v1581 = vadd.s32 %v1365, 1728
      %v1582 = vadd.s32 %v1365, 1736
      %v1583 = vadd.s32 %v1365, 1744
      %v1584 = vadd.s32 %v1365, 1752
      %v1585 = vadd.s32 %v1365, 1760
      %v1586 = vadd.s32 %v1365, 1768
      %v1587 = vadd.s32 %v1365, 1776
      %v1588 = vadd.s32 %v1365, 1784
      %v1589 = vadd.s32 %v1365, 1792
      %v1590 = vadd.s32 %v1365, 1800
      %v1591 = vadd.s32 %v1365, 1808
      %v1592 = vadd.s32 %v1365, 1816
      %v1593 = vadd.s32 %v1365, 1824
      %v1594 = vadd.s32 %v1365, 1832
      %v1595 = vadd.s32 %v1365, 1840
      %v1596 = vadd.s32 %v1365, 1848
      %v1597 = vadd.s32 %v1365, 1856
      %v1598 = vadd.s32 %v1365, 1864
      %v1599 = vadd.s32 %v1365, 1872
      %v1600 = vadd.s32 %v1365, 1880
      %v1601 = vadd.s32 %v1365, 1888
      %v1602 = vadd.s32 %v1365, 1896
      %v1603 = vadd.s32 %v1365, 1904
      %v1604 = vadd.s32 %v1365, 1912
      %v1605 = vadd.s32 %v1365, 1920
      %v1606 = vadd.s32 %v1365, 1928
      %v1607 = vadd.s32 %v1365, 1936
      %v1608 = vadd.s32 %v1365, 1944
      %v1609 = vadd.s32 %v1365, 1952
      %v1610 = vadd.s32 %v1365, 1960
      %v1611 = vadd.s32 %v1365, 1968
      %v1612 = vadd.s32 %v1365, 1976
      %v1613 = vadd.s32 %v1365, 1984
      %v1614 = vadd.s32 %v1365, 1992
      %v1615 = vadd.s32 %v1365, 2000
      %v1616 = vadd.s32 %v1365, 2008
      %v1617 = vadd.s32 %v1365, 2016
      %v1618 = vadd.s32 %v1365, 2024
      %v1619 = vadd.s32 %v1365, 2032
      %v1620 = vadd.s32 %v1365, 2040
      %v1621 = vadd.s32 %v1365, 2048
      %v1622 = vadd.s32 %v1365, 2056
      %v1623 = vadd.s32 %v1365, 2064
      %v1624 = vadd.s32 %v1365, 2072
      %v1625 = vstv %s1363
      %v1626 = vadd.s32 %v1625, %v1365
      %v1627 = vadd.s32 %v1625, %v1366
      %v1628 = vadd.s32 %v1625, %v1367
      %v1629 = vadd.s32 %v1625, %v1368
      %v1630 = vadd.s32 %v1625, %v1369
      %v1631 = vadd.s32 %v1625, %v1370
      %v1632 = vadd.s32 %v1625, %v1371
      %v1633 = vadd.s32 %v1625, %v1372
      %v1634 = vadd.s32 %v1625, %v1373
      %v1635 = vadd.s32 %v1625, %v1374
      %v1636 = vadd.s32 %v1625, %v1375
      %v1637 = vadd.s32 %v1625, %v1376
      %v1638 = vadd.s32 %v1625, %v1377
      %v1639 = vadd.s32 %v1625, %v1378
      %v1640 = vadd.s32 %v1625, %v1379
      %v1641 = vadd.s32 %v1625, %v1380
      %v1642 = vadd.s32 %v1625, %v1381
      %v1643 = vadd.s32 %v1625, %v1382
      %v1644 = vadd.s32 %v1625, %v1383
      %v1645 = vadd.s32 %v1625, %v1384
      %v1646 = vadd.s32 %v1625, %v1385
      %v1647 = vadd.s32 %v1625, %v1386
      %v1648 = vadd.s32 %v1625, %v1387
      %v1649 = vadd.s32 %v1625, %v1388
      %v1650 = vadd.s32 %v1625, %v1389
      %v1651 = vadd.s32 %v1625, %v1390
      %v1652 = vadd.s32 %v1625, %v1391
      %v1653 = vadd.s32 %v1625, %v1392
      %v1654 = vadd.s32 %v1625, %v1393
      %v1655 = vadd.s32 %v1625, %v1394
      %v1656 = vadd.s32 %v1625, %v1395
      %v1657 = vadd.s32 %v1625, %v1396
      %v1658 = vadd.s32 %v1625, %v1397
      %v1659 = vadd.s32 %v1625, %v1398
      %v1660 = vadd.s32 %v1625, %v1399
      %v1661 = vadd.s32 %v1625, %v1400
      %v1662 = vadd.s32 %v1625, %v1401
      %v1663 = vadd.s32 %v1625, %v1402
      %v1664 = vadd.s32 %v1625, %v1403
      %v1665 = vadd.s32 %v1625, %v1404
      %v1666 = vadd.s32 %v1625, %v1405
      %v1667 = vadd.s32 %v1625, %v1406
      %v1668 = vadd.s32 %v1625, %v1407
      %v1669 = vadd.s32 %v1625, %v1408
      %v1670 = vadd.s32 %v1625, %v1409
      %v1671 = vadd.s32 %v1625, %v1410
      %v1672 = vadd.s32 %v1625, %v1411
      %v1673 = vadd.s32 %v1625, %v1412
      %v1674 = vadd.s32 %v1625, %v1413
      %v1675 = vadd.s32 %v1625, %v1414
      %v1676 = vadd.s32 %v1625, %v1415
      %v1677 = vadd.s32 %v1625, %v1416
      %v1678 = vadd.s32 %v1625, %v1417
      %v1679 = vadd.s32 %v1625, %v1418
      %v1680 = vadd.s32 %v1625, %v1419
      %v1681 = vadd.s32 %v1625, %v1420
      %v1682 = vadd.s32 %v1625, %v1421
      %v1683 = vadd.s32 %v1625, %v1422
      %v1684 = vadd.s32 %v1625, %v1423
      %v1685 = vadd.s32 %v1625, %v1424
      %v1686 = vadd.s32 %v1625, %v1425
      %v1687 = vadd.s32 %v1625, %v1426
      %v1688 = vadd.s32 %v1625, %v1427
      %v1689 = vadd.s32 %v1625, %v1428
      %v1690 = vadd.s32 %v1625, %v1429
      %v1691 = vadd.s32 %v1625, %v1430
      %v1692 = vadd.s32 %v1625, %v1431
      %v1693 = vadd.s32 %v1625, %v1432
      %v1694 = vadd.s32 %v1625, %v1433
      %v1695 = vadd.s32 %v1625, %v1434
      %v1696 = vadd.s32 %v1625, %v1435
      %v1697 = vadd.s32 %v1625, %v1436
      %v1698 = vadd.s32 %v1625, %v1437
      %v1699 = vadd.s32 %v1625, %v1438
      %v1700 = vadd.s32 %v1625, %v1439
      %v1701 = vadd.s32 %v1625, %v1440
      %v1702 = vadd.s32 %v1625, %v1441
      %v1703 = vadd.s32 %v1625, %v1442
      %v1704 = vadd.s32 %v1625, %v1443
      %v1705 = vadd.s32 %v1625, %v1444
      %v1706 = vadd.s32 %v1625, %v1445
      %v1707 = vadd.s32 %v1625, %v1446
      %v1708 = vadd.s32 %v1625, %v1447
      %v1709 = vadd.s32 %v1625, %v1448
      %v1710 = vadd.s32 %v1625, %v1449
      %v1711 = vadd.s32 %v1625, %v1450
      %v1712 = vadd.s32 %v1625, %v1451
      %v1713 = vadd.s32 %v1625, %v1452
      %v1714 = vadd.s32 %v1625, %v1453
      %v1715 = vadd.s32 %v1625, %v1454
      %v1716 = vadd.s32 %v1625, %v1455
      %v1717 = vadd.s32 %v1625, %v1456
      %v1718 = vadd.s32 %v1625, %v1457
      %v1719 = vadd.s32 %v1625, %v1458
      %v1720 = vadd.s32 %v1625, %v1459
      %v1721 = vadd.s32 %v1625, %v1460
      %v1722 = vadd.s32 %v1625, %v1461
      %v1723 = vadd.s32 %v1625, %v1462
      %v1724 = vadd.s32 %v1625, %v1463
      %v1725 = vadd.s32 %v1625, %v1464
      %v1726 = vadd.s32 %v1625, %v1465
      %v1727 = vadd.s32 %v1625, %v1466
      %v1728 = vadd.s32 %v1625, %v1467
      %v1729 = vadd.s32 %v1625, %v1468
      %v1730 = vadd.s32 %v1625, %v1469
      %v1731 = vadd.s32 %v1625, %v1470
      %v1732 = vadd.s32 %v1625, %v1471
      %v1733 = vadd.s32 %v1625, %v1472
      %v1734 = vadd.s32 %v1625, %v1473
      %v1735 = vadd.s32 %v1625, %v1474
      %v1736 = vadd.s32 %v1625, %v1475
      %v1737 = vadd.s32 %v1625, %v1476
      %v1738 = vadd.s32 %v1625, %v1477
      %v1739 = vadd.s32 %v1625, %v1478
      %v1740 = vadd.s32 %v1625, %v1479
      %v1741 = vadd.s32 %v1625, %v1480
      %v1742 = vadd.s32 %v1625, %v1481
      %v1743 = vadd.s32 %v1625, %v1482
      %v1744 = vadd.s32 %v1625, %v1483
      %v1745 = vadd.s32 %v1625, %v1484
      %v1746 = vadd.s32 %v1625, %v1485
      %v1747 = vadd.s32 %v1625, %v1486
      %v1748 = vadd.s32 %v1625, %v1487
      %v1749 = vadd.s32 %v1625, %v1488
      %v1750 = vadd.s32 %v1625, %v1489
      %v1751 = vadd.s32 %v1625, %v1490
      %v1752 = vadd.s32 %v1625, %v1491
      %v1753 = vadd.s32 %v1625, %v1492
      %v1754 = vadd.s32 %v1625, %v1493
      %v1755 = vadd.s32 %v1625, %v1494
      %v1756 = vadd.s32 %v1625, %v1495
      %v1757 = vadd.s32 %v1625, %v1496
      %v1758 = vadd.s32 %v1625, %v1497
      %v1759 = vadd.s32 %v1625, %v1498
      %v1760 = vadd.s32 %v1625, %v1499
      %v1761 = vadd.s32 %v1625, %v1500
      %v1762 = vadd.s32 %v1625, %v1501
      %v1763 = vadd.s32 %v1625, %v1502
      %v1764 = vadd.s32 %v1625, %v1503
      %v1765 = vadd.s32 %v1625, %v1504
      %v1766 = vadd.s32 %v1625, %v1505
      %v1767 = vadd.s32 %v1625, %v1506
      %v1768 = vadd.s32 %v1625, %v1507
      %v1769 = vadd.s32 %v1625, %v1508
      %v1770 = vadd.s32 %v1625, %v1509
      %v1771 = vadd.s32 %v1625, %v1510
      %v1772 = vadd.s32 %v1625, %v1511
      %v1773 = vadd.s32 %v1625, %v1512
      %v1774 = vadd.s32 %v1625, %v1513
      %v1775 = vadd.s32 %v1625, %v1514
      %v1776 = vadd.s32 %v1625, %v1515
      %v1777 = vadd.s32 %v1625, %v1516
      %v1778 = vadd.s32 %v1625, %v1517
      %v1779 = vadd.s32 %v1625, %v1518
      %v1780 = vadd.s32 %v1625, %v1519
      %v1781 = vadd.s32 %v1625, %v1520
      %v1782 = vadd.s32 %v1625, %v1521
      %v1783 = vadd.s32 %v1625, %v1522
      %v1784 = vadd.s32 %v1625, %v1523
      %v1785 = vadd.s32 %v1625, %v1524
      %v1786 = vadd.s32 %v1625, %v1525
      %v1787 = vadd.s32 %v1625, %v1526
      %v1788 = vadd.s32 %v1625, %v1527
      %v1789 = vadd.s32 %v1625, %v1528
      %v1790 = vadd.s32 %v1625, %v1529
      %v1791 = vadd.s32 %v1625, %v1530
      %v1792 = vadd.s32 %v1625, %v1531
      %v1793 = vadd.s32 %v1625, %v1532
      %v1794 = vadd.s32 %v1625, %v1533
      %v1795 = vadd.s32 %v1625, %v1534
      %v1796 = vadd.s32 %v1625, %v1535
      %v1797 = vadd.s32 %v1625, %v1536
      %v1798 = vadd.s32 %v1625, %v1537
      %v1799 = vadd.s32 %v1625, %v1538
      %v1800 = vadd.s32 %v1625, %v1539
      %v1801 = vadd.s32 %v1625, %v1540
      %v1802 = vadd.s32 %v1625, %v1541
      %v1803 = vadd.s32 %v1625, %v1542
      %v1804 = vadd.s32 %v1625, %v1543
      %v1805 = vadd.s32 %v1625, %v1544
      %v1806 = vadd.s32 %v1625, %v1545
      %v1807 = vadd.s32 %v1625, %v1546
      %v1808 = vadd.s32 %v1625, %v1547
      %v1809 = vadd.s32 %v1625, %v1548
      %v1810 = vadd.s32 %v1625, %v1549
      %v1811 = vadd.s32 %v1625, %v1550
      %v1812 = vadd.s32 %v1625, %v1551
      %v1813 = vadd.s32 %v1625, %v1552
      %v1814 = vadd.s32 %v1625, %v1553
      %v1815 = vadd.s32 %v1625, %v1554
      %v1816 = vadd.s32 %v1625, %v1555
      %v1817 = vadd.s32 %v1625, %v1556
      %v1818 = vadd.s32 %v1625, %v1557
      %v1819 = vadd.s32 %v1625, %v1558
      %v1820 = vadd.s32 %v1625, %v1559
      %v1821 = vadd.s32 %v1625, %v1560
      %v1822 = vadd.s32 %v1625, %v1561
      %v1823 = vadd.s32 %v1625, %v1562
      %v1824 = vadd.s32 %v1625, %v1563
      %v1825 = vadd.s32 %v1625, %v1564
      %v1826 = vadd.s32 %v1625, %v1565
      %v1827 = vadd.s32 %v1625, %v1566
      %v1828 = vadd.s32 %v1625, %v1567
      %v1829 = vadd.s32 %v1625, %v1568
      %v1830 = vadd.s32 %v1625, %v1569
      %v1831 = vadd.s32 %v1625, %v1570
      %v1832 = vadd.s32 %v1625, %v1571
      %v1833 = vadd.s32 %v1625, %v1572
      %v1834 = vadd.s32 %v1625, %v1573
      %v1835 = vadd.s32 %v1625, %v1574
      %v1836 = vadd.s32 %v1625, %v1575
      %v1837 = vadd.s32 %v1625, %v1576
      %v1838 = vadd.s32 %v1625, %v1577
      %v1839 = vadd.s32 %v1625, %v1578
      %v1840 = vadd.s32 %v1625, %v1579
      %v1841 = vadd.s32 %v1625, %v1580
      %v1842 = vadd.s32 %v1625, %v1581
      %v1843 = vadd.s32 %v1625, %v1582
      %v1844 = vadd.s32 %v1625, %v1583
      %v1845 = vadd.s32 %v1625, %v1584
      %v1846 = vadd.s32 %v1625, %v1585
      %v1847 = vadd.s32 %v1625, %v1586
      %v1848 = vadd.s32 %v1625, %v1587
      %v1849 = vadd.s32 %v1625, %v1588
      %v1850 = vadd.s32 %v1625, %v1589
      %v1851 = vadd.s32 %v1625, %v1590
      %v1852 = vadd.s32 %v1625, %v1591
      %v1853 = vadd.s32 %v1625, %v1592
      %v1854 = vadd.s32 %v1625, %v1593
      %v1855 = vadd.s32 %v1625, %v1594
      %v1856 = vadd.s32 %v1625, %v1595
      %v1857 = vadd.s32 %v1625, %v1596
      %v1858 = vadd.s32 %v1625, %v1597
      %v1859 = vadd.s32 %v1625, %v1598
      %v1860 = vadd.s32 %v1625, %v1599
      %v1861 = vadd.s32 %v1625, %v1600
      %v1862 = vadd.s32 %v1625, %v1601
      %v1863 = vadd.s32 %v1625, %v1602
      %v1864 = vadd.s32 %v1625, %v1603
      %v1865 = vadd.s32 %v1625, %v1604
      %v1866 = vadd.s32 %v1625, %v1605
      %v1867 = vadd.s32 %v1625, %v1606
      %v1868 = vadd.s32 %v1625, %v1607
      %v1869 = vadd.s32 %v1625, %v1608
      %v1870 = vadd.s32 %v1625, %v1609
      %v1871 = vadd.s32 %v1625, %v1610
      %v1872 = vadd.s32 %v1625, %v1611
      %v1873 = vadd.s32 %v1625, %v1612
      %v1874 = vadd.s32 %v1625, %v1613
      %v1875 = vadd.s32 %v1625, %v1614
      %v1876 = vadd.s32 %v1625, %v1615
      %v1877 = vadd.s32 %v1625, %v1616
      %v1878 = vadd.s32 %v1625, %v1617
      %v1879 = vadd.s32 %v1625, %v1618
      %v1880 = vadd.s32 %v1625, %v1619
      %v1881 = vadd.s32 %v1625, %v1620
      %v1882 = vadd.s32 %v1625, %v1621
      %v1883 = vadd.s32 %v1625, %v1622
      %v1884 = vadd.s32 %v1625, %v1623
      %v1885 = vadd.s32 %v1625, %v1624
      %v1886 = vlaneseq
      %v1887 = vand.u32 %v1886, 127
      %vm1888 = vcmp.lt.s32.totalorder %v1626, 2080
      %vm1889 = vcmp.lt.s32.totalorder %v1627, 2080
      %vm1890 = vcmp.lt.s32.totalorder %v1628, 2080
      %vm1891 = vcmp.lt.s32.totalorder %v1629, 2080
      %vm1892 = vcmp.lt.s32.totalorder %v1630, 2080
      %vm1893 = vcmp.lt.s32.totalorder %v1631, 2080
      %vm1894 = vcmp.lt.s32.totalorder %v1632, 2080
      %vm1895 = vcmp.lt.s32.totalorder %v1633, 2080
      %vm1896 = vcmp.lt.s32.totalorder %v1634, 2080
      %vm1897 = vcmp.lt.s32.totalorder %v1635, 2080
      %vm1898 = vcmp.lt.s32.totalorder %v1636, 2080
      %vm1899 = vcmp.lt.s32.totalorder %v1637, 2080
      %vm1900 = vcmp.lt.s32.totalorder %v1638, 2080
      %vm1901 = vcmp.lt.s32.totalorder %v1639, 2080
      %vm1902 = vcmp.lt.s32.totalorder %v1640, 2080
      %vm1903 = vcmp.lt.s32.totalorder %v1641, 2080
      %vm1904 = vcmp.lt.s32.totalorder %v1642, 2080
      %vm1905 = vcmp.lt.s32.totalorder %v1643, 2080
      %vm1906 = vcmp.lt.s32.totalorder %v1644, 2080
      %vm1907 = vcmp.lt.s32.totalorder %v1645, 2080
      %vm1908 = vcmp.lt.s32.totalorder %v1646, 2080
      %vm1909 = vcmp.lt.s32.totalorder %v1647, 2080
      %vm1910 = vcmp.lt.s32.totalorder %v1648, 2080
      %vm1911 = vcmp.lt.s32.totalorder %v1649, 2080
      %vm1912 = vcmp.lt.s32.totalorder %v1650, 2080
      %vm1913 = vcmp.lt.s32.totalorder %v1651, 2080
      %vm1914 = vcmp.lt.s32.totalorder %v1652, 2080
      %vm1915 = vcmp.lt.s32.totalorder %v1653, 2080
      %vm1916 = vcmp.lt.s32.totalorder %v1654, 2080
      %vm1917 = vcmp.lt.s32.totalorder %v1655, 2080
      %vm1918 = vcmp.lt.s32.totalorder %v1656, 2080
      %vm1919 = vcmp.lt.s32.totalorder %v1657, 2080
      %vm1920 = vcmp.lt.s32.totalorder %v1658, 2080
      %vm1921 = vcmp.lt.s32.totalorder %v1659, 2080
      %vm1922 = vcmp.lt.s32.totalorder %v1660, 2080
      %vm1923 = vcmp.lt.s32.totalorder %v1661, 2080
      %vm1924 = vcmp.lt.s32.totalorder %v1662, 2080
      %vm1925 = vcmp.lt.s32.totalorder %v1663, 2080
      %vm1926 = vcmp.lt.s32.totalorder %v1664, 2080
      %vm1927 = vcmp.lt.s32.totalorder %v1665, 2080
      %vm1928 = vcmp.lt.s32.totalorder %v1666, 2080
      %vm1929 = vcmp.lt.s32.totalorder %v1667, 2080
      %vm1930 = vcmp.lt.s32.totalorder %v1668, 2080
      %vm1931 = vcmp.lt.s32.totalorder %v1669, 2080
      %vm1932 = vcmp.lt.s32.totalorder %v1670, 2080
      %vm1933 = vcmp.lt.s32.totalorder %v1671, 2080
      %vm1934 = vcmp.lt.s32.totalorder %v1672, 2080
      %vm1935 = vcmp.lt.s32.totalorder %v1673, 2080
      %vm1936 = vcmp.lt.s32.totalorder %v1674, 2080
      %vm1937 = vcmp.lt.s32.totalorder %v1675, 2080
      %vm1938 = vcmp.lt.s32.totalorder %v1676, 2080
      %vm1939 = vcmp.lt.s32.totalorder %v1677, 2080
      %vm1940 = vcmp.lt.s32.totalorder %v1678, 2080
      %vm1941 = vcmp.lt.s32.totalorder %v1679, 2080
      %vm1942 = vcmp.lt.s32.totalorder %v1680, 2080
      %vm1943 = vcmp.lt.s32.totalorder %v1681, 2080
      %vm1944 = vcmp.lt.s32.totalorder %v1682, 2080
      %vm1945 = vcmp.lt.s32.totalorder %v1683, 2080
      %vm1946 = vcmp.lt.s32.totalorder %v1684, 2080
      %vm1947 = vcmp.lt.s32.totalorder %v1685, 2080
      %vm1948 = vcmp.lt.s32.totalorder %v1686, 2080
      %vm1949 = vcmp.lt.s32.totalorder %v1687, 2080
      %vm1950 = vcmp.lt.s32.totalorder %v1688, 2080
      %vm1951 = vcmp.lt.s32.totalorder %v1689, 2080
      %vm1952 = vcmp.lt.s32.totalorder %v1690, 2080
      %vm1953 = vcmp.lt.s32.totalorder %v1691, 2080
      %vm1954 = vcmp.lt.s32.totalorder %v1692, 2080
      %vm1955 = vcmp.lt.s32.totalorder %v1693, 2080
      %vm1956 = vcmp.lt.s32.totalorder %v1694, 2080
      %vm1957 = vcmp.lt.s32.totalorder %v1695, 2080
      %vm1958 = vcmp.lt.s32.totalorder %v1696, 2080
      %vm1959 = vcmp.lt.s32.totalorder %v1697, 2080
      %vm1960 = vcmp.lt.s32.totalorder %v1698, 2080
      %vm1961 = vcmp.lt.s32.totalorder %v1699, 2080
      %vm1962 = vcmp.lt.s32.totalorder %v1700, 2080
      %vm1963 = vcmp.lt.s32.totalorder %v1701, 2080
      %vm1964 = vcmp.lt.s32.totalorder %v1702, 2080
      %vm1965 = vcmp.lt.s32.totalorder %v1703, 2080
      %vm1966 = vcmp.lt.s32.totalorder %v1704, 2080
      %vm1967 = vcmp.lt.s32.totalorder %v1705, 2080
      %vm1968 = vcmp.lt.s32.totalorder %v1706, 2080
      %vm1969 = vcmp.lt.s32.totalorder %v1707, 2080
      %vm1970 = vcmp.lt.s32.totalorder %v1708, 2080
      %vm1971 = vcmp.lt.s32.totalorder %v1709, 2080
      %vm1972 = vcmp.lt.s32.totalorder %v1710, 2080
      %vm1973 = vcmp.lt.s32.totalorder %v1711, 2080
      %vm1974 = vcmp.lt.s32.totalorder %v1712, 2080
      %vm1975 = vcmp.lt.s32.totalorder %v1713, 2080
      %vm1976 = vcmp.lt.s32.totalorder %v1714, 2080
      %vm1977 = vcmp.lt.s32.totalorder %v1715, 2080
      %vm1978 = vcmp.lt.s32.totalorder %v1716, 2080
      %vm1979 = vcmp.lt.s32.totalorder %v1717, 2080
      %vm1980 = vcmp.lt.s32.totalorder %v1718, 2080
      %vm1981 = vcmp.lt.s32.totalorder %v1719, 2080
      %vm1982 = vcmp.lt.s32.totalorder %v1720, 2080
      %vm1983 = vcmp.lt.s32.totalorder %v1721, 2080
      %vm1984 = vcmp.lt.s32.totalorder %v1722, 2080
      %vm1985 = vcmp.lt.s32.totalorder %v1723, 2080
      %vm1986 = vcmp.lt.s32.totalorder %v1724, 2080
      %vm1987 = vcmp.lt.s32.totalorder %v1725, 2080
      %vm1988 = vcmp.lt.s32.totalorder %v1726, 2080
      %vm1989 = vcmp.lt.s32.totalorder %v1727, 2080
      %vm1990 = vcmp.lt.s32.totalorder %v1728, 2080
      %vm1991 = vcmp.lt.s32.totalorder %v1729, 2080
      %vm1992 = vcmp.lt.s32.totalorder %v1730, 2080
      %vm1993 = vcmp.lt.s32.totalorder %v1731, 2080
      %vm1994 = vcmp.lt.s32.totalorder %v1732, 2080
      %vm1995 = vcmp.lt.s32.totalorder %v1733, 2080
      %vm1996 = vcmp.lt.s32.totalorder %v1734, 2080
      %vm1997 = vcmp.lt.s32.totalorder %v1735, 2080
      %vm1998 = vcmp.lt.s32.totalorder %v1736, 2080
      %vm1999 = vcmp.lt.s32.totalorder %v1737, 2080
      %vm2000 = vcmp.lt.s32.totalorder %v1738, 2080
      %vm2001 = vcmp.lt.s32.totalorder %v1739, 2080
      %vm2002 = vcmp.lt.s32.totalorder %v1740, 2080
      %vm2003 = vcmp.lt.s32.totalorder %v1741, 2080
      %vm2004 = vcmp.lt.s32.totalorder %v1742, 2080
      %vm2005 = vcmp.lt.s32.totalorder %v1743, 2080
      %vm2006 = vcmp.lt.s32.totalorder %v1744, 2080
      %vm2007 = vcmp.lt.s32.totalorder %v1745, 2080
      %vm2008 = vcmp.lt.s32.totalorder %v1746, 2080
      %vm2009 = vcmp.lt.s32.totalorder %v1747, 2080
      %vm2010 = vcmp.lt.s32.totalorder %v1748, 2080
      %vm2011 = vcmp.lt.s32.totalorder %v1749, 2080
      %vm2012 = vcmp.lt.s32.totalorder %v1750, 2080
      %vm2013 = vcmp.lt.s32.totalorder %v1751, 2080
      %vm2014 = vcmp.lt.s32.totalorder %v1752, 2080
      %vm2015 = vcmp.lt.s32.totalorder %v1753, 2080
      %vm2016 = vcmp.lt.s32.totalorder %v1754, 2080
      %vm2017 = vcmp.lt.s32.totalorder %v1755, 2080
      %vm2018 = vcmp.lt.s32.totalorder %v1756, 2080
      %vm2019 = vcmp.lt.s32.totalorder %v1757, 2080
      %vm2020 = vcmp.lt.s32.totalorder %v1758, 2080
      %vm2021 = vcmp.lt.s32.totalorder %v1759, 2080
      %vm2022 = vcmp.lt.s32.totalorder %v1760, 2080
      %vm2023 = vcmp.lt.s32.totalorder %v1761, 2080
      %vm2024 = vcmp.lt.s32.totalorder %v1762, 2080
      %vm2025 = vcmp.lt.s32.totalorder %v1763, 2080
      %vm2026 = vcmp.lt.s32.totalorder %v1764, 2080
      %vm2027 = vcmp.lt.s32.totalorder %v1765, 2080
      %vm2028 = vcmp.lt.s32.totalorder %v1766, 2080
      %vm2029 = vcmp.lt.s32.totalorder %v1767, 2080
      %vm2030 = vcmp.lt.s32.totalorder %v1768, 2080
      %vm2031 = vcmp.lt.s32.totalorder %v1769, 2080
      %vm2032 = vcmp.lt.s32.totalorder %v1770, 2080
      %vm2033 = vcmp.lt.s32.totalorder %v1771, 2080
      %vm2034 = vcmp.lt.s32.totalorder %v1772, 2080
      %vm2035 = vcmp.lt.s32.totalorder %v1773, 2080
      %vm2036 = vcmp.lt.s32.totalorder %v1774, 2080
      %vm2037 = vcmp.lt.s32.totalorder %v1775, 2080
      %vm2038 = vcmp.lt.s32.totalorder %v1776, 2080
      %vm2039 = vcmp.lt.s32.totalorder %v1777, 2080
      %vm2040 = vcmp.lt.s32.totalorder %v1778, 2080
      %vm2041 = vcmp.lt.s32.totalorder %v1779, 2080
      %vm2042 = vcmp.lt.s32.totalorder %v1780, 2080
      %vm2043 = vcmp.lt.s32.totalorder %v1781, 2080
      %vm2044 = vcmp.lt.s32.totalorder %v1782, 2080
      %vm2045 = vcmp.lt.s32.totalorder %v1783, 2080
      %vm2046 = vcmp.lt.s32.totalorder %v1784, 2080
      %vm2047 = vcmp.lt.s32.totalorder %v1785, 2080
      %vm2048 = vcmp.lt.s32.totalorder %v1786, 2080
      %vm2049 = vcmp.lt.s32.totalorder %v1787, 2080
      %vm2050 = vcmp.lt.s32.totalorder %v1788, 2080
      %vm2051 = vcmp.lt.s32.totalorder %v1789, 2080
      %vm2052 = vcmp.lt.s32.totalorder %v1790, 2080
      %vm2053 = vcmp.lt.s32.totalorder %v1791, 2080
      %vm2054 = vcmp.lt.s32.totalorder %v1792, 2080
      %vm2055 = vcmp.lt.s32.totalorder %v1793, 2080
      %vm2056 = vcmp.lt.s32.totalorder %v1794, 2080
      %vm2057 = vcmp.lt.s32.totalorder %v1795, 2080
      %vm2058 = vcmp.lt.s32.totalorder %v1796, 2080
      %vm2059 = vcmp.lt.s32.totalorder %v1797, 2080
      %vm2060 = vcmp.lt.s32.totalorder %v1798, 2080
      %vm2061 = vcmp.lt.s32.totalorder %v1799, 2080
      %vm2062 = vcmp.lt.s32.totalorder %v1800, 2080
      %vm2063 = vcmp.lt.s32.totalorder %v1801, 2080
      %vm2064 = vcmp.lt.s32.totalorder %v1802, 2080
      %vm2065 = vcmp.lt.s32.totalorder %v1803, 2080
      %vm2066 = vcmp.lt.s32.totalorder %v1804, 2080
      %vm2067 = vcmp.lt.s32.totalorder %v1805, 2080
      %vm2068 = vcmp.lt.s32.totalorder %v1806, 2080
      %vm2069 = vcmp.lt.s32.totalorder %v1807, 2080
      %vm2070 = vcmp.lt.s32.totalorder %v1808, 2080
      %vm2071 = vcmp.lt.s32.totalorder %v1809, 2080
      %vm2072 = vcmp.lt.s32.totalorder %v1810, 2080
      %vm2073 = vcmp.lt.s32.totalorder %v1811, 2080
      %vm2074 = vcmp.lt.s32.totalorder %v1812, 2080
      %vm2075 = vcmp.lt.s32.totalorder %v1813, 2080
      %vm2076 = vcmp.lt.s32.totalorder %v1814, 2080
      %vm2077 = vcmp.lt.s32.totalorder %v1815, 2080
      %vm2078 = vcmp.lt.s32.totalorder %v1816, 2080
      %vm2079 = vcmp.lt.s32.totalorder %v1817, 2080
      %vm2080 = vcmp.lt.s32.totalorder %v1818, 2080
      %vm2081 = vcmp.lt.s32.totalorder %v1819, 2080
      %vm2082 = vcmp.lt.s32.totalorder %v1820, 2080
      %vm2083 = vcmp.lt.s32.totalorder %v1821, 2080
      %vm2084 = vcmp.lt.s32.totalorder %v1822, 2080
      %vm2085 = vcmp.lt.s32.totalorder %v1823, 2080
      %vm2086 = vcmp.lt.s32.totalorder %v1824, 2080
      %vm2087 = vcmp.lt.s32.totalorder %v1825, 2080
      %vm2088 = vcmp.lt.s32.totalorder %v1826, 2080
      %vm2089 = vcmp.lt.s32.totalorder %v1827, 2080
      %vm2090 = vcmp.lt.s32.totalorder %v1828, 2080
      %vm2091 = vcmp.lt.s32.totalorder %v1829, 2080
      %vm2092 = vcmp.lt.s32.totalorder %v1830, 2080
      %vm2093 = vcmp.lt.s32.totalorder %v1831, 2080
      %vm2094 = vcmp.lt.s32.totalorder %v1832, 2080
      %vm2095 = vcmp.lt.s32.totalorder %v1833, 2080
      %vm2096 = vcmp.lt.s32.totalorder %v1834, 2080
      %vm2097 = vcmp.lt.s32.totalorder %v1835, 2080
      %vm2098 = vcmp.lt.s32.totalorder %v1836, 2080
      %vm2099 = vcmp.lt.s32.totalorder %v1837, 2080
      %vm2100 = vcmp.lt.s32.totalorder %v1838, 2080
      %vm2101 = vcmp.lt.s32.totalorder %v1839, 2080
      %vm2102 = vcmp.lt.s32.totalorder %v1840, 2080
      %vm2103 = vcmp.lt.s32.totalorder %v1841, 2080
      %vm2104 = vcmp.lt.s32.totalorder %v1842, 2080
      %vm2105 = vcmp.lt.s32.totalorder %v1843, 2080
      %vm2106 = vcmp.lt.s32.totalorder %v1844, 2080
      %vm2107 = vcmp.lt.s32.totalorder %v1845, 2080
      %vm2108 = vcmp.lt.s32.totalorder %v1846, 2080
      %vm2109 = vcmp.lt.s32.totalorder %v1847, 2080
      %vm2110 = vcmp.lt.s32.totalorder %v1848, 2080
      %vm2111 = vcmp.lt.s32.totalorder %v1849, 2080
      %vm2112 = vcmp.lt.s32.totalorder %v1850, 2080
      %vm2113 = vcmp.lt.s32.totalorder %v1851, 2080
      %vm2114 = vcmp.lt.s32.totalorder %v1852, 2080
      %vm2115 = vcmp.lt.s32.totalorder %v1853, 2080
      %vm2116 = vcmp.lt.s32.totalorder %v1854, 2080
      %vm2117 = vcmp.lt.s32.totalorder %v1855, 2080
      %vm2118 = vcmp.lt.s32.totalorder %v1856, 2080
      %vm2119 = vcmp.lt.s32.totalorder %v1857, 2080
      %vm2120 = vcmp.lt.s32.totalorder %v1858, 2080
      %vm2121 = vcmp.lt.s32.totalorder %v1859, 2080
      %vm2122 = vcmp.lt.s32.totalorder %v1860, 2080
      %vm2123 = vcmp.lt.s32.totalorder %v1861, 2080
      %vm2124 = vcmp.lt.s32.totalorder %v1862, 2080
      %vm2125 = vcmp.lt.s32.totalorder %v1863, 2080
      %vm2126 = vcmp.lt.s32.totalorder %v1864, 2080
      %vm2127 = vcmp.lt.s32.totalorder %v1865, 2080
      %vm2128 = vcmp.lt.s32.totalorder %v1866, 2080
      %vm2129 = vcmp.lt.s32.totalorder %v1867, 2080
      %vm2130 = vcmp.lt.s32.totalorder %v1868, 2080
      %vm2131 = vcmp.lt.s32.totalorder %v1869, 2080
      %vm2132 = vcmp.lt.s32.totalorder %v1870, 2080
      %vm2133 = vcmp.lt.s32.totalorder %v1871, 2080
      %vm2134 = vcmp.lt.s32.totalorder %v1872, 2080
      %vm2135 = vcmp.lt.s32.totalorder %v1873, 2080
      %vm2136 = vcmp.lt.s32.totalorder %v1874, 2080
      %vm2137 = vcmp.lt.s32.totalorder %v1875, 2080
      %vm2138 = vcmp.lt.s32.totalorder %v1876, 2080
      %vm2139 = vcmp.lt.s32.totalorder %v1877, 2080
      %vm2140 = vcmp.lt.s32.totalorder %v1878, 2080
      %vm2141 = vcmp.lt.s32.totalorder %v1879, 2080
      %vm2142 = vcmp.lt.s32.totalorder %v1880, 2080
      %vm2143 = vcmp.lt.s32.totalorder %v1881, 2080
      %vm2144 = vcmp.lt.s32.totalorder %v1882, 2080
      %vm2145 = vcmp.lt.s32.totalorder %v1883, 2080
      %vm2146 = vcmp.lt.s32.totalorder %v1884, 2080
      %vm2147 = vcmp.lt.s32.totalorder %v1885, 2080
      %vm2148 = vcmp.eq.s32.totalorder %v1626, 2080
      %vm2149 = vcmp.eq.s32.totalorder %v1627, 2080
      %vm2150 = vcmp.eq.s32.totalorder %v1628, 2080
      %vm2151 = vcmp.eq.s32.totalorder %v1629, 2080
      %vm2152 = vcmp.eq.s32.totalorder %v1630, 2080
      %vm2153 = vcmp.eq.s32.totalorder %v1631, 2080
      %vm2154 = vcmp.eq.s32.totalorder %v1632, 2080
      %vm2155 = vcmp.eq.s32.totalorder %v1633, 2080
      %vm2156 = vcmp.eq.s32.totalorder %v1634, 2080
      %vm2157 = vcmp.eq.s32.totalorder %v1635, 2080
      %vm2158 = vcmp.eq.s32.totalorder %v1636, 2080
      %vm2159 = vcmp.eq.s32.totalorder %v1637, 2080
      %vm2160 = vcmp.eq.s32.totalorder %v1638, 2080
      %vm2161 = vcmp.eq.s32.totalorder %v1639, 2080
      %vm2162 = vcmp.eq.s32.totalorder %v1640, 2080
      %vm2163 = vcmp.eq.s32.totalorder %v1641, 2080
      %vm2164 = vcmp.eq.s32.totalorder %v1642, 2080
      %vm2165 = vcmp.eq.s32.totalorder %v1643, 2080
      %vm2166 = vcmp.eq.s32.totalorder %v1644, 2080
      %vm2167 = vcmp.eq.s32.totalorder %v1645, 2080
      %vm2168 = vcmp.eq.s32.totalorder %v1646, 2080
      %vm2169 = vcmp.eq.s32.totalorder %v1647, 2080
      %vm2170 = vcmp.eq.s32.totalorder %v1648, 2080
      %vm2171 = vcmp.eq.s32.totalorder %v1649, 2080
      %vm2172 = vcmp.eq.s32.totalorder %v1650, 2080
      %vm2173 = vcmp.eq.s32.totalorder %v1651, 2080
      %vm2174 = vcmp.eq.s32.totalorder %v1652, 2080
      %vm2175 = vcmp.eq.s32.totalorder %v1653, 2080
      %vm2176 = vcmp.eq.s32.totalorder %v1654, 2080
      %vm2177 = vcmp.eq.s32.totalorder %v1655, 2080
      %vm2178 = vcmp.eq.s32.totalorder %v1656, 2080
      %vm2179 = vcmp.eq.s32.totalorder %v1657, 2080
      %vm2180 = vcmp.eq.s32.totalorder %v1658, 2080
      %vm2181 = vcmp.eq.s32.totalorder %v1659, 2080
      %vm2182 = vcmp.eq.s32.totalorder %v1660, 2080
      %vm2183 = vcmp.eq.s32.totalorder %v1661, 2080
      %vm2184 = vcmp.eq.s32.totalorder %v1662, 2080
      %vm2185 = vcmp.eq.s32.totalorder %v1663, 2080
      %vm2186 = vcmp.eq.s32.totalorder %v1664, 2080
      %vm2187 = vcmp.eq.s32.totalorder %v1665, 2080
      %vm2188 = vcmp.eq.s32.totalorder %v1666, 2080
      %vm2189 = vcmp.eq.s32.totalorder %v1667, 2080
      %vm2190 = vcmp.eq.s32.totalorder %v1668, 2080
      %vm2191 = vcmp.eq.s32.totalorder %v1669, 2080
      %vm2192 = vcmp.eq.s32.totalorder %v1670, 2080
      %vm2193 = vcmp.eq.s32.totalorder %v1671, 2080
      %vm2194 = vcmp.eq.s32.totalorder %v1672, 2080
      %vm2195 = vcmp.eq.s32.totalorder %v1673, 2080
      %vm2196 = vcmp.eq.s32.totalorder %v1674, 2080
      %vm2197 = vcmp.eq.s32.totalorder %v1675, 2080
      %vm2198 = vcmp.eq.s32.totalorder %v1676, 2080
      %vm2199 = vcmp.eq.s32.totalorder %v1677, 2080
      %vm2200 = vcmp.eq.s32.totalorder %v1678, 2080
      %vm2201 = vcmp.eq.s32.totalorder %v1679, 2080
      %vm2202 = vcmp.eq.s32.totalorder %v1680, 2080
      %vm2203 = vcmp.eq.s32.totalorder %v1681, 2080
      %vm2204 = vcmp.eq.s32.totalorder %v1682, 2080
      %vm2205 = vcmp.eq.s32.totalorder %v1683, 2080
      %vm2206 = vcmp.eq.s32.totalorder %v1684, 2080
      %vm2207 = vcmp.eq.s32.totalorder %v1685, 2080
      %vm2208 = vcmp.eq.s32.totalorder %v1686, 2080
      %vm2209 = vcmp.eq.s32.totalorder %v1687, 2080
      %vm2210 = vcmp.eq.s32.totalorder %v1688, 2080
      %vm2211 = vcmp.eq.s32.totalorder %v1689, 2080
      %vm2212 = vcmp.eq.s32.totalorder %v1690, 2080
      %vm2213 = vcmp.eq.s32.totalorder %v1691, 2080
      %vm2214 = vcmp.eq.s32.totalorder %v1692, 2080
      %vm2215 = vcmp.eq.s32.totalorder %v1693, 2080
      %vm2216 = vcmp.eq.s32.totalorder %v1694, 2080
      %vm2217 = vcmp.eq.s32.totalorder %v1695, 2080
      %vm2218 = vcmp.eq.s32.totalorder %v1696, 2080
      %vm2219 = vcmp.eq.s32.totalorder %v1697, 2080
      %vm2220 = vcmp.eq.s32.totalorder %v1698, 2080
      %vm2221 = vcmp.eq.s32.totalorder %v1699, 2080
      %vm2222 = vcmp.eq.s32.totalorder %v1700, 2080
      %vm2223 = vcmp.eq.s32.totalorder %v1701, 2080
      %vm2224 = vcmp.eq.s32.totalorder %v1702, 2080
      %vm2225 = vcmp.eq.s32.totalorder %v1703, 2080
      %vm2226 = vcmp.eq.s32.totalorder %v1704, 2080
      %vm2227 = vcmp.eq.s32.totalorder %v1705, 2080
      %vm2228 = vcmp.eq.s32.totalorder %v1706, 2080
      %vm2229 = vcmp.eq.s32.totalorder %v1707, 2080
      %vm2230 = vcmp.eq.s32.totalorder %v1708, 2080
      %vm2231 = vcmp.eq.s32.totalorder %v1709, 2080
      %vm2232 = vcmp.eq.s32.totalorder %v1710, 2080
      %vm2233 = vcmp.eq.s32.totalorder %v1711, 2080
      %vm2234 = vcmp.eq.s32.totalorder %v1712, 2080
      %vm2235 = vcmp.eq.s32.totalorder %v1713, 2080
      %vm2236 = vcmp.eq.s32.totalorder %v1714, 2080
      %vm2237 = vcmp.eq.s32.totalorder %v1715, 2080
      %vm2238 = vcmp.eq.s32.totalorder %v1716, 2080
      %vm2239 = vcmp.eq.s32.totalorder %v1717, 2080
      %vm2240 = vcmp.eq.s32.totalorder %v1718, 2080
      %vm2241 = vcmp.eq.s32.totalorder %v1719, 2080
      %vm2242 = vcmp.eq.s32.totalorder %v1720, 2080
      %vm2243 = vcmp.eq.s32.totalorder %v1721, 2080
      %vm2244 = vcmp.eq.s32.totalorder %v1722, 2080
      %vm2245 = vcmp.eq.s32.totalorder %v1723, 2080
      %vm2246 = vcmp.eq.s32.totalorder %v1724, 2080
      %vm2247 = vcmp.eq.s32.totalorder %v1725, 2080
      %vm2248 = vcmp.eq.s32.totalorder %v1726, 2080
      %vm2249 = vcmp.eq.s32.totalorder %v1727, 2080
      %vm2250 = vcmp.eq.s32.totalorder %v1728, 2080
      %vm2251 = vcmp.eq.s32.totalorder %v1729, 2080
      %vm2252 = vcmp.eq.s32.totalorder %v1730, 2080
      %vm2253 = vcmp.eq.s32.totalorder %v1731, 2080
      %vm2254 = vcmp.eq.s32.totalorder %v1732, 2080
      %vm2255 = vcmp.eq.s32.totalorder %v1733, 2080
      %vm2256 = vcmp.eq.s32.totalorder %v1734, 2080
      %vm2257 = vcmp.eq.s32.totalorder %v1735, 2080
      %vm2258 = vcmp.eq.s32.totalorder %v1736, 2080
      %vm2259 = vcmp.eq.s32.totalorder %v1737, 2080
      %vm2260 = vcmp.eq.s32.totalorder %v1738, 2080
      %vm2261 = vcmp.eq.s32.totalorder %v1739, 2080
      %vm2262 = vcmp.eq.s32.totalorder %v1740, 2080
      %vm2263 = vcmp.eq.s32.totalorder %v1741, 2080
      %vm2264 = vcmp.eq.s32.totalorder %v1742, 2080
      %vm2265 = vcmp.eq.s32.totalorder %v1743, 2080
      %vm2266 = vcmp.eq.s32.totalorder %v1744, 2080
      %vm2267 = vcmp.eq.s32.totalorder %v1745, 2080
      %vm2268 = vcmp.eq.s32.totalorder %v1746, 2080
      %vm2269 = vcmp.eq.s32.totalorder %v1747, 2080
      %vm2270 = vcmp.eq.s32.totalorder %v1748, 2080
      %vm2271 = vcmp.eq.s32.totalorder %v1749, 2080
      %vm2272 = vcmp.eq.s32.totalorder %v1750, 2080
      %vm2273 = vcmp.eq.s32.totalorder %v1751, 2080
      %vm2274 = vcmp.eq.s32.totalorder %v1752, 2080
      %vm2275 = vcmp.eq.s32.totalorder %v1753, 2080
      %vm2276 = vcmp.eq.s32.totalorder %v1754, 2080
      %vm2277 = vcmp.eq.s32.totalorder %v1755, 2080
      %vm2278 = vcmp.eq.s32.totalorder %v1756, 2080
      %vm2279 = vcmp.eq.s32.totalorder %v1757, 2080
      %vm2280 = vcmp.eq.s32.totalorder %v1758, 2080
      %vm2281 = vcmp.eq.s32.totalorder %v1759, 2080
      %vm2282 = vcmp.eq.s32.totalorder %v1760, 2080
      %vm2283 = vcmp.eq.s32.totalorder %v1761, 2080
      %vm2284 = vcmp.eq.s32.totalorder %v1762, 2080
      %vm2285 = vcmp.eq.s32.totalorder %v1763, 2080
      %vm2286 = vcmp.eq.s32.totalorder %v1764, 2080
      %vm2287 = vcmp.eq.s32.totalorder %v1765, 2080
      %vm2288 = vcmp.eq.s32.totalorder %v1766, 2080
      %vm2289 = vcmp.eq.s32.totalorder %v1767, 2080
      %vm2290 = vcmp.eq.s32.totalorder %v1768, 2080
      %vm2291 = vcmp.eq.s32.totalorder %v1769, 2080
      %vm2292 = vcmp.eq.s32.totalorder %v1770, 2080
      %vm2293 = vcmp.eq.s32.totalorder %v1771, 2080
      %vm2294 = vcmp.eq.s32.totalorder %v1772, 2080
      %vm2295 = vcmp.eq.s32.totalorder %v1773, 2080
      %vm2296 = vcmp.eq.s32.totalorder %v1774, 2080
      %vm2297 = vcmp.eq.s32.totalorder %v1775, 2080
      %vm2298 = vcmp.eq.s32.totalorder %v1776, 2080
      %vm2299 = vcmp.eq.s32.totalorder %v1777, 2080
      %vm2300 = vcmp.eq.s32.totalorder %v1778, 2080
      %vm2301 = vcmp.eq.s32.totalorder %v1779, 2080
      %vm2302 = vcmp.eq.s32.totalorder %v1780, 2080
      %vm2303 = vcmp.eq.s32.totalorder %v1781, 2080
      %vm2304 = vcmp.eq.s32.totalorder %v1782, 2080
      %vm2305 = vcmp.eq.s32.totalorder %v1783, 2080
      %vm2306 = vcmp.eq.s32.totalorder %v1784, 2080
      %vm2307 = vcmp.eq.s32.totalorder %v1785, 2080
      %vm2308 = vcmp.eq.s32.totalorder %v1786, 2080
      %vm2309 = vcmp.eq.s32.totalorder %v1787, 2080
      %vm2310 = vcmp.eq.s32.totalorder %v1788, 2080
      %vm2311 = vcmp.eq.s32.totalorder %v1789, 2080
      %vm2312 = vcmp.eq.s32.totalorder %v1790, 2080
      %vm2313 = vcmp.eq.s32.totalorder %v1791, 2080
      %vm2314 = vcmp.eq.s32.totalorder %v1792, 2080
      %vm2315 = vcmp.eq.s32.totalorder %v1793, 2080
      %vm2316 = vcmp.eq.s32.totalorder %v1794, 2080
      %vm2317 = vcmp.eq.s32.totalorder %v1795, 2080
      %vm2318 = vcmp.eq.s32.totalorder %v1796, 2080
      %vm2319 = vcmp.eq.s32.totalorder %v1797, 2080
      %vm2320 = vcmp.eq.s32.totalorder %v1798, 2080
      %vm2321 = vcmp.eq.s32.totalorder %v1799, 2080
      %vm2322 = vcmp.eq.s32.totalorder %v1800, 2080
      %vm2323 = vcmp.eq.s32.totalorder %v1801, 2080
      %vm2324 = vcmp.eq.s32.totalorder %v1802, 2080
      %vm2325 = vcmp.eq.s32.totalorder %v1803, 2080
      %vm2326 = vcmp.eq.s32.totalorder %v1804, 2080
      %vm2327 = vcmp.eq.s32.totalorder %v1805, 2080
      %vm2328 = vcmp.eq.s32.totalorder %v1806, 2080
      %vm2329 = vcmp.eq.s32.totalorder %v1807, 2080
      %vm2330 = vcmp.eq.s32.totalorder %v1808, 2080
      %vm2331 = vcmp.eq.s32.totalorder %v1809, 2080
      %vm2332 = vcmp.eq.s32.totalorder %v1810, 2080
      %vm2333 = vcmp.eq.s32.totalorder %v1811, 2080
      %vm2334 = vcmp.eq.s32.totalorder %v1812, 2080
      %vm2335 = vcmp.eq.s32.totalorder %v1813, 2080
      %vm2336 = vcmp.eq.s32.totalorder %v1814, 2080
      %vm2337 = vcmp.eq.s32.totalorder %v1815, 2080
      %vm2338 = vcmp.eq.s32.totalorder %v1816, 2080
      %vm2339 = vcmp.eq.s32.totalorder %v1817, 2080
      %vm2340 = vcmp.eq.s32.totalorder %v1818, 2080
      %vm2341 = vcmp.eq.s32.totalorder %v1819, 2080
      %vm2342 = vcmp.eq.s32.totalorder %v1820, 2080
      %vm2343 = vcmp.eq.s32.totalorder %v1821, 2080
      %vm2344 = vcmp.eq.s32.totalorder %v1822, 2080
      %vm2345 = vcmp.eq.s32.totalorder %v1823, 2080
      %vm2346 = vcmp.eq.s32.totalorder %v1824, 2080
      %vm2347 = vcmp.eq.s32.totalorder %v1825, 2080
      %vm2348 = vcmp.eq.s32.totalorder %v1826, 2080
      %vm2349 = vcmp.eq.s32.totalorder %v1827, 2080
      %vm2350 = vcmp.eq.s32.totalorder %v1828, 2080
      %vm2351 = vcmp.eq.s32.totalorder %v1829, 2080
      %vm2352 = vcmp.eq.s32.totalorder %v1830, 2080
      %vm2353 = vcmp.eq.s32.totalorder %v1831, 2080
      %vm2354 = vcmp.eq.s32.totalorder %v1832, 2080
      %vm2355 = vcmp.eq.s32.totalorder %v1833, 2080
      %vm2356 = vcmp.eq.s32.totalorder %v1834, 2080
      %vm2357 = vcmp.eq.s32.totalorder %v1835, 2080
      %vm2358 = vcmp.eq.s32.totalorder %v1836, 2080
      %vm2359 = vcmp.eq.s32.totalorder %v1837, 2080
      %vm2360 = vcmp.eq.s32.totalorder %v1838, 2080
      %vm2361 = vcmp.eq.s32.totalorder %v1839, 2080
      %vm2362 = vcmp.eq.s32.totalorder %v1840, 2080
      %vm2363 = vcmp.eq.s32.totalorder %v1841, 2080
      %vm2364 = vcmp.eq.s32.totalorder %v1842, 2080
      %vm2365 = vcmp.eq.s32.totalorder %v1843, 2080
      %vm2366 = vcmp.eq.s32.totalorder %v1844, 2080
      %vm2367 = vcmp.eq.s32.totalorder %v1845, 2080
      %vm2368 = vcmp.eq.s32.totalorder %v1846, 2080
      %vm2369 = vcmp.eq.s32.totalorder %v1847, 2080
      %vm2370 = vcmp.eq.s32.totalorder %v1848, 2080
      %vm2371 = vcmp.eq.s32.totalorder %v1849, 2080
      %vm2372 = vcmp.eq.s32.totalorder %v1850, 2080
      %vm2373 = vcmp.eq.s32.totalorder %v1851, 2080
      %vm2374 = vcmp.eq.s32.totalorder %v1852, 2080
      %vm2375 = vcmp.eq.s32.totalorder %v1853, 2080
      %vm2376 = vcmp.eq.s32.totalorder %v1854, 2080
      %vm2377 = vcmp.eq.s32.totalorder %v1855, 2080
      %vm2378 = vcmp.eq.s32.totalorder %v1856, 2080
      %vm2379 = vcmp.eq.s32.totalorder %v1857, 2080
      %vm2380 = vcmp.eq.s32.totalorder %v1858, 2080
      %vm2381 = vcmp.eq.s32.totalorder %v1859, 2080
      %vm2382 = vcmp.eq.s32.totalorder %v1860, 2080
      %vm2383 = vcmp.eq.s32.totalorder %v1861, 2080
      %vm2384 = vcmp.eq.s32.totalorder %v1862, 2080
      %vm2385 = vcmp.eq.s32.totalorder %v1863, 2080
      %vm2386 = vcmp.eq.s32.totalorder %v1864, 2080
      %vm2387 = vcmp.eq.s32.totalorder %v1865, 2080
      %vm2388 = vcmp.eq.s32.totalorder %v1866, 2080
      %vm2389 = vcmp.eq.s32.totalorder %v1867, 2080
      %vm2390 = vcmp.eq.s32.totalorder %v1868, 2080
      %vm2391 = vcmp.eq.s32.totalorder %v1869, 2080
      %vm2392 = vcmp.eq.s32.totalorder %v1870, 2080
      %vm2393 = vcmp.eq.s32.totalorder %v1871, 2080
      %vm2394 = vcmp.eq.s32.totalorder %v1872, 2080
      %vm2395 = vcmp.eq.s32.totalorder %v1873, 2080
      %vm2396 = vcmp.eq.s32.totalorder %v1874, 2080
      %vm2397 = vcmp.eq.s32.totalorder %v1875, 2080
      %vm2398 = vcmp.eq.s32.totalorder %v1876, 2080
      %vm2399 = vcmp.eq.s32.totalorder %v1877, 2080
      %vm2400 = vcmp.eq.s32.totalorder %v1878, 2080
      %vm2401 = vcmp.eq.s32.totalorder %v1879, 2080
      %vm2402 = vcmp.eq.s32.totalorder %v1880, 2080
      %vm2403 = vcmp.eq.s32.totalorder %v1881, 2080
      %vm2404 = vcmp.eq.s32.totalorder %v1882, 2080
      %vm2405 = vcmp.eq.s32.totalorder %v1883, 2080
      %vm2406 = vcmp.eq.s32.totalorder %v1884, 2080
      %vm2407 = vcmp.eq.s32.totalorder %v1885, 2080
      %vm2408 = vcmp.lt.s32.totalorder %v1887, 0
      %vm2409 = vmand %vm2148, %vm2408
      %vm2410 = vmand %vm2149, %vm2408
      %vm2411 = vmand %vm2150, %vm2408
      %vm2412 = vmand %vm2151, %vm2408
      %vm2413 = vmand %vm2152, %vm2408
      %vm2414 = vmand %vm2153, %vm2408
      %vm2415 = vmand %vm2154, %vm2408
      %vm2416 = vmand %vm2155, %vm2408
      %vm2417 = vmand %vm2156, %vm2408
      %vm2418 = vmand %vm2157, %vm2408
      %vm2419 = vmand %vm2158, %vm2408
      %vm2420 = vmand %vm2159, %vm2408
      %vm2421 = vmand %vm2160, %vm2408
      %vm2422 = vmand %vm2161, %vm2408
      %vm2423 = vmand %vm2162, %vm2408
      %vm2424 = vmand %vm2163, %vm2408
      %vm2425 = vmand %vm2164, %vm2408
      %vm2426 = vmand %vm2165, %vm2408
      %vm2427 = vmand %vm2166, %vm2408
      %vm2428 = vmand %vm2167, %vm2408
      %vm2429 = vmand %vm2168, %vm2408
      %vm2430 = vmand %vm2169, %vm2408
      %vm2431 = vmand %vm2170, %vm2408
      %vm2432 = vmand %vm2171, %vm2408
      %vm2433 = vmand %vm2172, %vm2408
      %vm2434 = vmand %vm2173, %vm2408
      %vm2435 = vmand %vm2174, %vm2408
      %vm2436 = vmand %vm2175, %vm2408
      %vm2437 = vmand %vm2176, %vm2408
      %vm2438 = vmand %vm2177, %vm2408
      %vm2439 = vmand %vm2178, %vm2408
      %vm2440 = vmand %vm2179, %vm2408
      %vm2441 = vmand %vm2180, %vm2408
      %vm2442 = vmand %vm2181, %vm2408
      %vm2443 = vmand %vm2182, %vm2408
      %vm2444 = vmand %vm2183, %vm2408
      %vm2445 = vmand %vm2184, %vm2408
      %vm2446 = vmand %vm2185, %vm2408
      %vm2447 = vmand %vm2186, %vm2408
      %vm2448 = vmand %vm2187, %vm2408
      %vm2449 = vmand %vm2188, %vm2408
      %vm2450 = vmand %vm2189, %vm2408
      %vm2451 = vmand %vm2190, %vm2408
      %vm2452 = vmand %vm2191, %vm2408
      %vm2453 = vmand %vm2192, %vm2408
      %vm2454 = vmand %vm2193, %vm2408
      %vm2455 = vmand %vm2194, %vm2408
      %vm2456 = vmand %vm2195, %vm2408
      %vm2457 = vmand %vm2196, %vm2408
      %vm2458 = vmand %vm2197, %vm2408
      %vm2459 = vmand %vm2198, %vm2408
      %vm2460 = vmand %vm2199, %vm2408
      %vm2461 = vmand %vm2200, %vm2408
      %vm2462 = vmand %vm2201, %vm2408
      %vm2463 = vmand %vm2202, %vm2408
      %vm2464 = vmand %vm2203, %vm2408
      %vm2465 = vmand %vm2204, %vm2408
      %vm2466 = vmand %vm2205, %vm2408
      %vm2467 = vmand %vm2206, %vm2408
      %vm2468 = vmand %vm2207, %vm2408
      %vm2469 = vmand %vm2208, %vm2408
      %vm2470 = vmand %vm2209, %vm2408
      %vm2471 = vmand %vm2210, %vm2408
      %vm2472 = vmand %vm2211, %vm2408
      %vm2473 = vmand %vm2212, %vm2408
      %vm2474 = vmand %vm2213, %vm2408
      %vm2475 = vmand %vm2214, %vm2408
      %vm2476 = vmand %vm2215, %vm2408
      %vm2477 = vmand %vm2216, %vm2408
      %vm2478 = vmand %vm2217, %vm2408
      %vm2479 = vmand %vm2218, %vm2408
      %vm2480 = vmand %vm2219, %vm2408
      %vm2481 = vmand %vm2220, %vm2408
      %vm2482 = vmand %vm2221, %vm2408
      %vm2483 = vmand %vm2222, %vm2408
      %vm2484 = vmand %vm2223, %vm2408
      %vm2485 = vmand %vm2224, %vm2408
      %vm2486 = vmand %vm2225, %vm2408
      %vm2487 = vmand %vm2226, %vm2408
      %vm2488 = vmand %vm2227, %vm2408
      %vm2489 = vmand %vm2228, %vm2408
      %vm2490 = vmand %vm2229, %vm2408
      %vm2491 = vmand %vm2230, %vm2408
      %vm2492 = vmand %vm2231, %vm2408
      %vm2493 = vmand %vm2232, %vm2408
      %vm2494 = vmand %vm2233, %vm2408
      %vm2495 = vmand %vm2234, %vm2408
      %vm2496 = vmand %vm2235, %vm2408
      %vm2497 = vmand %vm2236, %vm2408
      %vm2498 = vmand %vm2237, %vm2408
      %vm2499 = vmand %vm2238, %vm2408
      %vm2500 = vmand %vm2239, %vm2408
      %vm2501 = vmand %vm2240, %vm2408
      %vm2502 = vmand %vm2241, %vm2408
      %vm2503 = vmand %vm2242, %vm2408
      %vm2504 = vmand %vm2243, %vm2408
      %vm2505 = vmand %vm2244, %vm2408
      %vm2506 = vmand %vm2245, %vm2408
      %vm2507 = vmand %vm2246, %vm2408
      %vm2508 = vmand %vm2247, %vm2408
      %vm2509 = vmand %vm2248, %vm2408
      %vm2510 = vmand %vm2249, %vm2408
      %vm2511 = vmand %vm2250, %vm2408
      %vm2512 = vmand %vm2251, %vm2408
      %vm2513 = vmand %vm2252, %vm2408
      %vm2514 = vmand %vm2253, %vm2408
      %vm2515 = vmand %vm2254, %vm2408
      %vm2516 = vmand %vm2255, %vm2408
      %vm2517 = vmand %vm2256, %vm2408
      %vm2518 = vmand %vm2257, %vm2408
      %vm2519 = vmand %vm2258, %vm2408
      %vm2520 = vmand %vm2259, %vm2408
      %vm2521 = vmand %vm2260, %vm2408
      %vm2522 = vmand %vm2261, %vm2408
      %vm2523 = vmand %vm2262, %vm2408
      %vm2524 = vmand %vm2263, %vm2408
      %vm2525 = vmand %vm2264, %vm2408
      %vm2526 = vmand %vm2265, %vm2408
      %vm2527 = vmand %vm2266, %vm2408
      %vm2528 = vmand %vm2267, %vm2408
      %vm2529 = vmand %vm2268, %vm2408
      %vm2530 = vmand %vm2269, %vm2408
      %vm2531 = vmand %vm2270, %vm2408
      %vm2532 = vmand %vm2271, %vm2408
      %vm2533 = vmand %vm2272, %vm2408
      %vm2534 = vmand %vm2273, %vm2408
      %vm2535 = vmand %vm2274, %vm2408
      %vm2536 = vmand %vm2275, %vm2408
      %vm2537 = vmand %vm2276, %vm2408
      %vm2538 = vmand %vm2277, %vm2408
      %vm2539 = vmand %vm2278, %vm2408
      %vm2540 = vmand %vm2279, %vm2408
      %vm2541 = vmand %vm2280, %vm2408
      %vm2542 = vmand %vm2281, %vm2408
      %vm2543 = vmand %vm2282, %vm2408
      %vm2544 = vmand %vm2283, %vm2408
      %vm2545 = vmand %vm2284, %vm2408
      %vm2546 = vmand %vm2285, %vm2408
      %vm2547 = vmand %vm2286, %vm2408
      %vm2548 = vmand %vm2287, %vm2408
      %vm2549 = vmand %vm2288, %vm2408
      %vm2550 = vmand %vm2289, %vm2408
      %vm2551 = vmand %vm2290, %vm2408
      %vm2552 = vmand %vm2291, %vm2408
      %vm2553 = vmand %vm2292, %vm2408
      %vm2554 = vmand %vm2293, %vm2408
      %vm2555 = vmand %vm2294, %vm2408
      %vm2556 = vmand %vm2295, %vm2408
      %vm2557 = vmand %vm2296, %vm2408
      %vm2558 = vmand %vm2297, %vm2408
      %vm2559 = vmand %vm2298, %vm2408
      %vm2560 = vmand %vm2299, %vm2408
      %vm2561 = vmand %vm2300, %vm2408
      %vm2562 = vmand %vm2301, %vm2408
      %vm2563 = vmand %vm2302, %vm2408
      %vm2564 = vmand %vm2303, %vm2408
      %vm2565 = vmand %vm2304, %vm2408
      %vm2566 = vmand %vm2305, %vm2408
      %vm2567 = vmand %vm2306, %vm2408
      %vm2568 = vmand %vm2307, %vm2408
      %vm2569 = vmand %vm2308, %vm2408
      %vm2570 = vmand %vm2309, %vm2408
      %vm2571 = vmand %vm2310, %vm2408
      %vm2572 = vmand %vm2311, %vm2408
      %vm2573 = vmand %vm2312, %vm2408
      %vm2574 = vmand %vm2313, %vm2408
      %vm2575 = vmand %vm2314, %vm2408
      %vm2576 = vmand %vm2315, %vm2408
      %vm2577 = vmand %vm2316, %vm2408
      %vm2578 = vmand %vm2317, %vm2408
      %vm2579 = vmand %vm2318, %vm2408
      %vm2580 = vmand %vm2319, %vm2408
      %vm2581 = vmand %vm2320, %vm2408
      %vm2582 = vmand %vm2321, %vm2408
      %vm2583 = vmand %vm2322, %vm2408
      %vm2584 = vmand %vm2323, %vm2408
      %vm2585 = vmand %vm2324, %vm2408
      %vm2586 = vmand %vm2325, %vm2408
      %vm2587 = vmand %vm2326, %vm2408
      %vm2588 = vmand %vm2327, %vm2408
      %vm2589 = vmand %vm2328, %vm2408
      %vm2590 = vmand %vm2329, %vm2408
      %vm2591 = vmand %vm2330, %vm2408
      %vm2592 = vmand %vm2331, %vm2408
      %vm2593 = vmand %vm2332, %vm2408
      %vm2594 = vmand %vm2333, %vm2408
      %vm2595 = vmand %vm2334, %vm2408
      %vm2596 = vmand %vm2335, %vm2408
      %vm2597 = vmand %vm2336, %vm2408
      %vm2598 = vmand %vm2337, %vm2408
      %vm2599 = vmand %vm2338, %vm2408
      %vm2600 = vmand %vm2339, %vm2408
      %vm2601 = vmand %vm2340, %vm2408
      %vm2602 = vmand %vm2341, %vm2408
      %vm2603 = vmand %vm2342, %vm2408
      %vm2604 = vmand %vm2343, %vm2408
      %vm2605 = vmand %vm2344, %vm2408
      %vm2606 = vmand %vm2345, %vm2408
      %vm2607 = vmand %vm2346, %vm2408
      %vm2608 = vmand %vm2347, %vm2408
      %vm2609 = vmand %vm2348, %vm2408
      %vm2610 = vmand %vm2349, %vm2408
      %vm2611 = vmand %vm2350, %vm2408
      %vm2612 = vmand %vm2351, %vm2408
      %vm2613 = vmand %vm2352, %vm2408
      %vm2614 = vmand %vm2353, %vm2408
      %vm2615 = vmand %vm2354, %vm2408
      %vm2616 = vmand %vm2355, %vm2408
      %vm2617 = vmand %vm2356, %vm2408
      %vm2618 = vmand %vm2357, %vm2408
      %vm2619 = vmand %vm2358, %vm2408
      %vm2620 = vmand %vm2359, %vm2408
      %vm2621 = vmand %vm2360, %vm2408
      %vm2622 = vmand %vm2361, %vm2408
      %vm2623 = vmand %vm2362, %vm2408
      %vm2624 = vmand %vm2363, %vm2408
      %vm2625 = vmand %vm2364, %vm2408
      %vm2626 = vmand %vm2365, %vm2408
      %vm2627 = vmand %vm2366, %vm2408
      %vm2628 = vmand %vm2367, %vm2408
      %vm2629 = vmand %vm2368, %vm2408
      %vm2630 = vmand %vm2369, %vm2408
      %vm2631 = vmand %vm2370, %vm2408
      %vm2632 = vmand %vm2371, %vm2408
      %vm2633 = vmand %vm2372, %vm2408
      %vm2634 = vmand %vm2373, %vm2408
      %vm2635 = vmand %vm2374, %vm2408
      %vm2636 = vmand %vm2375, %vm2408
      %vm2637 = vmand %vm2376, %vm2408
      %vm2638 = vmand %vm2377, %vm2408
      %vm2639 = vmand %vm2378, %vm2408
      %vm2640 = vmand %vm2379, %vm2408
      %vm2641 = vmand %vm2380, %vm2408
      %vm2642 = vmand %vm2381, %vm2408
      %vm2643 = vmand %vm2382, %vm2408
      %vm2644 = vmand %vm2383, %vm2408
      %vm2645 = vmand %vm2384, %vm2408
      %vm2646 = vmand %vm2385, %vm2408
      %vm2647 = vmand %vm2386, %vm2408
      %vm2648 = vmand %vm2387, %vm2408
      %vm2649 = vmand %vm2388, %vm2408
      %vm2650 = vmand %vm2389, %vm2408
      %vm2651 = vmand %vm2390, %vm2408
      %vm2652 = vmand %vm2391, %vm2408
      %vm2653 = vmand %vm2392, %vm2408
      %vm2654 = vmand %vm2393, %vm2408
      %vm2655 = vmand %vm2394, %vm2408
      %vm2656 = vmand %vm2395, %vm2408
      %vm2657 = vmand %vm2396, %vm2408
      %vm2658 = vmand %vm2397, %vm2408
      %vm2659 = vmand %vm2398, %vm2408
      %vm2660 = vmand %vm2399, %vm2408
      %vm2661 = vmand %vm2400, %vm2408
      %vm2662 = vmand %vm2401, %vm2408
      %vm2663 = vmand %vm2402, %vm2408
      %vm2664 = vmand %vm2403, %vm2408
      %vm2665 = vmand %vm2404, %vm2408
      %vm2666 = vmand %vm2405, %vm2408
      %vm2667 = vmand %vm2406, %vm2408
      %vm2668 = vmand %vm2407, %vm2408
      %vm2669 = vmor %vm1888, %vm2409
      %vm2670 = vmor %vm1889, %vm2410
      %vm2671 = vmor %vm1890, %vm2411
      %vm2672 = vmor %vm1891, %vm2412
      %vm2673 = vmor %vm1892, %vm2413
      %vm2674 = vmor %vm1893, %vm2414
      %vm2675 = vmor %vm1894, %vm2415
      %vm2676 = vmor %vm1895, %vm2416
      %vm2677 = vmor %vm1896, %vm2417
      %vm2678 = vmor %vm1897, %vm2418
      %vm2679 = vmor %vm1898, %vm2419
      %vm2680 = vmor %vm1899, %vm2420
      %vm2681 = vmor %vm1900, %vm2421
      %vm2682 = vmor %vm1901, %vm2422
      %vm2683 = vmor %vm1902, %vm2423
      %vm2684 = vmor %vm1903, %vm2424
      %vm2685 = vmor %vm1904, %vm2425
      %vm2686 = vmor %vm1905, %vm2426
      %vm2687 = vmor %vm1906, %vm2427
      %vm2688 = vmor %vm1907, %vm2428
      %vm2689 = vmor %vm1908, %vm2429
      %vm2690 = vmor %vm1909, %vm2430
      %vm2691 = vmor %vm1910, %vm2431
      %vm2692 = vmor %vm1911, %vm2432
      %vm2693 = vmor %vm1912, %vm2433
      %vm2694 = vmor %vm1913, %vm2434
      %vm2695 = vmor %vm1914, %vm2435
      %vm2696 = vmor %vm1915, %vm2436
      %vm2697 = vmor %vm1916, %vm2437
      %vm2698 = vmor %vm1917, %vm2438
      %vm2699 = vmor %vm1918, %vm2439
      %vm2700 = vmor %vm1919, %vm2440
      %vm2701 = vmor %vm1920, %vm2441
      %vm2702 = vmor %vm1921, %vm2442
      %vm2703 = vmor %vm1922, %vm2443
      %vm2704 = vmor %vm1923, %vm2444
      %vm2705 = vmor %vm1924, %vm2445
      %vm2706 = vmor %vm1925, %vm2446
      %vm2707 = vmor %vm1926, %vm2447
      %vm2708 = vmor %vm1927, %vm2448
      %vm2709 = vmor %vm1928, %vm2449
      %vm2710 = vmor %vm1929, %vm2450
      %vm2711 = vmor %vm1930, %vm2451
      %vm2712 = vmor %vm1931, %vm2452
      %vm2713 = vmor %vm1932, %vm2453
      %vm2714 = vmor %vm1933, %vm2454
      %vm2715 = vmor %vm1934, %vm2455
      %vm2716 = vmor %vm1935, %vm2456
      %vm2717 = vmor %vm1936, %vm2457
      %vm2718 = vmor %vm1937, %vm2458
      %vm2719 = vmor %vm1938, %vm2459
      %vm2720 = vmor %vm1939, %vm2460
      %vm2721 = vmor %vm1940, %vm2461
      %vm2722 = vmor %vm1941, %vm2462
      %vm2723 = vmor %vm1942, %vm2463
      %vm2724 = vmor %vm1943, %vm2464
      %vm2725 = vmor %vm1944, %vm2465
      %vm2726 = vmor %vm1945, %vm2466
      %vm2727 = vmor %vm1946, %vm2467
      %vm2728 = vmor %vm1947, %vm2468
      %vm2729 = vmor %vm1948, %vm2469
      %vm2730 = vmor %vm1949, %vm2470
      %vm2731 = vmor %vm1950, %vm2471
      %vm2732 = vmor %vm1951, %vm2472
      %vm2733 = vmor %vm1952, %vm2473
      %vm2734 = vmor %vm1953, %vm2474
      %vm2735 = vmor %vm1954, %vm2475
      %vm2736 = vmor %vm1955, %vm2476
      %vm2737 = vmor %vm1956, %vm2477
      %vm2738 = vmor %vm1957, %vm2478
      %vm2739 = vmor %vm1958, %vm2479
      %vm2740 = vmor %vm1959, %vm2480
      %vm2741 = vmor %vm1960, %vm2481
      %vm2742 = vmor %vm1961, %vm2482
      %vm2743 = vmor %vm1962, %vm2483
      %vm2744 = vmor %vm1963, %vm2484
      %vm2745 = vmor %vm1964, %vm2485
      %vm2746 = vmor %vm1965, %vm2486
      %vm2747 = vmor %vm1966, %vm2487
      %vm2748 = vmor %vm1967, %vm2488
      %vm2749 = vmor %vm1968, %vm2489
      %vm2750 = vmor %vm1969, %vm2490
      %vm2751 = vmor %vm1970, %vm2491
      %vm2752 = vmor %vm1971, %vm2492
      %vm2753 = vmor %vm1972, %vm2493
      %vm2754 = vmor %vm1973, %vm2494
      %vm2755 = vmor %vm1974, %vm2495
      %vm2756 = vmor %vm1975, %vm2496
      %vm2757 = vmor %vm1976, %vm2497
      %vm2758 = vmor %vm1977, %vm2498
      %vm2759 = vmor %vm1978, %vm2499
      %vm2760 = vmor %vm1979, %vm2500
      %vm2761 = vmor %vm1980, %vm2501
      %vm2762 = vmor %vm1981, %vm2502
      %vm2763 = vmor %vm1982, %vm2503
      %vm2764 = vmor %vm1983, %vm2504
      %vm2765 = vmor %vm1984, %vm2505
      %vm2766 = vmor %vm1985, %vm2506
      %vm2767 = vmor %vm1986, %vm2507
      %vm2768 = vmor %vm1987, %vm2508
      %vm2769 = vmor %vm1988, %vm2509
      %vm2770 = vmor %vm1989, %vm2510
      %vm2771 = vmor %vm1990, %vm2511
      %vm2772 = vmor %vm1991, %vm2512
      %vm2773 = vmor %vm1992, %vm2513
      %vm2774 = vmor %vm1993, %vm2514
      %vm2775 = vmor %vm1994, %vm2515
      %vm2776 = vmor %vm1995, %vm2516
      %vm2777 = vmor %vm1996, %vm2517
      %vm2778 = vmor %vm1997, %vm2518
      %vm2779 = vmor %vm1998, %vm2519
      %vm2780 = vmor %vm1999, %vm2520
      %vm2781 = vmor %vm2000, %vm2521
      %vm2782 = vmor %vm2001, %vm2522
      %vm2783 = vmor %vm2002, %vm2523
      %vm2784 = vmor %vm2003, %vm2524
      %vm2785 = vmor %vm2004, %vm2525
      %vm2786 = vmor %vm2005, %vm2526
      %vm2787 = vmor %vm2006, %vm2527
      %vm2788 = vmor %vm2007, %vm2528
      %vm2789 = vmor %vm2008, %vm2529
      %vm2790 = vmor %vm2009, %vm2530
      %vm2791 = vmor %vm2010, %vm2531
      %vm2792 = vmor %vm2011, %vm2532
      %vm2793 = vmor %vm2012, %vm2533
      %vm2794 = vmor %vm2013, %vm2534
      %vm2795 = vmor %vm2014, %vm2535
      %vm2796 = vmor %vm2015, %vm2536
      %vm2797 = vmor %vm2016, %vm2537
      %vm2798 = vmor %vm2017, %vm2538
      %vm2799 = vmor %vm2018, %vm2539
      %vm2800 = vmor %vm2019, %vm2540
      %vm2801 = vmor %vm2020, %vm2541
      %vm2802 = vmor %vm2021, %vm2542
      %vm2803 = vmor %vm2022, %vm2543
      %vm2804 = vmor %vm2023, %vm2544
      %vm2805 = vmor %vm2024, %vm2545
      %vm2806 = vmor %vm2025, %vm2546
      %vm2807 = vmor %vm2026, %vm2547
      %vm2808 = vmor %vm2027, %vm2548
      %vm2809 = vmor %vm2028, %vm2549
      %vm2810 = vmor %vm2029, %vm2550
      %vm2811 = vmor %vm2030, %vm2551
      %vm2812 = vmor %vm2031, %vm2552
      %vm2813 = vmor %vm2032, %vm2553
      %vm2814 = vmor %vm2033, %vm2554
      %vm2815 = vmor %vm2034, %vm2555
      %vm2816 = vmor %vm2035, %vm2556
      %vm2817 = vmor %vm2036, %vm2557
      %vm2818 = vmor %vm2037, %vm2558
      %vm2819 = vmor %vm2038, %vm2559
      %vm2820 = vmor %vm2039, %vm2560
      %vm2821 = vmor %vm2040, %vm2561
      %vm2822 = vmor %vm2041, %vm2562
      %vm2823 = vmor %vm2042, %vm2563
      %vm2824 = vmor %vm2043, %vm2564
      %vm2825 = vmor %vm2044, %vm2565
      %vm2826 = vmor %vm2045, %vm2566
      %vm2827 = vmor %vm2046, %vm2567
      %vm2828 = vmor %vm2047, %vm2568
      %vm2829 = vmor %vm2048, %vm2569
      %vm2830 = vmor %vm2049, %vm2570
      %vm2831 = vmor %vm2050, %vm2571
      %vm2832 = vmor %vm2051, %vm2572
      %vm2833 = vmor %vm2052, %vm2573
      %vm2834 = vmor %vm2053, %vm2574
      %vm2835 = vmor %vm2054, %vm2575
      %vm2836 = vmor %vm2055, %vm2576
      %vm2837 = vmor %vm2056, %vm2577
      %vm2838 = vmor %vm2057, %vm2578
      %vm2839 = vmor %vm2058, %vm2579
      %vm2840 = vmor %vm2059, %vm2580
      %vm2841 = vmor %vm2060, %vm2581
      %vm2842 = vmor %vm2061, %vm2582
      %vm2843 = vmor %vm2062, %vm2583
      %vm2844 = vmor %vm2063, %vm2584
      %vm2845 = vmor %vm2064, %vm2585
      %vm2846 = vmor %vm2065, %vm2586
      %vm2847 = vmor %vm2066, %vm2587
      %vm2848 = vmor %vm2067, %vm2588
      %vm2849 = vmor %vm2068, %vm2589
      %vm2850 = vmor %vm2069, %vm2590
      %vm2851 = vmor %vm2070, %vm2591
      %vm2852 = vmor %vm2071, %vm2592
      %vm2853 = vmor %vm2072, %vm2593
      %vm2854 = vmor %vm2073, %vm2594
      %vm2855 = vmor %vm2074, %vm2595
      %vm2856 = vmor %vm2075, %vm2596
      %vm2857 = vmor %vm2076, %vm2597
      %vm2858 = vmor %vm2077, %vm2598
      %vm2859 = vmor %vm2078, %vm2599
      %vm2860 = vmor %vm2079, %vm2600
      %vm2861 = vmor %vm2080, %vm2601
      %vm2862 = vmor %vm2081, %vm2602
      %vm2863 = vmor %vm2082, %vm2603
      %vm2864 = vmor %vm2083, %vm2604
      %vm2865 = vmor %vm2084, %vm2605
      %vm2866 = vmor %vm2085, %vm2606
      %vm2867 = vmor %vm2086, %vm2607
      %vm2868 = vmor %vm2087, %vm2608
      %vm2869 = vmor %vm2088, %vm2609
      %vm2870 = vmor %vm2089, %vm2610
      %vm2871 = vmor %vm2090, %vm2611
      %vm2872 = vmor %vm2091, %vm2612
      %vm2873 = vmor %vm2092, %vm2613
      %vm2874 = vmor %vm2093, %vm2614
      %vm2875 = vmor %vm2094, %vm2615
      %vm2876 = vmor %vm2095, %vm2616
      %vm2877 = vmor %vm2096, %vm2617
      %vm2878 = vmor %vm2097, %vm2618
      %vm2879 = vmor %vm2098, %vm2619
      %vm2880 = vmor %vm2099, %vm2620
      %vm2881 = vmor %vm2100, %vm2621
      %vm2882 = vmor %vm2101, %vm2622
      %vm2883 = vmor %vm2102, %vm2623
      %vm2884 = vmor %vm2103, %vm2624
      %vm2885 = vmor %vm2104, %vm2625
      %vm2886 = vmor %vm2105, %vm2626
      %vm2887 = vmor %vm2106, %vm2627
      %vm2888 = vmor %vm2107, %vm2628
      %vm2889 = vmor %vm2108, %vm2629
      %vm2890 = vmor %vm2109, %vm2630
      %vm2891 = vmor %vm2110, %vm2631
      %vm2892 = vmor %vm2111, %vm2632
      %vm2893 = vmor %vm2112, %vm2633
      %vm2894 = vmor %vm2113, %vm2634
      %vm2895 = vmor %vm2114, %vm2635
      %vm2896 = vmor %vm2115, %vm2636
      %vm2897 = vmor %vm2116, %vm2637
      %vm2898 = vmor %vm2117, %vm2638
      %vm2899 = vmor %vm2118, %vm2639
      %vm2900 = vmor %vm2119, %vm2640
      %vm2901 = vmor %vm2120, %vm2641
      %vm2902 = vmor %vm2121, %vm2642
      %vm2903 = vmor %vm2122, %vm2643
      %vm2904 = vmor %vm2123, %vm2644
      %vm2905 = vmor %vm2124, %vm2645
      %vm2906 = vmor %vm2125, %vm2646
      %vm2907 = vmor %vm2126, %vm2647
      %vm2908 = vmor %vm2127, %vm2648
      %vm2909 = vmor %vm2128, %vm2649
      %vm2910 = vmor %vm2129, %vm2650
      %vm2911 = vmor %vm2130, %vm2651
      %vm2912 = vmor %vm2131, %vm2652
      %vm2913 = vmor %vm2132, %vm2653
      %vm2914 = vmor %vm2133, %vm2654
      %vm2915 = vmor %vm2134, %vm2655
      %vm2916 = vmor %vm2135, %vm2656
      %vm2917 = vmor %vm2136, %vm2657
      %vm2918 = vmor %vm2137, %vm2658
      %vm2919 = vmor %vm2138, %vm2659
      %vm2920 = vmor %vm2139, %vm2660
      %vm2921 = vmor %vm2140, %vm2661
      %vm2922 = vmor %vm2141, %vm2662
      %vm2923 = vmor %vm2142, %vm2663
      %vm2924 = vmor %vm2143, %vm2664
      %vm2925 = vmor %vm2144, %vm2665
      %vm2926 = vmor %vm2145, %vm2666
      %vm2927 = vmor %vm2146, %vm2667
      %vm2928 = vmor %vm2147, %vm2668
      %v2929 = vsel %vm2669, %v830, 0.0
      %v2930 = vsel %vm2670, %v831, 0.0
      %v2931 = vsel %vm2671, %v832, 0.0
      %v2932 = vsel %vm2672, %v833, 0.0
      %v2933 = vsel %vm2673, %v834, 0.0
      %v2934 = vsel %vm2674, %v835, 0.0
      %v2935 = vsel %vm2675, %v836, 0.0
      %v2936 = vsel %vm2676, %v837, 0.0
      %v2937 = vsel %vm2677, %v838, 0.0
      %v2938 = vsel %vm2678, %v839, 0.0
      %v2939 = vsel %vm2679, %v840, 0.0
      %v2940 = vsel %vm2680, %v841, 0.0
      %v2941 = vsel %vm2681, %v842, 0.0
      %v2942 = vsel %vm2682, %v843, 0.0
      %v2943 = vsel %vm2683, %v844, 0.0
      %v2944 = vsel %vm2684, %v845, 0.0
      %v2945 = vsel %vm2685, %v846, 0.0
      %v2946 = vsel %vm2686, %v847, 0.0
      %v2947 = vsel %vm2687, %v848, 0.0
      %v2948 = vsel %vm2688, %v849, 0.0
      %v2949 = vsel %vm2689, %v850, 0.0
      %v2950 = vsel %vm2690, %v851, 0.0
      %v2951 = vsel %vm2691, %v852, 0.0
      %v2952 = vsel %vm2692, %v853, 0.0
      %v2953 = vsel %vm2693, %v854, 0.0
      %v2954 = vsel %vm2694, %v855, 0.0
      %v2955 = vsel %vm2695, %v856, 0.0
      %v2956 = vsel %vm2696, %v857, 0.0
      %v2957 = vsel %vm2697, %v858, 0.0
      %v2958 = vsel %vm2698, %v859, 0.0
      %v2959 = vsel %vm2699, %v860, 0.0
      %v2960 = vsel %vm2700, %v861, 0.0
      %v2961 = vsel %vm2701, %v862, 0.0
      %v2962 = vsel %vm2702, %v863, 0.0
      %v2963 = vsel %vm2703, %v864, 0.0
      %v2964 = vsel %vm2704, %v865, 0.0
      %v2965 = vsel %vm2705, %v866, 0.0
      %v2966 = vsel %vm2706, %v867, 0.0
      %v2967 = vsel %vm2707, %v868, 0.0
      %v2968 = vsel %vm2708, %v869, 0.0
      %v2969 = vsel %vm2709, %v870, 0.0
      %v2970 = vsel %vm2710, %v871, 0.0
      %v2971 = vsel %vm2711, %v872, 0.0
      %v2972 = vsel %vm2712, %v873, 0.0
      %v2973 = vsel %vm2713, %v874, 0.0
      %v2974 = vsel %vm2714, %v875, 0.0
      %v2975 = vsel %vm2715, %v876, 0.0
      %v2976 = vsel %vm2716, %v877, 0.0
      %v2977 = vsel %vm2717, %v878, 0.0
      %v2978 = vsel %vm2718, %v879, 0.0
      %v2979 = vsel %vm2719, %v880, 0.0
      %v2980 = vsel %vm2720, %v881, 0.0
      %v2981 = vsel %vm2721, %v882, 0.0
      %v2982 = vsel %vm2722, %v883, 0.0
      %v2983 = vsel %vm2723, %v884, 0.0
      %v2984 = vsel %vm2724, %v885, 0.0
      %v2985 = vsel %vm2725, %v886, 0.0
      %v2986 = vsel %vm2726, %v887, 0.0
      %v2987 = vsel %vm2727, %v888, 0.0
      %v2988 = vsel %vm2728, %v889, 0.0
      %v2989 = vsel %vm2729, %v890, 0.0
      %v2990 = vsel %vm2730, %v891, 0.0
      %v2991 = vsel %vm2731, %v892, 0.0
      %v2992 = vsel %vm2732, %v893, 0.0
      %v2993 = vsel %vm2733, %v894, 0.0
      %v2994 = vsel %vm2734, %v895, 0.0
      %v2995 = vsel %vm2735, %v896, 0.0
      %v2996 = vsel %vm2736, %v897, 0.0
      %v2997 = vsel %vm2737, %v898, 0.0
      %v2998 = vsel %vm2738, %v899, 0.0
      %v2999 = vsel %vm2739, %v900, 0.0
      %v3000 = vsel %vm2740, %v901, 0.0
      %v3001 = vsel %vm2741, %v902, 0.0
      %v3002 = vsel %vm2742, %v903, 0.0
      %v3003 = vsel %vm2743, %v904, 0.0
      %v3004 = vsel %vm2744, %v905, 0.0
      %v3005 = vsel %vm2745, %v906, 0.0
      %v3006 = vsel %vm2746, %v907, 0.0
      %v3007 = vsel %vm2747, %v908, 0.0
      %v3008 = vsel %vm2748, %v909, 0.0
      %v3009 = vsel %vm2749, %v910, 0.0
      %v3010 = vsel %vm2750, %v911, 0.0
      %v3011 = vsel %vm2751, %v912, 0.0
      %v3012 = vsel %vm2752, %v913, 0.0
      %v3013 = vsel %vm2753, %v914, 0.0
      %v3014 = vsel %vm2754, %v915, 0.0
      %v3015 = vsel %vm2755, %v916, 0.0
      %v3016 = vsel %vm2756, %v917, 0.0
      %v3017 = vsel %vm2757, %v918, 0.0
      %v3018 = vsel %vm2758, %v919, 0.0
      %v3019 = vsel %vm2759, %v920, 0.0
      %v3020 = vsel %vm2760, %v921, 0.0
      %v3021 = vsel %vm2761, %v922, 0.0
      %v3022 = vsel %vm2762, %v923, 0.0
      %v3023 = vsel %vm2763, %v924, 0.0
      %v3024 = vsel %vm2764, %v925, 0.0
      %v3025 = vsel %vm2765, %v926, 0.0
      %v3026 = vsel %vm2766, %v927, 0.0
      %v3027 = vsel %vm2767, %v928, 0.0
      %v3028 = vsel %vm2768, %v929, 0.0
      %v3029 = vsel %vm2769, %v930, 0.0
      %v3030 = vsel %vm2770, %v931, 0.0
      %v3031 = vsel %vm2771, %v932, 0.0
      %v3032 = vsel %vm2772, %v933, 0.0
      %v3033 = vsel %vm2773, %v934, 0.0
      %v3034 = vsel %vm2774, %v935, 0.0
      %v3035 = vsel %vm2775, %v936, 0.0
      %v3036 = vsel %vm2776, %v937, 0.0
      %v3037 = vsel %vm2777, %v938, 0.0
      %v3038 = vsel %vm2778, %v939, 0.0
      %v3039 = vsel %vm2779, %v940, 0.0
      %v3040 = vsel %vm2780, %v941, 0.0
      %v3041 = vsel %vm2781, %v942, 0.0
      %v3042 = vsel %vm2782, %v943, 0.0
      %v3043 = vsel %vm2783, %v944, 0.0
      %v3044 = vsel %vm2784, %v945, 0.0
      %v3045 = vsel %vm2785, %v946, 0.0
      %v3046 = vsel %vm2786, %v947, 0.0
      %v3047 = vsel %vm2787, %v948, 0.0
      %v3048 = vsel %vm2788, %v949, 0.0
      %v3049 = vsel %vm2789, %v950, 0.0
      %v3050 = vsel %vm2790, %v951, 0.0
      %v3051 = vsel %vm2791, %v952, 0.0
      %v3052 = vsel %vm2792, %v953, 0.0
      %v3053 = vsel %vm2793, %v954, 0.0
      %v3054 = vsel %vm2794, %v955, 0.0
      %v3055 = vsel %vm2795, %v956, 0.0
      %v3056 = vsel %vm2796, %v957, 0.0
      %v3057 = vsel %vm2797, %v958, 0.0
      %v3058 = vsel %vm2798, %v959, 0.0
      %v3059 = vsel %vm2799, %v960, 0.0
      %v3060 = vsel %vm2800, %v961, 0.0
      %v3061 = vsel %vm2801, %v962, 0.0
      %v3062 = vsel %vm2802, %v963, 0.0
      %v3063 = vsel %vm2803, %v964, 0.0
      %v3064 = vsel %vm2804, %v965, 0.0
      %v3065 = vsel %vm2805, %v966, 0.0
      %v3066 = vsel %vm2806, %v967, 0.0
      %v3067 = vsel %vm2807, %v968, 0.0
      %v3068 = vsel %vm2808, %v969, 0.0
      %v3069 = vsel %vm2809, %v970, 0.0
      %v3070 = vsel %vm2810, %v971, 0.0
      %v3071 = vsel %vm2811, %v972, 0.0
      %v3072 = vsel %vm2812, %v973, 0.0
      %v3073 = vsel %vm2813, %v974, 0.0
      %v3074 = vsel %vm2814, %v975, 0.0
      %v3075 = vsel %vm2815, %v976, 0.0
      %v3076 = vsel %vm2816, %v977, 0.0
      %v3077 = vsel %vm2817, %v978, 0.0
      %v3078 = vsel %vm2818, %v979, 0.0
      %v3079 = vsel %vm2819, %v980, 0.0
      %v3080 = vsel %vm2820, %v981, 0.0
      %v3081 = vsel %vm2821, %v982, 0.0
      %v3082 = vsel %vm2822, %v983, 0.0
      %v3083 = vsel %vm2823, %v984, 0.0
      %v3084 = vsel %vm2824, %v985, 0.0
      %v3085 = vsel %vm2825, %v986, 0.0
      %v3086 = vsel %vm2826, %v987, 0.0
      %v3087 = vsel %vm2827, %v988, 0.0
      %v3088 = vsel %vm2828, %v989, 0.0
      %v3089 = vsel %vm2829, %v990, 0.0
      %v3090 = vsel %vm2830, %v991, 0.0
      %v3091 = vsel %vm2831, %v992, 0.0
      %v3092 = vsel %vm2832, %v993, 0.0
      %v3093 = vsel %vm2833, %v994, 0.0
      %v3094 = vsel %vm2834, %v995, 0.0
      %v3095 = vsel %vm2835, %v996, 0.0
      %v3096 = vsel %vm2836, %v997, 0.0
      %v3097 = vsel %vm2837, %v998, 0.0
      %v3098 = vsel %vm2838, %v999, 0.0
      %v3099 = vsel %vm2839, %v1000, 0.0
      %v3100 = vsel %vm2840, %v1001, 0.0
      %v3101 = vsel %vm2841, %v1002, 0.0
      %v3102 = vsel %vm2842, %v1003, 0.0
      %v3103 = vsel %vm2843, %v1004, 0.0
      %v3104 = vsel %vm2844, %v1005, 0.0
      %v3105 = vsel %vm2845, %v1006, 0.0
      %v3106 = vsel %vm2846, %v1007, 0.0
      %v3107 = vsel %vm2847, %v1008, 0.0
      %v3108 = vsel %vm2848, %v1009, 0.0
      %v3109 = vsel %vm2849, %v1010, 0.0
      %v3110 = vsel %vm2850, %v1011, 0.0
      %v3111 = vsel %vm2851, %v1012, 0.0
      %v3112 = vsel %vm2852, %v1013, 0.0
      %v3113 = vsel %vm2853, %v1014, 0.0
      %v3114 = vsel %vm2854, %v1015, 0.0
      %v3115 = vsel %vm2855, %v1016, 0.0
      %v3116 = vsel %vm2856, %v1017, 0.0
      %v3117 = vsel %vm2857, %v1018, 0.0
      %v3118 = vsel %vm2858, %v1019, 0.0
      %v3119 = vsel %vm2859, %v1020, 0.0
      %v3120 = vsel %vm2860, %v1021, 0.0
      %v3121 = vsel %vm2861, %v1022, 0.0
      %v3122 = vsel %vm2862, %v1023, 0.0
      %v3123 = vsel %vm2863, %v1024, 0.0
      %v3124 = vsel %vm2864, %v1025, 0.0
      %v3125 = vsel %vm2865, %v1026, 0.0
      %v3126 = vsel %vm2866, %v1027, 0.0
      %v3127 = vsel %vm2867, %v1028, 0.0
      %v3128 = vsel %vm2868, %v1029, 0.0
      %v3129 = vsel %vm2869, %v1030, 0.0
      %v3130 = vsel %vm2870, %v1031, 0.0
      %v3131 = vsel %vm2871, %v1032, 0.0
      %v3132 = vsel %vm2872, %v1033, 0.0
      %v3133 = vsel %vm2873, %v1034, 0.0
      %v3134 = vsel %vm2874, %v1035, 0.0
      %v3135 = vsel %vm2875, %v1036, 0.0
      %v3136 = vsel %vm2876, %v1037, 0.0
      %v3137 = vsel %vm2877, %v1038, 0.0
      %v3138 = vsel %vm2878, %v1039, 0.0
      %v3139 = vsel %vm2879, %v1040, 0.0
      %v3140 = vsel %vm2880, %v1041, 0.0
      %v3141 = vsel %vm2881, %v1042, 0.0
      %v3142 = vsel %vm2882, %v1043, 0.0
      %v3143 = vsel %vm2883, %v1044, 0.0
      %v3144 = vsel %vm2884, %v1045, 0.0
      %v3145 = vsel %vm2885, %v1046, 0.0
      %v3146 = vsel %vm2886, %v1047, 0.0
      %v3147 = vsel %vm2887, %v1048, 0.0
      %v3148 = vsel %vm2888, %v1049, 0.0
      %v3149 = vsel %vm2889, %v1050, 0.0
      %v3150 = vsel %vm2890, %v1051, 0.0
      %v3151 = vsel %vm2891, %v1052, 0.0
      %v3152 = vsel %vm2892, %v1053, 0.0
      %v3153 = vsel %vm2893, %v1054, 0.0
      %v3154 = vsel %vm2894, %v1055, 0.0
      %v3155 = vsel %vm2895, %v1056, 0.0
      %v3156 = vsel %vm2896, %v1057, 0.0
      %v3157 = vsel %vm2897, %v1058, 0.0
      %v3158 = vsel %vm2898, %v1059, 0.0
      %v3159 = vsel %vm2899, %v1060, 0.0
      %v3160 = vsel %vm2900, %v1061, 0.0
      %v3161 = vsel %vm2901, %v1062, 0.0
      %v3162 = vsel %vm2902, %v1063, 0.0
      %v3163 = vsel %vm2903, %v1064, 0.0
      %v3164 = vsel %vm2904, %v1065, 0.0
      %v3165 = vsel %vm2905, %v1066, 0.0
      %v3166 = vsel %vm2906, %v1067, 0.0
      %v3167 = vsel %vm2907, %v1068, 0.0
      %v3168 = vsel %vm2908, %v1069, 0.0
      %v3169 = vsel %vm2909, %v1070, 0.0
      %v3170 = vsel %vm2910, %v1071, 0.0
      %v3171 = vsel %vm2911, %v1072, 0.0
      %v3172 = vsel %vm2912, %v1073, 0.0
      %v3173 = vsel %vm2913, %v1074, 0.0
      %v3174 = vsel %vm2914, %v1075, 0.0
      %v3175 = vsel %vm2915, %v1076, 0.0
      %v3176 = vsel %vm2916, %v1077, 0.0
      %v3177 = vsel %vm2917, %v1078, 0.0
      %v3178 = vsel %vm2918, %v1079, 0.0
      %v3179 = vsel %vm2919, %v1080, 0.0
      %v3180 = vsel %vm2920, %v1081, 0.0
      %v3181 = vsel %vm2921, %v1082, 0.0
      %v3182 = vsel %vm2922, %v1083, 0.0
      %v3183 = vsel %vm2923, %v1084, 0.0
      %v3184 = vsel %vm2924, %v1085, 0.0
      %v3185 = vsel %vm2925, %v1086, 0.0
      %v3186 = vsel %vm2926, %v1087, 0.0
      %v3187 = vsel %vm2927, %v1088, 0.0
      %v3188 = vsel %vm2928, %v1089, 0.0
      %v3189 = vadd.f32 %v2929, %v2930
      %v3190 = vadd.f32 %v3189, %v2931
      %v3191 = vadd.f32 %v3190, %v2932
      %v3192 = vadd.f32 %v3191, %v2933
      %v3193 = vadd.f32 %v3192, %v2934
      %v3194 = vadd.f32 %v3193, %v2935
      %v3195 = vadd.f32 %v3194, %v2936
      %v3196 = vadd.f32 %v3195, %v2937
      %v3197 = vadd.f32 %v3196, %v2938
      %v3198 = vadd.f32 %v3197, %v2939
      %v3199 = vadd.f32 %v3198, %v2940
      %v3200 = vadd.f32 %v3199, %v2941
      %v3201 = vadd.f32 %v3200, %v2942
      %v3202 = vadd.f32 %v3201, %v2943
      %v3203 = vadd.f32 %v3202, %v2944
      %v3204 = vadd.f32 %v3203, %v2945
      %v3205 = vadd.f32 %v3204, %v2946
      %v3206 = vadd.f32 %v3205, %v2947
      %v3207 = vadd.f32 %v3206, %v2948
      %v3208 = vadd.f32 %v3207, %v2949
      %v3209 = vadd.f32 %v3208, %v2950
      %v3210 = vadd.f32 %v3209, %v2951
      %v3211 = vadd.f32 %v3210, %v2952
      %v3212 = vadd.f32 %v3211, %v2953
      %v3213 = vadd.f32 %v3212, %v2954
      %v3214 = vadd.f32 %v3213, %v2955
      %v3215 = vadd.f32 %v3214, %v2956
      %v3216 = vadd.f32 %v3215, %v2957
      %v3217 = vadd.f32 %v3216, %v2958
      %v3218 = vadd.f32 %v3217, %v2959
      %v3219 = vadd.f32 %v3218, %v2960
      %v3220 = vadd.f32 %v3219, %v2961
      %v3221 = vadd.f32 %v3220, %v2962
      %v3222 = vadd.f32 %v3221, %v2963
      %v3223 = vadd.f32 %v3222, %v2964
      %v3224 = vadd.f32 %v3223, %v2965
      %v3225 = vadd.f32 %v3224, %v2966
      %v3226 = vadd.f32 %v3225, %v2967
      %v3227 = vadd.f32 %v3226, %v2968
      %v3228 = vadd.f32 %v3227, %v2969
      %v3229 = vadd.f32 %v3228, %v2970
      %v3230 = vadd.f32 %v3229, %v2971
      %v3231 = vadd.f32 %v3230, %v2972
      %v3232 = vadd.f32 %v3231, %v2973
      %v3233 = vadd.f32 %v3232, %v2974
      %v3234 = vadd.f32 %v3233, %v2975
      %v3235 = vadd.f32 %v3234, %v2976
      %v3236 = vadd.f32 %v3235, %v2977
      %v3237 = vadd.f32 %v3236, %v2978
      %v3238 = vadd.f32 %v3237, %v2979
      %v3239 = vadd.f32 %v3238, %v2980
      %v3240 = vadd.f32 %v3239, %v2981
      %v3241 = vadd.f32 %v3240, %v2982
      %v3242 = vadd.f32 %v3241, %v2983
      %v3243 = vadd.f32 %v3242, %v2984
      %v3244 = vadd.f32 %v3243, %v2985
      %v3245 = vadd.f32 %v3244, %v2986
      %v3246 = vadd.f32 %v3245, %v2987
      %v3247 = vadd.f32 %v3246, %v2988
      %v3248 = vadd.f32 %v3247, %v2989
      %v3249 = vadd.f32 %v3248, %v2990
      %v3250 = vadd.f32 %v3249, %v2991
      %v3251 = vadd.f32 %v3250, %v2992
      %v3252 = vadd.f32 %v3251, %v2993
      %v3253 = vadd.f32 %v3252, %v2994
      %v3254 = vadd.f32 %v3253, %v2995
      %v3255 = vadd.f32 %v3254, %v2996
      %v3256 = vadd.f32 %v3255, %v2997
      %v3257 = vadd.f32 %v3256, %v2998
      %v3258 = vadd.f32 %v3257, %v2999
      %v3259 = vadd.f32 %v3258, %v3000
      %v3260 = vadd.f32 %v3259, %v3001
      %v3261 = vadd.f32 %v3260, %v3002
      %v3262 = vadd.f32 %v3261, %v3003
      %v3263 = vadd.f32 %v3262, %v3004
      %v3264 = vadd.f32 %v3263, %v3005
      %v3265 = vadd.f32 %v3264, %v3006
      %v3266 = vadd.f32 %v3265, %v3007
      %v3267 = vadd.f32 %v3266, %v3008
      %v3268 = vadd.f32 %v3267, %v3009
      %v3269 = vadd.f32 %v3268, %v3010
      %v3270 = vadd.f32 %v3269, %v3011
      %v3271 = vadd.f32 %v3270, %v3012
      %v3272 = vadd.f32 %v3271, %v3013
      %v3273 = vadd.f32 %v3272, %v3014
      %v3274 = vadd.f32 %v3273, %v3015
      %v3275 = vadd.f32 %v3274, %v3016
      %v3276 = vadd.f32 %v3275, %v3017
      %v3277 = vadd.f32 %v3276, %v3018
      %v3278 = vadd.f32 %v3277, %v3019
      %v3279 = vadd.f32 %v3278, %v3020
      %v3280 = vadd.f32 %v3279, %v3021
      %v3281 = vadd.f32 %v3280, %v3022
      %v3282 = vadd.f32 %v3281, %v3023
      %v3283 = vadd.f32 %v3282, %v3024
      %v3284 = vadd.f32 %v3283, %v3025
      %v3285 = vadd.f32 %v3284, %v3026
      %v3286 = vadd.f32 %v3285, %v3027
      %v3287 = vadd.f32 %v3286, %v3028
      %v3288 = vadd.f32 %v3287, %v3029
      %v3289 = vadd.f32 %v3288, %v3030
      %v3290 = vadd.f32 %v3289, %v3031
      %v3291 = vadd.f32 %v3290, %v3032
      %v3292 = vadd.f32 %v3291, %v3033
      %v3293 = vadd.f32 %v3292, %v3034
      %v3294 = vadd.f32 %v3293, %v3035
      %v3295 = vadd.f32 %v3294, %v3036
      %v3296 = vadd.f32 %v3295, %v3037
      %v3297 = vadd.f32 %v3296, %v3038
      %v3298 = vadd.f32 %v3297, %v3039
      %v3299 = vadd.f32 %v3298, %v3040
      %v3300 = vadd.f32 %v3299, %v3041
      %v3301 = vadd.f32 %v3300, %v3042
      %v3302 = vadd.f32 %v3301, %v3043
      %v3303 = vadd.f32 %v3302, %v3044
      %v3304 = vadd.f32 %v3303, %v3045
      %v3305 = vadd.f32 %v3304, %v3046
      %v3306 = vadd.f32 %v3305, %v3047
      %v3307 = vadd.f32 %v3306, %v3048
      %v3308 = vadd.f32 %v3307, %v3049
      %v3309 = vadd.f32 %v3308, %v3050
      %v3310 = vadd.f32 %v3309, %v3051
      %v3311 = vadd.f32 %v3310, %v3052
      %v3312 = vadd.f32 %v3311, %v3053
      %v3313 = vadd.f32 %v3312, %v3054
      %v3314 = vadd.f32 %v3313, %v3055
      %v3315 = vadd.f32 %v3314, %v3056
      %v3316 = vadd.f32 %v3315, %v3057
      %v3317 = vadd.f32 %v3316, %v3058
      %v3318 = vadd.f32 %v3317, %v3059
      %v3319 = vadd.f32 %v3318, %v3060
      %v3320 = vadd.f32 %v3319, %v3061
      %v3321 = vadd.f32 %v3320, %v3062
      %v3322 = vadd.f32 %v3321, %v3063
      %v3323 = vadd.f32 %v3322, %v3064
      %v3324 = vadd.f32 %v3323, %v3065
      %v3325 = vadd.f32 %v3324, %v3066
      %v3326 = vadd.f32 %v3325, %v3067
      %v3327 = vadd.f32 %v3326, %v3068
      %v3328 = vadd.f32 %v3327, %v3069
      %v3329 = vadd.f32 %v3328, %v3070
      %v3330 = vadd.f32 %v3329, %v3071
      %v3331 = vadd.f32 %v3330, %v3072
      %v3332 = vadd.f32 %v3331, %v3073
      %v3333 = vadd.f32 %v3332, %v3074
      %v3334 = vadd.f32 %v3333, %v3075
      %v3335 = vadd.f32 %v3334, %v3076
      %v3336 = vadd.f32 %v3335, %v3077
      %v3337 = vadd.f32 %v3336, %v3078
      %v3338 = vadd.f32 %v3337, %v3079
      %v3339 = vadd.f32 %v3338, %v3080
      %v3340 = vadd.f32 %v3339, %v3081
      %v3341 = vadd.f32 %v3340, %v3082
      %v3342 = vadd.f32 %v3341, %v3083
      %v3343 = vadd.f32 %v3342, %v3084
      %v3344 = vadd.f32 %v3343, %v3085
      %v3345 = vadd.f32 %v3344, %v3086
      %v3346 = vadd.f32 %v3345, %v3087
      %v3347 = vadd.f32 %v3346, %v3088
      %v3348 = vadd.f32 %v3347, %v3089
      %v3349 = vadd.f32 %v3348, %v3090
      %v3350 = vadd.f32 %v3349, %v3091
      %v3351 = vadd.f32 %v3350, %v3092
      %v3352 = vadd.f32 %v3351, %v3093
      %v3353 = vadd.f32 %v3352, %v3094
      %v3354 = vadd.f32 %v3353, %v3095
      %v3355 = vadd.f32 %v3354, %v3096
      %v3356 = vadd.f32 %v3355, %v3097
      %v3357 = vadd.f32 %v3356, %v3098
      %v3358 = vadd.f32 %v3357, %v3099
      %v3359 = vadd.f32 %v3358, %v3100
      %v3360 = vadd.f32 %v3359, %v3101
      %v3361 = vadd.f32 %v3360, %v3102
      %v3362 = vadd.f32 %v3361, %v3103
      %v3363 = vadd.f32 %v3362, %v3104
      %v3364 = vadd.f32 %v3363, %v3105
      %v3365 = vadd.f32 %v3364, %v3106
      %v3366 = vadd.f32 %v3365, %v3107
      %v3367 = vadd.f32 %v3366, %v3108
      %v3368 = vadd.f32 %v3367, %v3109
      %v3369 = vadd.f32 %v3368, %v3110
      %v3370 = vadd.f32 %v3369, %v3111
      %v3371 = vadd.f32 %v3370, %v3112
      %v3372 = vadd.f32 %v3371, %v3113
      %v3373 = vadd.f32 %v3372, %v3114
      %v3374 = vadd.f32 %v3373, %v3115
      %v3375 = vadd.f32 %v3374, %v3116
      %v3376 = vadd.f32 %v3375, %v3117
      %v3377 = vadd.f32 %v3376, %v3118
      %v3378 = vadd.f32 %v3377, %v3119
      %v3379 = vadd.f32 %v3378, %v3120
      %v3380 = vadd.f32 %v3379, %v3121
      %v3381 = vadd.f32 %v3380, %v3122
      %v3382 = vadd.f32 %v3381, %v3123
      %v3383 = vadd.f32 %v3382, %v3124
      %v3384 = vadd.f32 %v3383, %v3125
      %v3385 = vadd.f32 %v3384, %v3126
      %v3386 = vadd.f32 %v3385, %v3127
      %v3387 = vadd.f32 %v3386, %v3128
      %v3388 = vadd.f32 %v3387, %v3129
      %v3389 = vadd.f32 %v3388, %v3130
      %v3390 = vadd.f32 %v3389, %v3131
      %v3391 = vadd.f32 %v3390, %v3132
      %v3392 = vadd.f32 %v3391, %v3133
      %v3393 = vadd.f32 %v3392, %v3134
      %v3394 = vadd.f32 %v3393, %v3135
      %v3395 = vadd.f32 %v3394, %v3136
      %v3396 = vadd.f32 %v3395, %v3137
      %v3397 = vadd.f32 %v3396, %v3138
      %v3398 = vadd.f32 %v3397, %v3139
      %v3399 = vadd.f32 %v3398, %v3140
      %v3400 = vadd.f32 %v3399, %v3141
      %v3401 = vadd.f32 %v3400, %v3142
      %v3402 = vadd.f32 %v3401, %v3143
      %v3403 = vadd.f32 %v3402, %v3144
      %v3404 = vadd.f32 %v3403, %v3145
      %v3405 = vadd.f32 %v3404, %v3146
      %v3406 = vadd.f32 %v3405, %v3147
      %v3407 = vadd.f32 %v3406, %v3148
      %v3408 = vadd.f32 %v3407, %v3149
      %v3409 = vadd.f32 %v3408, %v3150
      %v3410 = vadd.f32 %v3409, %v3151
      %v3411 = vadd.f32 %v3410, %v3152
      %v3412 = vadd.f32 %v3411, %v3153
      %v3413 = vadd.f32 %v3412, %v3154
      %v3414 = vadd.f32 %v3413, %v3155
      %v3415 = vadd.f32 %v3414, %v3156
      %v3416 = vadd.f32 %v3415, %v3157
      %v3417 = vadd.f32 %v3416, %v3158
      %v3418 = vadd.f32 %v3417, %v3159
      %v3419 = vadd.f32 %v3418, %v3160
      %v3420 = vadd.f32 %v3419, %v3161
      %v3421 = vadd.f32 %v3420, %v3162
      %v3422 = vadd.f32 %v3421, %v3163
      %v3423 = vadd.f32 %v3422, %v3164
      %v3424 = vadd.f32 %v3423, %v3165
      %v3425 = vadd.f32 %v3424, %v3166
      %v3426 = vadd.f32 %v3425, %v3167
      %v3427 = vadd.f32 %v3426, %v3168
      %v3428 = vadd.f32 %v3427, %v3169
      %v3429 = vadd.f32 %v3428, %v3170
      %v3430 = vadd.f32 %v3429, %v3171
      %v3431 = vadd.f32 %v3430, %v3172
      %v3432 = vadd.f32 %v3431, %v3173
      %v3433 = vadd.f32 %v3432, %v3174
      %v3434 = vadd.f32 %v3433, %v3175
      %v3435 = vadd.f32 %v3434, %v3176
      %v3436 = vadd.f32 %v3435, %v3177
      %v3437 = vadd.f32 %v3436, %v3178
      %v3438 = vadd.f32 %v3437, %v3179
      %v3439 = vadd.f32 %v3438, %v3180
      %v3440 = vadd.f32 %v3439, %v3181
      %v3441 = vadd.f32 %v3440, %v3182
      %v3442 = vadd.f32 %v3441, %v3183
      %v3443 = vadd.f32 %v3442, %v3184
      %v3444 = vadd.f32 %v3443, %v3185
      %v3445 = vadd.f32 %v3444, %v3186
      %v3446 = vadd.f32 %v3445, %v3187
      %v3447 = vadd.f32 %v3446, %v3188
      %v3448 = vadd.f32 %v1362, %v3447
      %3449 = vst [vmem:[#allocation7] sm:$0xff] %v3448
    $region29: #{tpu_custom_call.1} parent=1 // pred_fallthru
      _
    // Predicated region
    $region30: #{tpu_custom_call.1} parent=1 // pred_check
      _
    $region31: #{tpu_custom_call.1} parent=1 // pred_check_branch
      %3451 = sbr.rel (0) target = $region33
    $region32: #{tpu_custom_call.1} parent=1 // pred_region
      %3453 = vsyncadd [#allocation4], 0
      %s3455 = sshll.u32 [#allocation7], 4
      %s3456 = int_to_ptr.vmem [resolvable:$true] %s3455
      %s3457 = sshll.u32 %s2, 4
      %s3458 = int_to_ptr.hbm [resolvable:$true] %s3457
      %3460 = dma.vmem_to_hbm [thread:$0]  %s3456, 128, %s3458, [#allocation4]
    $region33: #{tpu_custom_call.1} parent=1 // pred_fallthru
      _
    // Predicated region
    $region34: #{tpu_custom_call.1} parent=1 // pred_check
      _
    $region35: #{tpu_custom_call.1} parent=1 // pred_check_branch
      %3462 = sbr.rel (0) target = $region37
    $region36: #{tpu_custom_call.1} parent=1 // pred_region
      %3464 = dma.done [#allocation4], 128
    $region37: #{tpu_custom_call.1} parent=1 // pred_fallthru
      _
    %3465 = vsyncpa [#allocation3], 1
    %3466 = vsyncpa [#allocation6], 1
    %3467 = vsyncpa [#allocation4], 1

</llo_original>
